<compile_context>
chip_gen: v7x
topology: tpu7x:2x2x1
jax: 0.10.0
libtpu: 0.0.40
codegen_flags: <defaults>
</compile_context>

<pallas_src>
import functools
import math

import jax
import jax.numpy as jnp
from jax.experimental import pallas as pl
from jax.experimental.pallas import tpu as pltpu
from jax.scipy.special import erf as _erf_exact


# ----------------------------------------------------------------------------- VMEM / tiling helpers

@functools.lru_cache(maxsize=None)
def _vmem_limit_bytes() -> int:
    """Scoped-VMEM limit derived from the chip generation (128 MiB on v5e/v6e,
    64 MiB per TC on v7x), with headroom for Mosaic internal scratch."""
    try:
        cap = int(pltpu.get_tpu_info().vmem_capacity_bytes)
    except Exception:
        cap = 64 * 1024 * 1024            # conservative fallback (v7x per-TC VMEM)
    return max(32 * 1024 * 1024, min(cap - 16 * 1024 * 1024, 112 * 1024 * 1024))


def _vmem_budget_bytes() -> int:
    return _vmem_limit_bytes() - 8 * 1024 * 1024


def _compiler_params(n_parallel: int, n_arbitrary: int = 0) -> pltpu.CompilerParams:
    return pltpu.CompilerParams(
        dimension_semantics=("parallel",) * n_parallel + ("arbitrary",) * n_arbitrary,
        vmem_limit_bytes=_vmem_limit_bytes(),
    )


def _tile_candidates(n: int, cap: int):
    """Descending multiples of 8 that divide n (capped); [n] if n is small / not 8-aligned."""
    if n <= 8 or n % 8 != 0:
        return [n]
    cap = max(cap, 8)
    return sorted((t for t in range(8, n + 1, 8) if n % t == 0 and t <= cap),
                  reverse=True) or [8]


# ----------------------------------------------------------------------------- in-kernel math helpers

def _recip(x):
    # EUP reciprocal seed (free slot in these MXU/memory-bound kernels) + one Newton
    # step so the result stays ~f32-exact for the 1e-3 end-to-end tolerance.
    r = pl.reciprocal(x, approx=True)
    return r * (2.0 - x * r)


def _erf_approx(x):
    # Abramowitz & Stegun 7.1.26 polynomial, |err| <= 1.5e-7 (exp + VPU ops only).
    a1, a2, a3, a4, a5 = 0.254829592, -0.284496736, 1.421413741, -1.453152027, 1.061405429
    p = 0.3275911
    sign = jnp.where(x >= 0.0, 1.0, -1.0)
    ax = jnp.abs(x)
    t = _recip(1.0 + p * ax)
    poly = ((((a5 * t + a4) * t + a3) * t + a2) * t + a1) * t
    return sign * (1.0 - poly * jnp.exp(-ax * ax))


def _gelu_exact(x):
    # nn.GELU() default = exact (erf-based) GELU.
    return 0.5 * x * (1.0 + _erf_approx(x * (1.0 / math.sqrt(2.0))))


def _layernorm(z, gamma, beta, eps):
    # torch.Tensor.std -> unbiased (divide by d-1); module uses (std + eps), not sqrt(var+eps).
    d = z.shape[-1]
    mean = jnp.mean(z, axis=-1, keepdims=True)
    zc = z - mean
    std = jnp.sqrt(jnp.sum(zc * zc, axis=-1, keepdims=True) * (1.0 / (d - 1)))
    return gamma * zc * _recip(std + eps) + beta


# ----------------------------------------------------------------------------- fused MHA + residual + LN

def _mha_ln_kernel(x_ref, kv_ref, wq_ref, bq_ref, wkv_ref, bkv_ref, wo_ref, bo_ref,
                   g_ref, b_ref, o_ref, q_sc, m_sc, l_sc, acc_sc,
                   *, num_heads, dk, eps, compute_dtype):
    ki = pl.program_id(2)
    d_model = num_heads * dk
    x = x_ref[0]                                      # (tq, D): query source AND residual

    @pl.when(ki == 0)
    def _():
        m_sc[...] = jnp.full(m_sc.shape, -jnp.inf, m_sc.dtype)
        l_sc[...] = jnp.zeros(l_sc.shape, l_sc.dtype)
        acc_sc[...] = jnp.zeros(acc_sc.shape, acc_sc.dtype)
        q = jnp.dot(x.astype(compute_dtype), wq_ref[...],
                    preferred_element_type=jnp.float32) + bq_ref[...]
        q = (q * (1.0 / math.sqrt(dk))).astype(compute_dtype)   # fold 1/sqrt(dk) into Q once
        q_sc[...] = q.reshape(q.shape[0], num_heads, dk).transpose(1, 0, 2)

    # Packed K/V projection of this KV chunk: one (tk, D) x (D, 2D) MXU pass.
    kv = kv_ref[0].astype(compute_dtype)              # (tk, D)
    kvp = jnp.dot(kv, wkv_ref[...], preferred_element_type=jnp.float32) + bkv_ref[...]
    tk = kv.shape[0]
    kh = kvp[:, :d_model].astype(compute_dtype).reshape(tk, num_heads, dk).transpose(1, 0, 2)
    vh = kvp[:, d_model:].astype(compute_dtype).reshape(tk, num_heads, dk).transpose(1, 0, 2)

    # Heads as a batch dim of batched matmuls; online-softmax accumulation over KV chunks.
    s = jnp.einsum("hqd,hkd->hqk", q_sc[...], kh,
                   preferred_element_type=jnp.float32)           # (H, tq, tk) f32
    m_prev = m_sc[...]
    m_new = jnp.maximum(m_prev, jnp.max(s, axis=-1, keepdims=True))
    alpha = jnp.exp(m_prev - m_new)
    p = jnp.exp(s - m_new)
    l_sc[...] = alpha * l_sc[...] + jnp.sum(p, axis=-1, keepdims=True)
    acc_sc[...] = alpha * acc_sc[...] + jnp.einsum(
        "hqk,hkd->hqd", p.astype(compute_dtype), vh, preferred_element_type=jnp.float32)
    m_sc[...] = m_new

    # Epilogue: output projection + residual add + LayerNorm fused (no extra HBM pass).
    @pl.when(ki == pl.num_programs(2) - 1)
    def _():
        ctx = acc_sc[...] * _recip(l_sc[...])                    # (H, tq, dk) f32
        tq = ctx.shape[1]
        ctx = ctx.transpose(1, 0, 2).reshape(tq, d_model)        # head-major concat -> (tq, D)
        out = jnp.dot(ctx.astype(compute_dtype), wo_ref[...],
                      preferred_element_type=jnp.float32) + bo_ref[...]
        z = x.astype(jnp.float32) + out
        o_ref[0] = _layernorm(z, g_ref[...], b_ref[...], eps).astype(o_ref.dtype)


def _pick_attn_tiles(B, S, S_kv, d_model, num_heads, dk, act_bytes, w_bytes,
                     q_cap=256, kv_cap=1024):
    if B == 1 and S % 16 == 0:
        q_cap = min(q_cap, S // 2)       # >=2 grid steps so both v7x TensorCores get work
    budget = _vmem_budget_bytes()

    def est(tq, tk):
        # Pipelined blocks AND constant-index_map "resident" weights are double-buffered
        # by default -> count everything 2x.
        blocks = 2 * act_bytes * (2 * tq + tk) * d_model            # x, out, kv tiles
        weights = 2 * (w_bytes * 4 * d_model * d_model + 4 * 6 * d_model)
        scratch = (w_bytes + 4) * num_heads * tq * dk + 2 * 4 * num_heads * tq
        scores = 2 * 4 * num_heads * tq * tk                        # s + p transients (f32)
        kvproj = 4 * 2 * tk * 2 * d_model                           # kvp + relayouts (rough)
        return blocks + weights + scratch + scores + kvproj

    for tq in _tile_candidates(S, q_cap):
        for tk in _tile_candidates(S_kv, kv_cap):
            if est(tq, tk) <= budget:
                return tq, tk
    return _tile_candidates(S, 8)[-1], _tile_candidates(S_kv, 8)[-1]


def mha_ln_forward(x, kv, attn_p, ln_p, num_heads, eps, compute_dtype,
                   q_tile_cap=256, kv_tile_cap=1024):
    """Fused y = LayerNorm(x + MHA(q=x, kv=kv)) as one pallas_call."""
    B, S, D = x.shape
    _, S_kv, _ = kv.shape
    dk = D // num_heads
    act_bytes = jnp.dtype(x.dtype).itemsize
    w_bytes = jnp.dtype(compute_dtype).itemsize
    tq, tk = _pick_attn_tiles(B, S, S_kv, D, num_heads, dk, act_bytes, w_bytes,
                              q_cap=q_tile_cap, kv_cap=kv_tile_cap)
    n_q, n_k = S // tq, S_kv // tk

    wq = attn_p["wq"].astype(compute_dtype)
    wkv = attn_p["wkv"].astype(compute_dtype)
    wo = attn_p["wo"].astype(compute_dtype)

    kernel = functools.partial(_mha_ln_kernel, num_heads=num_heads, dk=dk, eps=eps,
                               compute_dtype=compute_dtype)
    const = lambda b, qi, ki: (0, 0)
    return pl.pallas_call(
        kernel,
        out_shape=jax.ShapeDtypeStruct((B, S, D), x.dtype),
        grid=(B, n_q, n_k),
        in_specs=[
            pl.BlockSpec((1, tq, D), lambda b, qi, ki: (b, qi, 0)),   # x (query + residual)
            pl.BlockSpec((1, tk, D), lambda b, qi, ki: (b, ki, 0)),   # K/V source chunk
            pl.BlockSpec((D, D), const),          # wq       (resident)
            pl.BlockSpec((1, D), const),          # bq
            pl.BlockSpec((D, 2 * D), const),      # w_kv     (packed K|V, resident)
            pl.BlockSpec((1, 2 * D), const),      # b_kv
            pl.BlockSpec((D, D), const),          # wo       (resident)
            pl.BlockSpec((1, D), const),          # bo
            pl.BlockSpec((1, D), const),          # gamma
            pl.BlockSpec((1, D), const),          # beta
        ],
        out_specs=pl.BlockSpec((1, tq, D), lambda b, qi, ki: (b, qi, 0)),
        scratch_shapes=[
            pltpu.VMEM((num_heads, tq, dk), compute_dtype),   # Q (scaled, head-major)
            pltpu.VMEM((num_heads, tq, 1), jnp.float32),      # running max
            pltpu.VMEM((num_heads, tq, 1), jnp.float32),      # running denom
            pltpu.VMEM((num_heads, tq, dk), jnp.float32),     # context accumulator
        ],
        compiler_params=_compiler_params(2, 1),
    )(x, kv, wq, attn_p["bq"], wkv, attn_p["bkv"], wo, attn_p["bo"],
      ln_p["gamma"], ln_p["beta"])


# ----------------------------------------------------------------------------- fused FFN + residual + LN

def _ffn_ln_kernel(x_ref, w1_ref, b1_ref, w2_ref, b2_ref, g_ref, b_ref, o_ref,
                   *, eps, compute_dtype):
    x = x_ref[...]                                     # (tr, D), also the residual
    h = jnp.dot(x.astype(compute_dtype), w1_ref[...],
                preferred_element_type=jnp.float32) + b1_ref[...]
    h = _gelu_exact(h)
    y = jnp.dot(h.astype(compute_dtype), w2_ref[...],
                preferred_element_type=jnp.float32) + b2_ref[...]
    z = x.astype(jnp.float32) + y                      # fused residual add
    o_ref[...] = _layernorm(z, g_ref[...], b_ref[...], eps).astype(o_ref.dtype)


def _pick_row_tile(rows, d_model, d_ff, act_bytes, w_bytes, cap=1024):
    if rows >= 16:
        cap = min(cap, max(8, rows // 2))   # >=2 grid steps for v7x's 2 TensorCores
    budget = _vmem_budget_bytes()
    # Resident w1/w2 + biases/gamma/beta are double-buffered by default -> 2x.
    resident = 2 * (w_bytes * 2 * d_model * d_ff + 4 * (d_ff + 3 * d_model))
    # TODO(synk): if f32 w1/w2 alone exceed the budget (huge d_ff on v7x), add a d_ff grid
    # axis with an f32 accumulator instead of relying on compute_dtype=bf16.
    for tr in _tile_candidates(rows, cap):
        blocks = 2 * act_bytes * 2 * tr * d_model + (4 + w_bytes) * tr * d_ff
        if resident + blocks <= budget:
            return tr
    return _tile_candidates(rows, 8)[-1]


def ffn_ln_forward(x, ffn_p, ln_p, eps, compute_dtype):
    """Fused y = LayerNorm(x + FFN(x)) on a lane-dense (B*S, D) layout."""
    B, S, D = x.shape
    d_ff = ffn_p["w1"].shape[1]
    rows = B * S
    x2 = x.reshape(rows, D)
    act_bytes = jnp.dtype(x.dtype).itemsize
    w_bytes = jnp.dtype(compute_dtype).itemsize
    tr = _pick_row_tile(rows, D, d_ff, act_bytes, w_bytes)

    w1 = ffn_p["w1"].astype(compute_dtype)
    w2 = ffn_p["w2"].astype(compute_dtype)
    kernel = functools.partial(_ffn_ln_kernel, eps=eps, compute_dtype=compute_dtype)
    const = lambda i: (0, 0)
    out2 = pl.pallas_call(
        kernel,
        out_shape=jax.ShapeDtypeStruct((rows, D), x.dtype),
        grid=(rows // tr,),
        in_specs=[
            pl.BlockSpec((tr, D), lambda i: (i, 0)),     # activations + residual (row tile)
            pl.BlockSpec((D, d_ff), const),              # w1 (resident)
            pl.BlockSpec((1, d_ff), const),              # b1
            pl.BlockSpec((d_ff, D), const),              # w2 (resident)
            pl.BlockSpec((1, D), const),                 # b2
            pl.BlockSpec((1, D), const),                 # gamma
            pl.BlockSpec((1, D), const),                 # beta
        ],
        out_specs=pl.BlockSpec((tr, D), lambda i: (i, 0)),
        compiler_params=_compiler_params(1),
    )(x2, w1, ffn_p["b1"], w2, ffn_p["b2"], ln_p["gamma"], ln_p["beta"])
    return out2.reshape(B, S, D)


# ----------------------------------------------------------------------------- decoder layer

def decoder_layer_forward(x, encoder_output, params, num_heads, eps=1e-5,
                          compute_dtype=jnp.float32, q_tile_cap=256, kv_tile_cap=1024):
    # dropout == identity (inference); see TODO(synk) in the header.
    x = mha_ln_forward(x, x, params["self_attn"], params["norm1"], num_heads, eps,
                       compute_dtype, q_tile_cap, kv_tile_cap)
    x = mha_ln_forward(x, encoder_output, params["cross_attn"], params["norm2"],
                       num_heads, eps, compute_dtype, q_tile_cap, kv_tile_cap)
    x = ffn_ln_forward(x, params["ffn"], params["norm3"], eps, compute_dtype)
    return x


# ----------------------------------------------------------------------------- pure-JAX reference

_HP = jax.lax.Precision.HIGHEST


def _mha_ref(x, kv, p, num_heads):
    B, S, D = x.shape
    dk = D // num_heads
    wk, wv = p["wkv"][:, :D], p["wkv"][:, D:]
    bk, bv = p["bkv"][:, :D], p["bkv"][:, D:]
    q = jnp.einsum("bsd,de->bse", x, p["wq"], precision=_HP) + p["bq"]
    k = jnp.einsum("bsd,de->bse", kv, wk, precision=_HP) + bk
    v = jnp.einsum("bsd,de->bse", kv, wv, precision=_HP) + bv

    def split(t):
        return t.reshape(t.shape[0], t.shape[1], num_heads, dk).transpose(0, 2, 1, 3)

    qh, kh, vh = split(q), split(k), split(v)
    s = jnp.einsum("bhqd,bhkd->bhqk", qh, kh, precision=_HP) / math.sqrt(dk)
    w = jax.nn.softmax(s, axis=-1)
    ctx = jnp.einsum("bhqk,bhkd->bhqd", w, vh, precision=_HP)
    ctx = ctx.transpose(0, 2, 1, 3).reshape(B, S, D)
    return jnp.einsum("bsd,de->bse", ctx, p["wo"], precision=_HP) + p["bo"]


def _ln_ref(x, p, eps):
    mean = x.mean(axis=-1, keepdims=True)
    xc = x - mean
    std = jnp.sqrt(jnp.sum(xc * xc, axis=-1, keepdims=True) / (x.shape[-1] - 1))
    return p["gamma"] * xc / (std + eps) + p["beta"]


def _ffn_ref(x, p):
    h = jnp.einsum("bsd,df->bsf", x, p["w1"], precision=_HP) + p["b1"]
    h = 0.5 * h * (1.0 + _erf_exact(h / math.sqrt(2.0)))
    return jnp.einsum("bsf,fd->bsd", h, p["w2"], precision=_HP) + p["b2"]


def _decoder_layer_ref(x, enc, params, num_heads, eps):
    x = _ln_ref(x + _mha_ref(x, x, params["self_attn"], num_heads), params["norm1"], eps)
    x = _ln_ref(x + _mha_ref(x, enc, params["cross_attn"], num_heads), params["norm2"], eps)
    x = _ln_ref(x + _ffn_ref(x, params["ffn"]), params["norm3"], eps)
    return x


# ----------------------------------------------------------------------------- param init (example data)

def _xavier_uniform(key, fan_in, fan_out):
    bound = math.sqrt(6.0 / (fan_in + fan_out))
    return jax.random.uniform(key, (fan_in, fan_out), jnp.float32, -bound, bound)


def _init_mha(key, d_model):
    k1, k2, k3, k4 = jax.random.split(key, 4)
    wqkv = _xavier_uniform(k1, d_model, 3 * d_model)             # x @ W layout
    bqkv = 0.1 * jax.random.normal(k2, (1, 3 * d_model), jnp.float32)
    return {
        "wq": wqkv[:, :d_model], "bq": bqkv[:, :d_model],
        "wkv": wqkv[:, d_model:], "bkv": bqkv[:, d_model:],     # packed [K | V]
        "wo": _xavier_uniform(k3, d_model, d_model),
        "bo": 0.1 * jax.random.normal(k4, (1, d_model), jnp.float32),
    }


def _init_ffn(key, d_model, d_ff):
    k1, k2, k3, k4 = jax.random.split(key, 4)
    return {
        "w1": _xavier_uniform(k1, d_model, d_ff),
        "b1": 0.1 * jax.random.normal(k2, (1, d_ff), jnp.float32),
        "w2": _xavier_uniform(k3, d_ff, d_model),
        "b2": 0.1 * jax.random.normal(k4, (1, d_model), jnp.float32),
    }


def _init_ln(key, d_model):
    k1, k2 = jax.random.split(key)
    return {
        "gamma": 1.0 + 0.1 * jax.random.normal(k1, (1, d_model), jnp.float32),
        "beta": 0.1 * jax.random.normal(k2, (1, d_model), jnp.float32),
    }


# ----------------------------------------------------------------------------- main

if __name__ == "__main__":
    # D = 128 keeps every output store full-lane (unmasked vst, per the v5e review note).
    B, S, S_ENC, D, H, D_FF = 2, 16, 16, 128, 4, 256
    EPS = 1e-5

    key = jax.random.PRNGKey(0)
    kx, kenc, ksa, kca, kffn, kn1, kn2, kn3 = jax.random.split(key, 8)

    x = jax.random.normal(kx, (B, S, D), jnp.float32)
    encoder_output = jax.random.normal(kenc, (B, S_ENC, D), jnp.float32)

    params = {
        "self_attn": _init_mha(ksa, D),
        "cross_attn": _init_mha(kca, D),
        "ffn": _init_ffn(kffn, D, D_FF),
        "norm1": _init_ln(kn1, D),
        "norm2": _init_ln(kn2, D),
        "norm3": _init_ln(kn3, D),
    }

    ref = _decoder_layer_ref(x, encoder_output, params, num_heads=H, eps=EPS)

    # f32 path with small Q/KV tiles -> exercises the multi-step online-softmax
    # accumulation over the (B, S/tq, S_kv/tk) grid.
    fwd_f32 = jax.jit(lambda xx, ee, pp: decoder_layer_forward(
        xx, ee, pp, num_heads=H, eps=EPS, compute_dtype=jnp.float32,
        q_tile_cap=8, kv_tile_cap=8))
    out = jax.block_until_ready(fwd_f32(x, encoder_output, params))
    assert out.shape == (B, S, D)
    max_diff = float(jnp.max(jnp.abs(out - ref)))
    assert jnp.allclose(out, ref, atol=1e-3, rtol=1e-3), (
        f"f32 mismatch vs reference, max|diff|={max_diff}")

    # bf16 MXU-operand path (v6e / v7x recommendation), default (largest-fit) tiles.
    fwd_bf16 = jax.jit(lambda xx, ee, pp: decoder_layer_forward(
        xx, ee, pp, num_heads=H, eps=EPS, compute_dtype=jnp.bfloat16))
    out_bf16 = jax.block_until_ready(fwd_bf16(x, encoder_output, params))
    bf16_diff = float(jnp.max(jnp.abs(out_bf16 - ref)))
    assert bf16_diff < 0.25, f"bf16 path diverged, max|diff|={bf16_diff}"

    print("KERNEL_OK")
</pallas_src>

<mosaic_0001>
module attributes {stable_mosaic.version = 11 : i64} {
  func.func @_ffn_ln_kernel(%arg0: i32, %arg1: memref<16x128xf32, #tpu.memory_space<vmem>>, %arg2: memref<128x256xf32, #tpu.memory_space<vmem>>, %arg3: memref<1x256xf32, #tpu.memory_space<vmem>>, %arg4: memref<256x128xf32, #tpu.memory_space<vmem>>, %arg5: memref<1x128xf32, #tpu.memory_space<vmem>>, %arg6: memref<1x128xf32, #tpu.memory_space<vmem>>, %arg7: memref<1x128xf32, #tpu.memory_space<vmem>>, %arg8: memref<16x128xf32, #tpu.memory_space<vmem>>) attributes {dimension_semantics = [#tpu.dimension_semantics<parallel>], iteration_bounds = array<i64: 2>, scalar_prefetch = 0 : i64, scratch_operands = 0 : i64, tpu.core_type = #tpu.core_type<tc>, window_params = [{transform_indices = @transform_0, window_bounds = array<i64: 16, 128>}, {pipeline_mode = #tpu.pipeline_mode<synchronous>, transform_indices = @transform_1, window_bounds = array<i64: 128, 256>}, {pipeline_mode = #tpu.pipeline_mode<synchronous>, transform_indices = @transform_2, window_bounds = array<i64: 1, 256>}, {pipeline_mode = #tpu.pipeline_mode<synchronous>, transform_indices = @transform_3, window_bounds = array<i64: 256, 128>}, {pipeline_mode = #tpu.pipeline_mode<synchronous>, transform_indices = @transform_4, window_bounds = array<i64: 1, 128>}, {pipeline_mode = #tpu.pipeline_mode<synchronous>, transform_indices = @transform_5, window_bounds = array<i64: 1, 128>}, {pipeline_mode = #tpu.pipeline_mode<synchronous>, transform_indices = @transform_6, window_bounds = array<i64: 1, 128>}, {transform_indices = @transform_7, window_bounds = array<i64: 16, 128>}]} {
    %c0 = arith.constant 0 : index
    %c0_0 = arith.constant 0 : index
    %0 = vector.load %arg1[%c0, %c0_0] : memref<16x128xf32, #tpu.memory_space<vmem>>, vector<16x128xf32>
    %c0_1 = arith.constant 0 : index
    %c0_2 = arith.constant 0 : index
    %1 = vector.load %arg2[%c0_1, %c0_2] : memref<128x256xf32, #tpu.memory_space<vmem>>, vector<128x256xf32>
    %cst = arith.constant dense<0.000000e+00> : vector<16x256xf32>
    %2 = tpu.matmul %0, %1, %cst {dimension_numbers = #tpu.dot_dimension_numbers<[1], [0], [0], [1], [0, 0, 1, 1], [], []>} : vector<16x128xf32>, vector<128x256xf32>, vector<16x256xf32> -> vector<16x256xf32>
    %c0_3 = arith.constant 0 : index
    %c0_4 = arith.constant 0 : index
    %3 = vector.load %arg3[%c0_3, %c0_4] : memref<1x256xf32, #tpu.memory_space<vmem>>, vector<1x256xf32>
    %4 = vector.broadcast %3 : vector<1x256xf32> to vector<16x256xf32>
    %5 = arith.addf %2, %4 : vector<16x256xf32>
    %cst_5 = arith.constant 5.000000e-01 : f32
    %6 = vector.broadcast %cst_5 : f32 to vector<16x256xf32>
    %7 = arith.mulf %6, %5 : vector<16x256xf32>
    %cst_6 = arith.constant 0.707106769 : f32
    %8 = vector.broadcast %cst_6 : f32 to vector<16x256xf32>
    %9 = arith.mulf %5, %8 : vector<16x256xf32>
    %cst_7 = arith.constant 0.000000e+00 : f32
    %10 = vector.broadcast %cst_7 : f32 to vector<16x256xf32>
    %11 = arith.cmpf oge, %9, %10 : vector<16x256xf32>
    %cst_8 = arith.constant 1.000000e+00 : f32
    %cst_9 = arith.constant -1.000000e+00 : f32
    %12 = vector.broadcast %cst_8 : f32 to vector<16x256xf32>
    %13 = vector.broadcast %cst_9 : f32 to vector<16x256xf32>
    %14 = arith.select %11, %12, %13 : vector<16x256xi1>, vector<16x256xf32>
    %15 = math.absf %9 : vector<16x256xf32>
    %cst_10 = arith.constant 0.327591091 : f32
    %16 = vector.broadcast %cst_10 : f32 to vector<16x256xf32>
    %17 = arith.mulf %16, %15 : vector<16x256xf32>
    %cst_11 = arith.constant 1.000000e+00 : f32
    %18 = vector.broadcast %cst_11 : f32 to vector<16x256xf32>
    %19 = arith.addf %18, %17 : vector<16x256xf32>
    %20 = tpu.reciprocal %19 {approx = true} : vector<16x256xf32> -> vector<16x256xf32>
    %21 = arith.mulf %19, %20 : vector<16x256xf32>
    %cst_12 = arith.constant 2.000000e+00 : f32
    %22 = vector.broadcast %cst_12 : f32 to vector<16x256xf32>
    %23 = arith.subf %22, %21 : vector<16x256xf32>
    %24 = arith.mulf %20, %23 : vector<16x256xf32>
    %cst_13 = arith.constant 1.06140542 : f32
    %25 = vector.broadcast %cst_13 : f32 to vector<16x256xf32>
    %26 = arith.mulf %25, %24 : vector<16x256xf32>
    %cst_14 = arith.constant -1.45315206 : f32
    %27 = vector.broadcast %cst_14 : f32 to vector<16x256xf32>
    %28 = arith.addf %26, %27 : vector<16x256xf32>
    %29 = arith.mulf %28, %24 : vector<16x256xf32>
    %cst_15 = arith.constant 1.42141378 : f32
    %30 = vector.broadcast %cst_15 : f32 to vector<16x256xf32>
    %31 = arith.addf %29, %30 : vector<16x256xf32>
    %32 = arith.mulf %31, %24 : vector<16x256xf32>
    %cst_16 = arith.constant -0.284496725 : f32
    %33 = vector.broadcast %cst_16 : f32 to vector<16x256xf32>
    %34 = arith.addf %32, %33 : vector<16x256xf32>
    %35 = arith.mulf %34, %24 : vector<16x256xf32>
    %cst_17 = arith.constant 0.254829586 : f32
    %36 = vector.broadcast %cst_17 : f32 to vector<16x256xf32>
    %37 = arith.addf %35, %36 : vector<16x256xf32>
    %38 = arith.mulf %37, %24 : vector<16x256xf32>
    %cst_18 = arith.constant 0.000000e+00 : f32
    %39 = vector.broadcast %cst_18 : f32 to vector<16x256xf32>
    %40 = arith.subf %39, %15 : vector<16x256xf32>
    %41 = arith.mulf %40, %15 : vector<16x256xf32>
    %42 = math.exp %41 : vector<16x256xf32>
    %43 = arith.mulf %38, %42 : vector<16x256xf32>
    %cst_19 = arith.constant 1.000000e+00 : f32
    %44 = vector.broadcast %cst_19 : f32 to vector<16x256xf32>
    %45 = arith.subf %44, %43 : vector<16x256xf32>
    %46 = arith.mulf %14, %45 : vector<16x256xf32>
    %cst_20 = arith.constant 1.000000e+00 : f32
    %47 = vector.broadcast %cst_20 : f32 to vector<16x256xf32>
    %48 = arith.addf %47, %46 : vector<16x256xf32>
    %49 = arith.mulf %7, %48 : vector<16x256xf32>
    %c0_21 = arith.constant 0 : index
    %c0_22 = arith.constant 0 : index
    %50 = vector.load %arg4[%c0_21, %c0_22] : memref<256x128xf32, #tpu.memory_space<vmem>>, vector<256x128xf32>
    %cst_23 = arith.constant dense<0.000000e+00> : vector<16x128xf32>
    %51 = tpu.matmul %49, %50, %cst_23 {dimension_numbers = #tpu.dot_dimension_numbers<[1], [0], [0], [1], [0, 0, 1, 1], [], []>} : vector<16x256xf32>, vector<256x128xf32>, vector<16x128xf32> -> vector<16x128xf32>
    %c0_24 = arith.constant 0 : index
    %c0_25 = arith.constant 0 : index
    %52 = vector.load %arg5[%c0_24, %c0_25] : memref<1x128xf32, #tpu.memory_space<vmem>>, vector<1x128xf32>
    %53 = vector.broadcast %52 : vector<1x128xf32> to vector<16x128xf32>
    %54 = arith.addf %51, %53 : vector<16x128xf32>
    %55 = arith.addf %0, %54 : vector<16x128xf32>
    %c0_26 = arith.constant 0 : index
    %c0_27 = arith.constant 0 : index
    %56 = vector.load %arg6[%c0_26, %c0_27] : memref<1x128xf32, #tpu.memory_space<vmem>>, vector<1x128xf32>
    %c0_28 = arith.constant 0 : index
    %c0_29 = arith.constant 0 : index
    %57 = vector.load %arg7[%c0_28, %c0_29] : memref<1x128xf32, #tpu.memory_space<vmem>>, vector<1x128xf32>
    %cst_30 = arith.constant dense<0.000000e+00> : vector<16xf32>
    %58 = vector.multi_reduction <add>, %55, %cst_30 [1] : vector<16x128xf32> to vector<16xf32>
    %59 = vector.shape_cast %58 : vector<16xf32> to vector<16x1xf32>
    %cst_31 = arith.constant 1.280000e+02 : f32
    %60 = vector.broadcast %cst_31 : f32 to vector<16x1xf32>
    %61 = arith.divf %59, %60 : vector<16x1xf32>
    %62 = vector.broadcast %61 : vector<16x1xf32> to vector<16x128xf32>
    %63 = arith.subf %55, %62 : vector<16x128xf32>
    %64 = arith.mulf %63, %63 : vector<16x128xf32>
    %cst_32 = arith.constant dense<0.000000e+00> : vector<16xf32>
    %65 = vector.multi_reduction <add>, %64, %cst_32 [1] : vector<16x128xf32> to vector<16xf32>
    %66 = vector.shape_cast %65 : vector<16xf32> to vector<16x1xf32>
    %cst_33 = arith.constant 0.00787401571 : f32
    %67 = vector.broadcast %cst_33 : f32 to vector<16x1xf32>
    %68 = arith.mulf %66, %67 : vector<16x1xf32>
    %69 = math.sqrt %68 : vector<16x1xf32>
    %70 = vector.broadcast %56 : vector<1x128xf32> to vector<16x128xf32>
    %71 = arith.mulf %70, %63 : vector<16x128xf32>
    %cst_34 = arith.constant 9.99999974E-6 : f32
    %72 = vector.broadcast %cst_34 : f32 to vector<16x1xf32>
    %73 = arith.addf %69, %72 : vector<16x1xf32>
    %74 = tpu.reciprocal %73 {approx = true} : vector<16x1xf32> -> vector<16x1xf32>
    %75 = arith.mulf %73, %74 : vector<16x1xf32>
    %cst_35 = arith.constant 2.000000e+00 : f32
    %76 = vector.broadcast %cst_35 : f32 to vector<16x1xf32>
    %77 = arith.subf %76, %75 : vector<16x1xf32>
    %78 = arith.mulf %74, %77 : vector<16x1xf32>
    %79 = vector.broadcast %78 : vector<16x1xf32> to vector<16x128xf32>
    %80 = arith.mulf %71, %79 : vector<16x128xf32>
    %81 = vector.broadcast %57 : vector<1x128xf32> to vector<16x128xf32>
    %82 = arith.addf %80, %81 : vector<16x128xf32>
    %c0_36 = arith.constant 0 : index
    %c0_37 = arith.constant 0 : index
    %83 = vector.load %arg8[%c0_36, %c0_37] : memref<16x128xf32, #tpu.memory_space<vmem>>, vector<16x128xf32>
    tpu.vector_store %arg8[%c0_36, %c0_37], %82 {strides = array<i32>} : memref<16x128xf32, #tpu.memory_space<vmem>>, vector<16x128xf32>,
    return
  }
  func.func @transform_0(%arg0: i32) -> (i32, i32) {
    %c0_i32 = arith.constant 0 : i32
    %c0_i32_0 = arith.constant 0 : i32
    return %arg0, %c0_i32 : i32, i32
  }
  func.func @transform_1(%arg0: i32) -> (i32, i32) {
    %c0_i32 = arith.constant 0 : i32
    %c0_i32_0 = arith.constant 0 : i32
    %c0_i32_1 = arith.constant 0 : i32
    return %c0_i32, %c0_i32_0 : i32, i32
  }
  func.func @transform_2(%arg0: i32) -> (i32, i32) {
    %c0_i32 = arith.constant 0 : i32
    %c0_i32_0 = arith.constant 0 : i32
    %c0_i32_1 = arith.constant 0 : i32
    return %c0_i32, %c0_i32_0 : i32, i32
  }
  func.func @transform_3(%arg0: i32) -> (i32, i32) {
    %c0_i32 = arith.constant 0 : i32
    %c0_i32_0 = arith.constant 0 : i32
    %c0_i32_1 = arith.constant 0 : i32
    return %c0_i32, %c0_i32_0 : i32, i32
  }
  func.func @transform_4(%arg0: i32) -> (i32, i32) {
    %c0_i32 = arith.constant 0 : i32
    %c0_i32_0 = arith.constant 0 : i32
    %c0_i32_1 = arith.constant 0 : i32
    return %c0_i32, %c0_i32_0 : i32, i32
  }
  func.func @transform_5(%arg0: i32) -> (i32, i32) {
    %c0_i32 = arith.constant 0 : i32
    %c0_i32_0 = arith.constant 0 : i32
    %c0_i32_1 = arith.constant 0 : i32
    return %c0_i32, %c0_i32_0 : i32, i32
  }
  func.func @transform_6(%arg0: i32) -> (i32, i32) {
    %c0_i32 = arith.constant 0 : i32
    %c0_i32_0 = arith.constant 0 : i32
    %c0_i32_1 = arith.constant 0 : i32
    return %c0_i32, %c0_i32_0 : i32, i32
  }
  func.func @transform_7(%arg0: i32) -> (i32, i32) {
    %c0_i32 = arith.constant 0 : i32
    %c0_i32_0 = arith.constant 0 : i32
    return %arg0, %c0_i32 : i32, i32
  }
}

module attributes {stable_mosaic.version = 11 : i64} {
  func.func @_mha_ln_kernel(%arg0: i32, %arg1: i32, %arg2: i32, %arg3: memref<1x8x128xf32, #tpu.memory_space<vmem>>, %arg4: memref<1x8x128xf32, #tpu.memory_space<vmem>>, %arg5: memref<128x128xf32, #tpu.memory_space<vmem>>, %arg6: memref<1x128xf32, #tpu.memory_space<vmem>>, %arg7: memref<128x256xf32, #tpu.memory_space<vmem>>, %arg8: memref<1x256xf32, #tpu.memory_space<vmem>>, %arg9: memref<128x128xf32, #tpu.memory_space<vmem>>, %arg10: memref<1x128xf32, #tpu.memory_space<vmem>>, %arg11: memref<1x128xf32, #tpu.memory_space<vmem>>, %arg12: memref<1x128xf32, #tpu.memory_space<vmem>>, %arg13: memref<1x8x128xf32, #tpu.memory_space<vmem>>, %arg14: memref<4x8x32xf32, #tpu.memory_space<vmem>>, %arg15: memref<4x8x1xf32, #tpu.memory_space<vmem>>, %arg16: memref<4x8x1xf32, #tpu.memory_space<vmem>>, %arg17: memref<4x8x32xf32, #tpu.memory_space<vmem>>) attributes {dimension_semantics = [#tpu.dimension_semantics<parallel>, #tpu.dimension_semantics<parallel>, #tpu.dimension_semantics<arbitrary>], iteration_bounds = array<i64: 2, 2, 2>, scalar_prefetch = 0 : i64, scratch_operands = 4 : i64, tpu.core_type = #tpu.core_type<tc>, window_params = [{transform_indices = @transform_0, window_bounds = array<i64: 1, 8, 128>}, {transform_indices = @transform_1, window_bounds = array<i64: 1, 8, 128>}, {pipeline_mode = #tpu.pipeline_mode<synchronous>, transform_indices = @transform_2, window_bounds = array<i64: 128, 128>}, {pipeline_mode = #tpu.pipeline_mode<synchronous>, transform_indices = @transform_3, window_bounds = array<i64: 1, 128>}, {pipeline_mode = #tpu.pipeline_mode<synchronous>, transform_indices = @transform_4, window_bounds = array<i64: 128, 256>}, {pipeline_mode = #tpu.pipeline_mode<synchronous>, transform_indices = @transform_5, window_bounds = array<i64: 1, 256>}, {pipeline_mode = #tpu.pipeline_mode<synchronous>, transform_indices = @transform_6, window_bounds = array<i64: 128, 128>}, {pipeline_mode = #tpu.pipeline_mode<synchronous>, transform_indices = @transform_7, window_bounds = array<i64: 1, 128>}, {pipeline_mode = #tpu.pipeline_mode<synchronous>, transform_indices = @transform_8, window_bounds = array<i64: 1, 128>}, {pipeline_mode = #tpu.pipeline_mode<synchronous>, transform_indices = @transform_9, window_bounds = array<i64: 1, 128>}, {transform_indices = @transform_10, window_bounds = array<i64: 1, 8, 128>}]} {
    %c0 = arith.constant 0 : index
    %c0_0 = arith.constant 0 : index
    %c0_1 = arith.constant 0 : index
    %0 = vector.load %arg3[%c0, %c0_0, %c0_1] : memref<1x8x128xf32, #tpu.memory_space<vmem>>, vector<1x8x128xf32>
    %1 = vector.shape_cast %0 : vector<1x8x128xf32> to vector<8x128xf32>
    %c0_i32 = arith.constant 0 : i32
    %2 = arith.cmpi eq, %arg2, %c0_i32 : i32
    %3 = arith.extui %2 : i1 to i32
    %c0_i32_2 = arith.constant 0 : i32
    %4 = arith.cmpi ne, %3, %c0_i32_2 : i32
    scf.if %4 {
      %cst_36 = arith.constant 0xFF800000 : f32
      %45 = vector.broadcast %cst_36 : f32 to vector<4x8x1xf32>
      %c0_37 = arith.constant 0 : index
      %c0_38 = arith.constant 0 : index
      %c0_39 = arith.constant 0 : index
      %46 = vector.load %arg15[%c0_37, %c0_38, %c0_39] : memref<4x8x1xf32, #tpu.memory_space<vmem>>, vector<4x8x1xf32>
      tpu.vector_store %arg15[%c0_37, %c0_38, %c0_39], %45 {strides = array<i32>} : memref<4x8x1xf32, #tpu.memory_space<vmem>>, vector<4x8x1xf32>,
      %cst_40 = arith.constant 0.000000e+00 : f32
      %47 = vector.broadcast %cst_40 : f32 to vector<4x8x1xf32>
      %c0_41 = arith.constant 0 : index
      %c0_42 = arith.constant 0 : index
      %c0_43 = arith.constant 0 : index
      %48 = vector.load %arg16[%c0_41, %c0_42, %c0_43] : memref<4x8x1xf32, #tpu.memory_space<vmem>>, vector<4x8x1xf32>
      tpu.vector_store %arg16[%c0_41, %c0_42, %c0_43], %47 {strides = array<i32>} : memref<4x8x1xf32, #tpu.memory_space<vmem>>, vector<4x8x1xf32>,
      %cst_44 = arith.constant 0.000000e+00 : f32
      %49 = vector.broadcast %cst_44 : f32 to vector<4x8x32xf32>
      %c0_45 = arith.constant 0 : index
      %c0_46 = arith.constant 0 : index
      %c0_47 = arith.constant 0 : index
      %50 = vector.load %arg17[%c0_45, %c0_46, %c0_47] : memref<4x8x32xf32, #tpu.memory_space<vmem>>, vector<4x8x32xf32>
      tpu.vector_store %arg17[%c0_45, %c0_46, %c0_47], %49 {strides = array<i32>} : memref<4x8x32xf32, #tpu.memory_space<vmem>>, vector<4x8x32xf32>,
      %c0_48 = arith.constant 0 : index
      %c0_49 = arith.constant 0 : index
      %51 = vector.load %arg5[%c0_48, %c0_49] : memref<128x128xf32, #tpu.memory_space<vmem>>, vector<128x128xf32>
      %cst_50 = arith.constant dense<0.000000e+00> : vector<8x128xf32>
      %52 = tpu.matmul %1, %51, %cst_50 {dimension_numbers = #tpu.dot_dimension_numbers<[1], [0], [0], [1], [0, 0, 1, 1], [], []>} : vector<8x128xf32>, vector<128x128xf32>, vector<8x128xf32> -> vector<8x128xf32>
      %c0_51 = arith.constant 0 : index
      %c0_52 = arith.constant 0 : index
      %53 = vector.load %arg6[%c0_51, %c0_52] : memref<1x128xf32, #tpu.memory_space<vmem>>, vector<1x128xf32>
      %54 = vector.broadcast %53 : vector<1x128xf32> to vector<8x128xf32>
      %55 = arith.addf %52, %54 : vector<8x128xf32>
      %cst_53 = arith.constant 0.176776692 : f32
      %56 = vector.broadcast %cst_53 : f32 to vector<8x128xf32>
      %57 = arith.mulf %55, %56 : vector<8x128xf32>
      %58 = vector.shape_cast %57 : vector<8x128xf32> to vector<8x4x32xf32>
      %59 = tpu.transpose %58, [1, 0, 2] : vector<8x4x32xf32> -> vector<4x8x32xf32>
      %c0_54 = arith.constant 0 : index
      %c0_55 = arith.constant 0 : index
      %c0_56 = arith.constant 0 : index
      %60 = vector.load %arg14[%c0_54, %c0_55, %c0_56] : memref<4x8x32xf32, #tpu.memory_space<vmem>>, vector<4x8x32xf32>
      tpu.vector_store %arg14[%c0_54, %c0_55, %c0_56], %59 {strides = array<i32>} : memref<4x8x32xf32, #tpu.memory_space<vmem>>, vector<4x8x32xf32>,
    } else {
    }
    %c0_3 = arith.constant 0 : index
    %c0_4 = arith.constant 0 : index
    %c0_5 = arith.constant 0 : index
    %5 = vector.load %arg4[%c0_3, %c0_4, %c0_5] : memref<1x8x128xf32, #tpu.memory_space<vmem>>, vector<1x8x128xf32>
    %6 = vector.shape_cast %5 : vector<1x8x128xf32> to vector<8x128xf32>
    %c0_6 = arith.constant 0 : index
    %c0_7 = arith.constant 0 : index
    %7 = vector.load %arg7[%c0_6, %c0_7] : memref<128x256xf32, #tpu.memory_space<vmem>>, vector<128x256xf32>
    %cst = arith.constant dense<0.000000e+00> : vector<8x256xf32>
    %8 = tpu.matmul %6, %7, %cst {dimension_numbers = #tpu.dot_dimension_numbers<[1], [0], [0], [1], [0, 0, 1, 1], [], []>} : vector<8x128xf32>, vector<128x256xf32>, vector<8x256xf32> -> vector<8x256xf32>
    %c0_8 = arith.constant 0 : index
    %c0_9 = arith.constant 0 : index
    %9 = vector.load %arg8[%c0_8, %c0_9] : memref<1x256xf32, #tpu.memory_space<vmem>>, vector<1x256xf32>
    %10 = vector.broadcast %9 : vector<1x256xf32> to vector<8x256xf32>
    %11 = arith.addf %8, %10 : vector<8x256xf32>
    %12 = vector.extract_strided_slice %11 {offsets = [0, 0], sizes = [8, 128], strides = [1, 1]} : vector<8x256xf32> to vector<8x128xf32>
    %13 = vector.shape_cast %12 : vector<8x128xf32> to vector<8x4x32xf32>
    %14 = tpu.transpose %13, [1, 0, 2] : vector<8x4x32xf32> -> vector<4x8x32xf32>
    %15 = vector.extract_strided_slice %11 {offsets = [0, 128], sizes = [8, 128], strides = [1, 1]} : vector<8x256xf32> to vector<8x128xf32>
    %16 = vector.shape_cast %15 : vector<8x128xf32> to vector<8x4x32xf32>
    %17 = tpu.transpose %16, [1, 0, 2] : vector<8x4x32xf32> -> vector<4x8x32xf32>
    %c0_10 = arith.constant 0 : index
    %c0_11 = arith.constant 0 : index
    %c0_12 = arith.constant 0 : index
    %18 = vector.load %arg14[%c0_10, %c0_11, %c0_12] : memref<4x8x32xf32, #tpu.memory_space<vmem>>, vector<4x8x32xf32>
    "tpu.trace_start"() <{level = 10 : i32, message = "hqd,hkd->hqk"}> : () -> ()
    %cst_13 = arith.constant dense<0.000000e+00> : vector<4x8x8xf32>
    %19 = tpu.matmul %18, %14, %cst_13 {dimension_numbers = #tpu.dot_dimension_numbers<[2], [2], [1], [1], [0, 0, 0, 1, 1, 1], [0], [0]>} : vector<4x8x32xf32>, vector<4x8x32xf32>, vector<4x8x8xf32> -> vector<4x8x8xf32>
    "tpu.trace_stop"() : () -> ()
    %c0_14 = arith.constant 0 : index
    %c0_15 = arith.constant 0 : index
    %c0_16 = arith.constant 0 : index
    %20 = vector.load %arg15[%c0_14, %c0_15, %c0_16] : memref<4x8x1xf32, #tpu.memory_space<vmem>>, vector<4x8x1xf32>
    %cst_17 = arith.constant dense<0xFF800000> : vector<4x8xf32>
    %21 = vector.multi_reduction <maximumf>, %19, %cst_17 [2] : vector<4x8x8xf32> to vector<4x8xf32>
    %22 = vector.shape_cast %21 : vector<4x8xf32> to vector<4x8x1xf32>
    %23 = arith.maximumf %20, %22 : vector<4x8x1xf32>
    %24 = arith.subf %20, %23 : vector<4x8x1xf32>
    %25 = math.exp %24 : vector<4x8x1xf32>
    %26 = vector.broadcast %23 : vector<4x8x1xf32> to vector<4x8x8xf32>
    %27 = arith.subf %19, %26 : vector<4x8x8xf32>
    %28 = math.exp %27 : vector<4x8x8xf32>
    %c0_18 = arith.constant 0 : index
    %c0_19 = arith.constant 0 : index
    %c0_20 = arith.constant 0 : index
    %29 = vector.load %arg16[%c0_18, %c0_19, %c0_20] : memref<4x8x1xf32, #tpu.memory_space<vmem>>, vector<4x8x1xf32>
    %30 = arith.mulf %25, %29 : vector<4x8x1xf32>
    %cst_21 = arith.constant dense<0.000000e+00> : vector<4x8xf32>
    %31 = vector.multi_reduction <add>, %28, %cst_21 [2] : vector<4x8x8xf32> to vector<4x8xf32>
    %32 = vector.shape_cast %31 : vector<4x8xf32> to vector<4x8x1xf32>
    %33 = arith.addf %30, %32 : vector<4x8x1xf32>
    %c0_22 = arith.constant 0 : index
    %c0_23 = arith.constant 0 : index
    %c0_24 = arith.constant 0 : index
    %34 = vector.load %arg16[%c0_22, %c0_23, %c0_24] : memref<4x8x1xf32, #tpu.memory_space<vmem>>, vector<4x8x1xf32>
    tpu.vector_store %arg16[%c0_22, %c0_23, %c0_24], %33 {strides = array<i32>} : memref<4x8x1xf32, #tpu.memory_space<vmem>>, vector<4x8x1xf32>,
    %c0_25 = arith.constant 0 : index
    %c0_26 = arith.constant 0 : index
    %c0_27 = arith.constant 0 : index
    %35 = vector.load %arg17[%c0_25, %c0_26, %c0_27] : memref<4x8x32xf32, #tpu.memory_space<vmem>>, vector<4x8x32xf32>
    %36 = vector.broadcast %25 : vector<4x8x1xf32> to vector<4x8x32xf32>
    %37 = arith.mulf %36, %35 : vector<4x8x32xf32>
    "tpu.trace_start"() <{level = 10 : i32, message = "hqk,hkd->hqd"}> : () -> ()
    %cst_28 = arith.constant dense<0.000000e+00> : vector<4x8x32xf32>
    %38 = tpu.matmul %28, %17, %cst_28 {dimension_numbers = #tpu.dot_dimension_numbers<[2], [1], [1], [2], [0, 0, 0, 1, 1, 2], [0], [0]>} : vector<4x8x8xf32>, vector<4x8x32xf32>, vector<4x8x32xf32> -> vector<4x8x32xf32>
    "tpu.trace_stop"() : () -> ()
    %39 = arith.addf %37, %38 : vector<4x8x32xf32>
    %c0_29 = arith.constant 0 : index
    %c0_30 = arith.constant 0 : index
    %c0_31 = arith.constant 0 : index
    %40 = vector.load %arg17[%c0_29, %c0_30, %c0_31] : memref<4x8x32xf32, #tpu.memory_space<vmem>>, vector<4x8x32xf32>
    tpu.vector_store %arg17[%c0_29, %c0_30, %c0_31], %39 {strides = array<i32>} : memref<4x8x32xf32, #tpu.memory_space<vmem>>, vector<4x8x32xf32>,
    %c0_32 = arith.constant 0 : index
    %c0_33 = arith.constant 0 : index
    %c0_34 = arith.constant 0 : index
    %41 = vector.load %arg15[%c0_32, %c0_33, %c0_34] : memref<4x8x1xf32, #tpu.memory_space<vmem>>, vector<4x8x1xf32>
    tpu.vector_store %arg15[%c0_32, %c0_33, %c0_34], %23 {strides = array<i32>} : memref<4x8x1xf32, #tpu.memory_space<vmem>>, vector<4x8x1xf32>,
    %c1_i32 = arith.constant 1 : i32
    %42 = arith.cmpi eq, %arg2, %c1_i32 : i32
    %43 = arith.extui %42 : i1 to i32
    %c0_i32_35 = arith.constant 0 : i32
    %44 = arith.cmpi ne, %43, %c0_i32_35 : i32
    scf.if %44 {
      %c0_36 = arith.constant 0 : index
      %c0_37 = arith.constant 0 : index
      %c0_38 = arith.constant 0 : index
      %45 = vector.load %arg17[%c0_36, %c0_37, %c0_38] : memref<4x8x32xf32, #tpu.memory_space<vmem>>, vector<4x8x32xf32>
      %c0_39 = arith.constant 0 : index
      %c0_40 = arith.constant 0 : index
      %c0_41 = arith.constant 0 : index
      %46 = vector.load %arg16[%c0_39, %c0_40, %c0_41] : memref<4x8x1xf32, #tpu.memory_space<vmem>>, vector<4x8x1xf32>
      %47 = tpu.reciprocal %46 {approx = true} : vector<4x8x1xf32> -> vector<4x8x1xf32>
      %48 = arith.mulf %46, %47 : vector<4x8x1xf32>
      %cst_42 = arith.constant 2.000000e+00 : f32
      %49 = vector.broadcast %cst_42 : f32 to vector<4x8x1xf32>
      %50 = arith.subf %49, %48 : vector<4x8x1xf32>
      %51 = arith.mulf %47, %50 : vector<4x8x1xf32>
      %52 = vector.broadcast %51 : vector<4x8x1xf32> to vector<4x8x32xf32>
      %53 = arith.mulf %45, %52 : vector<4x8x32xf32>
      %54 = tpu.transpose %53, [1, 0, 2] : vector<4x8x32xf32> -> vector<8x4x32xf32>
      %55 = vector.shape_cast %54 : vector<8x4x32xf32> to vector<8x128xf32>
      %c0_43 = arith.constant 0 : index
      %c0_44 = arith.constant 0 : index
      %56 = vector.load %arg9[%c0_43, %c0_44] : memref<128x128xf32, #tpu.memory_space<vmem>>, vector<128x128xf32>
      %cst_45 = arith.constant dense<0.000000e+00> : vector<8x128xf32>
      %57 = tpu.matmul %55, %56, %cst_45 {dimension_numbers = #tpu.dot_dimension_numbers<[1], [0], [0], [1], [0, 0, 1, 1], [], []>} : vector<8x128xf32>, vector<128x128xf32>, vector<8x128xf32> -> vector<8x128xf32>
      %c0_46 = arith.constant 0 : index
      %c0_47 = arith.constant 0 : index
      %58 = vector.load %arg10[%c0_46, %c0_47] : memref<1x128xf32, #tpu.memory_space<vmem>>, vector<1x128xf32>
      %59 = vector.broadcast %58 : vector<1x128xf32> to vector<8x128xf32>
      %60 = arith.addf %57, %59 : vector<8x128xf32>
      %61 = arith.addf %1, %60 : vector<8x128xf32>
      %c0_48 = arith.constant 0 : index
      %c0_49 = arith.constant 0 : index
      %62 = vector.load %arg11[%c0_48, %c0_49] : memref<1x128xf32, #tpu.memory_space<vmem>>, vector<1x128xf32>
      %c0_50 = arith.constant 0 : index
      %c0_51 = arith.constant 0 : index
      %63 = vector.load %arg12[%c0_50, %c0_51] : memref<1x128xf32, #tpu.memory_space<vmem>>, vector<1x128xf32>
      %cst_52 = arith.constant dense<0.000000e+00> : vector<8xf32>
      %64 = vector.multi_reduction <add>, %61, %cst_52 [1] : vector<8x128xf32> to vector<8xf32>
      %65 = vector.shape_cast %64 : vector<8xf32> to vector<8x1xf32>
      %cst_53 = arith.constant 1.280000e+02 : f32
      %66 = vector.broadcast %cst_53 : f32 to vector<8x1xf32>
      %67 = arith.divf %65, %66 : vector<8x1xf32>
      %68 = vector.broadcast %67 : vector<8x1xf32> to vector<8x128xf32>
      %69 = arith.subf %61, %68 : vector<8x128xf32>
      %70 = arith.mulf %69, %69 : vector<8x128xf32>
      %cst_54 = arith.constant dense<0.000000e+00> : vector<8xf32>
      %71 = vector.multi_reduction <add>, %70, %cst_54 [1] : vector<8x128xf32> to vector<8xf32>
      %72 = vector.shape_cast %71 : vector<8xf32> to vector<8x1xf32>
      %cst_55 = arith.constant 0.00787401571 : f32
      %73 = vector.broadcast %cst_55 : f32 to vector<8x1xf32>
      %74 = arith.mulf %72, %73 : vector<8x1xf32>
      %75 = math.sqrt %74 : vector<8x1xf32>
      %76 = vector.broadcast %62 : vector<1x128xf32> to vector<8x128xf32>
      %77 = arith.mulf %76, %69 : vector<8x128xf32>
      %cst_56 = arith.constant 9.99999974E-6 : f32
      %78 = vector.broadcast %cst_56 : f32 to vector<8x1xf32>
      %79 = arith.addf %75, %78 : vector<8x1xf32>
      %80 = tpu.reciprocal %79 {approx = true} : vector<8x1xf32> -> vector<8x1xf32>
      %81 = arith.mulf %79, %80 : vector<8x1xf32>
      %cst_57 = arith.constant 2.000000e+00 : f32
      %82 = vector.broadcast %cst_57 : f32 to vector<8x1xf32>
      %83 = arith.subf %82, %81 : vector<8x1xf32>
      %84 = arith.mulf %80, %83 : vector<8x1xf32>
      %85 = vector.broadcast %84 : vector<8x1xf32> to vector<8x128xf32>
      %86 = arith.mulf %77, %85 : vector<8x128xf32>
      %87 = vector.broadcast %63 : vector<1x128xf32> to vector<8x128xf32>
      %88 = arith.addf %86, %87 : vector<8x128xf32>
      %c0_58 = arith.constant 0 : index
      %c0_59 = arith.constant 0 : index
      %c0_60 = arith.constant 0 : index
      %89 = vector.load %arg13[%c0_58, %c0_59, %c0_60] : memref<1x8x128xf32, #tpu.memory_space<vmem>>, vector<1x8x128xf32>
      %90 = vector.shape_cast %89 : vector<1x8x128xf32> to vector<8x128xf32>
      %91 = vector.shape_cast %88 : vector<8x128xf32> to vector<1x8x128xf32>
      tpu.vector_store %arg13[%c0_58, %c0_59, %c0_60], %91 {strides = array<i32>} : memref<1x8x128xf32, #tpu.memory_space<vmem>>, vector<1x8x128xf32>,
    } else {
    }
    return
  }
  func.func @transform_0(%arg0: i32, %arg1: i32, %arg2: i32) -> (i32, i32, i32) {
    %c0_i32 = arith.constant 0 : i32
    %c0_i32_0 = arith.constant 0 : i32
    return %arg0, %arg1, %c0_i32 : i32, i32, i32
  }
  func.func @transform_1(%arg0: i32, %arg1: i32, %arg2: i32) -> (i32, i32, i32) {
    %c0_i32 = arith.constant 0 : i32
    %c0_i32_0 = arith.constant 0 : i32
    return %arg0, %arg2, %c0_i32 : i32, i32, i32
  }
  func.func @transform_2(%arg0: i32, %arg1: i32, %arg2: i32) -> (i32, i32) {
    %c0_i32 = arith.constant 0 : i32
    %c0_i32_0 = arith.constant 0 : i32
    %c0_i32_1 = arith.constant 0 : i32
    return %c0_i32, %c0_i32_0 : i32, i32
  }
  func.func @transform_3(%arg0: i32, %arg1: i32, %arg2: i32) -> (i32, i32) {
    %c0_i32 = arith.constant 0 : i32
    %c0_i32_0 = arith.constant 0 : i32
    %c0_i32_1 = arith.constant 0 : i32
    return %c0_i32, %c0_i32_0 : i32, i32
  }
  func.func @transform_4(%arg0: i32, %arg1: i32, %arg2: i32) -> (i32, i32) {
    %c0_i32 = arith.constant 0 : i32
    %c0_i32_0 = arith.constant 0 : i32
    %c0_i32_1 = arith.constant 0 : i32
    return %c0_i32, %c0_i32_0 : i32, i32
  }
  func.func @transform_5(%arg0: i32, %arg1: i32, %arg2: i32) -> (i32, i32) {
    %c0_i32 = arith.constant 0 : i32
    %c0_i32_0 = arith.constant 0 : i32
    %c0_i32_1 = arith.constant 0 : i32
    return %c0_i32, %c0_i32_0 : i32, i32
  }
  func.func @transform_6(%arg0: i32, %arg1: i32, %arg2: i32) -> (i32, i32) {
    %c0_i32 = arith.constant 0 : i32
    %c0_i32_0 = arith.constant 0 : i32
    %c0_i32_1 = arith.constant 0 : i32
    return %c0_i32, %c0_i32_0 : i32, i32
  }
  func.func @transform_7(%arg0: i32, %arg1: i32, %arg2: i32) -> (i32, i32) {
    %c0_i32 = arith.constant 0 : i32
    %c0_i32_0 = arith.constant 0 : i32
    %c0_i32_1 = arith.constant 0 : i32
    return %c0_i32, %c0_i32_0 : i32, i32
  }
  func.func @transform_8(%arg0: i32, %arg1: i32, %arg2: i32) -> (i32, i32) {
    %c0_i32 = arith.constant 0 : i32
    %c0_i32_0 = arith.constant 0 : i32
    %c0_i32_1 = arith.constant 0 : i32
    return %c0_i32, %c0_i32_0 : i32, i32
  }
  func.func @transform_9(%arg0: i32, %arg1: i32, %arg2: i32) -> (i32, i32) {
    %c0_i32 = arith.constant 0 : i32
    %c0_i32_0 = arith.constant 0 : i32
    %c0_i32_1 = arith.constant 0 : i32
    return %c0_i32, %c0_i32_0 : i32, i32
  }
  func.func @transform_10(%arg0: i32, %arg1: i32, %arg2: i32) -> (i32, i32, i32) {
    %c0_i32 = arith.constant 0 : i32
    %c0_i32_0 = arith.constant 0 : i32
    return %arg0, %arg1, %c0_i32 : i32, i32, i32
  }
}

module attributes {stable_mosaic.version = 11 : i64} {
  func.func @_mha_ln_kernel(%arg0: i32, %arg1: i32, %arg2: i32, %arg3: memref<1x8x128xf32, #tpu.memory_space<vmem>>, %arg4: memref<1x8x128xf32, #tpu.memory_space<vmem>>, %arg5: memref<128x128xf32, #tpu.memory_space<vmem>>, %arg6: memref<1x128xf32, #tpu.memory_space<vmem>>, %arg7: memref<128x256xf32, #tpu.memory_space<vmem>>, %arg8: memref<1x256xf32, #tpu.memory_space<vmem>>, %arg9: memref<128x128xf32, #tpu.memory_space<vmem>>, %arg10: memref<1x128xf32, #tpu.memory_space<vmem>>, %arg11: memref<1x128xf32, #tpu.memory_space<vmem>>, %arg12: memref<1x128xf32, #tpu.memory_space<vmem>>, %arg13: memref<1x8x128xf32, #tpu.memory_space<vmem>>, %arg14: memref<4x8x32xf32, #tpu.memory_space<vmem>>, %arg15: memref<4x8x1xf32, #tpu.memory_space<vmem>>, %arg16: memref<4x8x1xf32, #tpu.memory_space<vmem>>, %arg17: memref<4x8x32xf32, #tpu.memory_space<vmem>>) attributes {dimension_semantics = [#tpu.dimension_semantics<parallel>, #tpu.dimension_semantics<parallel>, #tpu.dimension_semantics<arbitrary>], iteration_bounds = array<i64: 2, 2, 2>, scalar_prefetch = 0 : i64, scratch_operands = 4 : i64, tpu.core_type = #tpu.core_type<tc>, window_params = [{transform_indices = @transform_0, window_bounds = array<i64: 1, 8, 128>}, {transform_indices = @transform_1, window_bounds = array<i64: 1, 8, 128>}, {pipeline_mode = #tpu.pipeline_mode<synchronous>, transform_indices = @transform_2, window_bounds = array<i64: 128, 128>}, {pipeline_mode = #tpu.pipeline_mode<synchronous>, transform_indices = @transform_3, window_bounds = array<i64: 1, 128>}, {pipeline_mode = #tpu.pipeline_mode<synchronous>, transform_indices = @transform_4, window_bounds = array<i64: 128, 256>}, {pipeline_mode = #tpu.pipeline_mode<synchronous>, transform_indices = @transform_5, window_bounds = array<i64: 1, 256>}, {pipeline_mode = #tpu.pipeline_mode<synchronous>, transform_indices = @transform_6, window_bounds = array<i64: 128, 128>}, {pipeline_mode = #tpu.pipeline_mode<synchronous>, transform_indices = @transform_7, window_bounds = array<i64: 1, 128>}, {pipeline_mode = #tpu.pipeline_mode<synchronous>, transform_indices = @transform_8, window_bounds = array<i64: 1, 128>}, {pipeline_mode = #tpu.pipeline_mode<synchronous>, transform_indices = @transform_9, window_bounds = array<i64: 1, 128>}, {transform_indices = @transform_10, window_bounds = array<i64: 1, 8, 128>}]} {
    %c0 = arith.constant 0 : index
    %c0_0 = arith.constant 0 : index
    %c0_1 = arith.constant 0 : index
    %0 = vector.load %arg3[%c0, %c0_0, %c0_1] : memref<1x8x128xf32, #tpu.memory_space<vmem>>, vector<1x8x128xf32>
    %1 = vector.shape_cast %0 : vector<1x8x128xf32> to vector<8x128xf32>
    %c0_i32 = arith.constant 0 : i32
    %2 = arith.cmpi eq, %arg2, %c0_i32 : i32
    %3 = arith.extui %2 : i1 to i32
    %c0_i32_2 = arith.constant 0 : i32
    %4 = arith.cmpi ne, %3, %c0_i32_2 : i32
    scf.if %4 {
      %cst_36 = arith.constant 0xFF800000 : f32
      %45 = vector.broadcast %cst_36 : f32 to vector<4x8x1xf32>
      %c0_37 = arith.constant 0 : index
      %c0_38 = arith.constant 0 : index
      %c0_39 = arith.constant 0 : index
      %46 = vector.load %arg15[%c0_37, %c0_38, %c0_39] : memref<4x8x1xf32, #tpu.memory_space<vmem>>, vector<4x8x1xf32>
      tpu.vector_store %arg15[%c0_37, %c0_38, %c0_39], %45 {strides = array<i32>} : memref<4x8x1xf32, #tpu.memory_space<vmem>>, vector<4x8x1xf32>,
      %cst_40 = arith.constant 0.000000e+00 : f32
      %47 = vector.broadcast %cst_40 : f32 to vector<4x8x1xf32>
      %c0_41 = arith.constant 0 : index
      %c0_42 = arith.constant 0 : index
      %c0_43 = arith.constant 0 : index
      %48 = vector.load %arg16[%c0_41, %c0_42, %c0_43] : memref<4x8x1xf32, #tpu.memory_space<vmem>>, vector<4x8x1xf32>
      tpu.vector_store %arg16[%c0_41, %c0_42, %c0_43], %47 {strides = array<i32>} : memref<4x8x1xf32, #tpu.memory_space<vmem>>, vector<4x8x1xf32>,
      %cst_44 = arith.constant 0.000000e+00 : f32
      %49 = vector.broadcast %cst_44 : f32 to vector<4x8x32xf32>
      %c0_45 = arith.constant 0 : index
      %c0_46 = arith.constant 0 : index
      %c0_47 = arith.constant 0 : index
      %50 = vector.load %arg17[%c0_45, %c0_46, %c0_47] : memref<4x8x32xf32, #tpu.memory_space<vmem>>, vector<4x8x32xf32>
      tpu.vector_store %arg17[%c0_45, %c0_46, %c0_47], %49 {strides = array<i32>} : memref<4x8x32xf32, #tpu.memory_space<vmem>>, vector<4x8x32xf32>,
      %c0_48 = arith.constant 0 : index
      %c0_49 = arith.constant 0 : index
      %51 = vector.load %arg5[%c0_48, %c0_49] : memref<128x128xf32, #tpu.memory_space<vmem>>, vector<128x128xf32>
      %cst_50 = arith.constant dense<0.000000e+00> : vector<8x128xf32>
      %52 = tpu.matmul %1, %51, %cst_50 {dimension_numbers = #tpu.dot_dimension_numbers<[1], [0], [0], [1], [0, 0, 1, 1], [], []>} : vector<8x128xf32>, vector<128x128xf32>, vector<8x128xf32> -> vector<8x128xf32>
      %c0_51 = arith.constant 0 : index
      %c0_52 = arith.constant 0 : index
      %53 = vector.load %arg6[%c0_51, %c0_52] : memref<1x128xf32, #tpu.memory_space<vmem>>, vector<1x128xf32>
      %54 = vector.broadcast %53 : vector<1x128xf32> to vector<8x128xf32>
      %55 = arith.addf %52, %54 : vector<8x128xf32>
      %cst_53 = arith.constant 0.176776692 : f32
      %56 = vector.broadcast %cst_53 : f32 to vector<8x128xf32>
      %57 = arith.mulf %55, %56 : vector<8x128xf32>
      %58 = vector.shape_cast %57 : vector<8x128xf32> to vector<8x4x32xf32>
      %59 = tpu.transpose %58, [1, 0, 2] : vector<8x4x32xf32> -> vector<4x8x32xf32>
      %c0_54 = arith.constant 0 : index
      %c0_55 = arith.constant 0 : index
      %c0_56 = arith.constant 0 : index
      %60 = vector.load %arg14[%c0_54, %c0_55, %c0_56] : memref<4x8x32xf32, #tpu.memory_space<vmem>>, vector<4x8x32xf32>
      tpu.vector_store %arg14[%c0_54, %c0_55, %c0_56], %59 {strides = array<i32>} : memref<4x8x32xf32, #tpu.memory_space<vmem>>, vector<4x8x32xf32>,
    } else {
    }
    %c0_3 = arith.constant 0 : index
    %c0_4 = arith.constant 0 : index
    %c0_5 = arith.constant 0 : index
    %5 = vector.load %arg4[%c0_3, %c0_4, %c0_5] : memref<1x8x128xf32, #tpu.memory_space<vmem>>, vector<1x8x128xf32>
    %6 = vector.shape_cast %5 : vector<1x8x128xf32> to vector<8x128xf32>
    %c0_6 = arith.constant 0 : index
    %c0_7 = arith.constant 0 : index
    %7 = vector.load %arg7[%c0_6, %c0_7] : memref<128x256xf32, #tpu.memory_space<vmem>>, vector<128x256xf32>
    %cst = arith.constant dense<0.000000e+00> : vector<8x256xf32>
    %8 = tpu.matmul %6, %7, %cst {dimension_numbers = #tpu.dot_dimension_numbers<[1], [0], [0], [1], [0, 0, 1, 1], [], []>} : vector<8x128xf32>, vector<128x256xf32>, vector<8x256xf32> -> vector<8x256xf32>
    %c0_8 = arith.constant 0 : index
    %c0_9 = arith.constant 0 : index
    %9 = vector.load %arg8[%c0_8, %c0_9] : memref<1x256xf32, #tpu.memory_space<vmem>>, vector<1x256xf32>
    %10 = vector.broadcast %9 : vector<1x256xf32> to vector<8x256xf32>
    %11 = arith.addf %8, %10 : vector<8x256xf32>
    %12 = vector.extract_strided_slice %11 {offsets = [0, 0], sizes = [8, 128], strides = [1, 1]} : vector<8x256xf32> to vector<8x128xf32>
    %13 = vector.shape_cast %12 : vector<8x128xf32> to vector<8x4x32xf32>
    %14 = tpu.transpose %13, [1, 0, 2] : vector<8x4x32xf32> -> vector<4x8x32xf32>
    %15 = vector.extract_strided_slice %11 {offsets = [0, 128], sizes = [8, 128], strides = [1, 1]} : vector<8x256xf32> to vector<8x128xf32>
    %16 = vector.shape_cast %15 : vector<8x128xf32> to vector<8x4x32xf32>
    %17 = tpu.transpose %16, [1, 0, 2] : vector<8x4x32xf32> -> vector<4x8x32xf32>
    %c0_10 = arith.constant 0 : index
    %c0_11 = arith.constant 0 : index
    %c0_12 = arith.constant 0 : index
    %18 = vector.load %arg14[%c0_10, %c0_11, %c0_12] : memref<4x8x32xf32, #tpu.memory_space<vmem>>, vector<4x8x32xf32>
    "tpu.trace_start"() <{level = 10 : i32, message = "hqd,hkd->hqk"}> : () -> ()
    %cst_13 = arith.constant dense<0.000000e+00> : vector<4x8x8xf32>
    %19 = tpu.matmul %18, %14, %cst_13 {dimension_numbers = #tpu.dot_dimension_numbers<[2], [2], [1], [1], [0, 0, 0, 1, 1, 1], [0], [0]>} : vector<4x8x32xf32>, vector<4x8x32xf32>, vector<4x8x8xf32> -> vector<4x8x8xf32>
    "tpu.trace_stop"() : () -> ()
    %c0_14 = arith.constant 0 : index
    %c0_15 = arith.constant 0 : index
    %c0_16 = arith.constant 0 : index
    %20 = vector.load %arg15[%c0_14, %c0_15, %c0_16] : memref<4x8x1xf32, #tpu.memory_space<vmem>>, vector<4x8x1xf32>
    %cst_17 = arith.constant dense<0xFF800000> : vector<4x8xf32>
    %21 = vector.multi_reduction <maximumf>, %19, %cst_17 [2] : vector<4x8x8xf32> to vector<4x8xf32>
    %22 = vector.shape_cast %21 : vector<4x8xf32> to vector<4x8x1xf32>
    %23 = arith.maximumf %20, %22 : vector<4x8x1xf32>
    %24 = arith.subf %20, %23 : vector<4x8x1xf32>
    %25 = math.exp %24 : vector<4x8x1xf32>
    %26 = vector.broadcast %23 : vector<4x8x1xf32> to vector<4x8x8xf32>
    %27 = arith.subf %19, %26 : vector<4x8x8xf32>
    %28 = math.exp %27 : vector<4x8x8xf32>
    %c0_18 = arith.constant 0 : index
    %c0_19 = arith.constant 0 : index
    %c0_20 = arith.constant 0 : index
    %29 = vector.load %arg16[%c0_18, %c0_19, %c0_20] : memref<4x8x1xf32, #tpu.memory_space<vmem>>, vector<4x8x1xf32>
    %30 = arith.mulf %25, %29 : vector<4x8x1xf32>
    %cst_21 = arith.constant dense<0.000000e+00> : vector<4x8xf32>
    %31 = vector.multi_reduction <add>, %28, %cst_21 [2] : vector<4x8x8xf32> to vector<4x8xf32>
    %32 = vector.shape_cast %31 : vector<4x8xf32> to vector<4x8x1xf32>
    %33 = arith.addf %30, %32 : vector<4x8x1xf32>
    %c0_22 = arith.constant 0 : index
    %c0_23 = arith.constant 0 : index
    %c0_24 = arith.constant 0 : index
    %34 = vector.load %arg16[%c0_22, %c0_23, %c0_24] : memref<4x8x1xf32, #tpu.memory_space<vmem>>, vector<4x8x1xf32>
    tpu.vector_store %arg16[%c0_22, %c0_23, %c0_24], %33 {strides = array<i32>} : memref<4x8x1xf32, #tpu.memory_space<vmem>>, vector<4x8x1xf32>,
    %c0_25 = arith.constant 0 : index
    %c0_26 = arith.constant 0 : index
    %c0_27 = arith.constant 0 : index
    %35 = vector.load %arg17[%c0_25, %c0_26, %c0_27] : memref<4x8x32xf32, #tpu.memory_space<vmem>>, vector<4x8x32xf32>
    %36 = vector.broadcast %25 : vector<4x8x1xf32> to vector<4x8x32xf32>
    %37 = arith.mulf %36, %35 : vector<4x8x32xf32>
    "tpu.trace_start"() <{level = 10 : i32, message = "hqk,hkd->hqd"}> : () -> ()
    %cst_28 = arith.constant dense<0.000000e+00> : vector<4x8x32xf32>
    %38 = tpu.matmul %28, %17, %cst_28 {dimension_numbers = #tpu.dot_dimension_numbers<[2], [1], [1], [2], [0, 0, 0, 1, 1, 2], [0], [0]>} : vector<4x8x8xf32>, vector<4x8x32xf32>, vector<4x8x32xf32> -> vector<4x8x32xf32>
    "tpu.trace_stop"() : () -> ()
    %39 = arith.addf %37, %38 : vector<4x8x32xf32>
    %c0_29 = arith.constant 0 : index
    %c0_30 = arith.constant 0 : index
    %c0_31 = arith.constant 0 : index
    %40 = vector.load %arg17[%c0_29, %c0_30, %c0_31] : memref<4x8x32xf32, #tpu.memory_space<vmem>>, vector<4x8x32xf32>
    tpu.vector_store %arg17[%c0_29, %c0_30, %c0_31], %39 {strides = array<i32>} : memref<4x8x32xf32, #tpu.memory_space<vmem>>, vector<4x8x32xf32>,
    %c0_32 = arith.constant 0 : index
    %c0_33 = arith.constant 0 : index
    %c0_34 = arith.constant 0 : index
    %41 = vector.load %arg15[%c0_32, %c0_33, %c0_34] : memref<4x8x1xf32, #tpu.memory_space<vmem>>, vector<4x8x1xf32>
    tpu.vector_store %arg15[%c0_32, %c0_33, %c0_34], %23 {strides = array<i32>} : memref<4x8x1xf32, #tpu.memory_space<vmem>>, vector<4x8x1xf32>,
    %c1_i32 = arith.constant 1 : i32
    %42 = arith.cmpi eq, %arg2, %c1_i32 : i32
    %43 = arith.extui %42 : i1 to i32
    %c0_i32_35 = arith.constant 0 : i32
    %44 = arith.cmpi ne, %43, %c0_i32_35 : i32
    scf.if %44 {
      %c0_36 = arith.constant 0 : index
      %c0_37 = arith.constant 0 : index
      %c0_38 = arith.constant 0 : index
      %45 = vector.load %arg17[%c0_36, %c0_37, %c0_38] : memref<4x8x32xf32, #tpu.memory_space<vmem>>, vector<4x8x32xf32>
      %c0_39 = arith.constant 0 : index
      %c0_40 = arith.constant 0 : index
      %c0_41 = arith.constant 0 : index
      %46 = vector.load %arg16[%c0_39, %c0_40, %c0_41] : memref<4x8x1xf32, #tpu.memory_space<vmem>>, vector<4x8x1xf32>
      %47 = tpu.reciprocal %46 {approx = true} : vector<4x8x1xf32> -> vector<4x8x1xf32>
      %48 = arith.mulf %46, %47 : vector<4x8x1xf32>
      %cst_42 = arith.constant 2.000000e+00 : f32
      %49 = vector.broadcast %cst_42 : f32 to vector<4x8x1xf32>
      %50 = arith.subf %49, %48 : vector<4x8x1xf32>
      %51 = arith.mulf %47, %50 : vector<4x8x1xf32>
      %52 = vector.broadcast %51 : vector<4x8x1xf32> to vector<4x8x32xf32>
      %53 = arith.mulf %45, %52 : vector<4x8x32xf32>
      %54 = tpu.transpose %53, [1, 0, 2] : vector<4x8x32xf32> -> vector<8x4x32xf32>
      %55 = vector.shape_cast %54 : vector<8x4x32xf32> to vector<8x128xf32>
      %c0_43 = arith.constant 0 : index
      %c0_44 = arith.constant 0 : index
      %56 = vector.load %arg9[%c0_43, %c0_44] : memref<128x128xf32, #tpu.memory_space<vmem>>, vector<128x128xf32>
      %cst_45 = arith.constant dense<0.000000e+00> : vector<8x128xf32>
      %57 = tpu.matmul %55, %56, %cst_45 {dimension_numbers = #tpu.dot_dimension_numbers<[1], [0], [0], [1], [0, 0, 1, 1], [], []>} : vector<8x128xf32>, vector<128x128xf32>, vector<8x128xf32> -> vector<8x128xf32>
      %c0_46 = arith.constant 0 : index
      %c0_47 = arith.constant 0 : index
      %58 = vector.load %arg10[%c0_46, %c0_47] : memref<1x128xf32, #tpu.memory_space<vmem>>, vector<1x128xf32>
      %59 = vector.broadcast %58 : vector<1x128xf32> to vector<8x128xf32>
      %60 = arith.addf %57, %59 : vector<8x128xf32>
      %61 = arith.addf %1, %60 : vector<8x128xf32>
      %c0_48 = arith.constant 0 : index
      %c0_49 = arith.constant 0 : index
      %62 = vector.load %arg11[%c0_48, %c0_49] : memref<1x128xf32, #tpu.memory_space<vmem>>, vector<1x128xf32>
      %c0_50 = arith.constant 0 : index
      %c0_51 = arith.constant 0 : index
      %63 = vector.load %arg12[%c0_50, %c0_51] : memref<1x128xf32, #tpu.memory_space<vmem>>, vector<1x128xf32>
      %cst_52 = arith.constant dense<0.000000e+00> : vector<8xf32>
      %64 = vector.multi_reduction <add>, %61, %cst_52 [1] : vector<8x128xf32> to vector<8xf32>
      %65 = vector.shape_cast %64 : vector<8xf32> to vector<8x1xf32>
      %cst_53 = arith.constant 1.280000e+02 : f32
      %66 = vector.broadcast %cst_53 : f32 to vector<8x1xf32>
      %67 = arith.divf %65, %66 : vector<8x1xf32>
      %68 = vector.broadcast %67 : vector<8x1xf32> to vector<8x128xf32>
      %69 = arith.subf %61, %68 : vector<8x128xf32>
      %70 = arith.mulf %69, %69 : vector<8x128xf32>
      %cst_54 = arith.constant dense<0.000000e+00> : vector<8xf32>
      %71 = vector.multi_reduction <add>, %70, %cst_54 [1] : vector<8x128xf32> to vector<8xf32>
      %72 = vector.shape_cast %71 : vector<8xf32> to vector<8x1xf32>
      %cst_55 = arith.constant 0.00787401571 : f32
      %73 = vector.broadcast %cst_55 : f32 to vector<8x1xf32>
      %74 = arith.mulf %72, %73 : vector<8x1xf32>
      %75 = math.sqrt %74 : vector<8x1xf32>
      %76 = vector.broadcast %62 : vector<1x128xf32> to vector<8x128xf32>
      %77 = arith.mulf %76, %69 : vector<8x128xf32>
      %cst_56 = arith.constant 9.99999974E-6 : f32
      %78 = vector.broadcast %cst_56 : f32 to vector<8x1xf32>
      %79 = arith.addf %75, %78 : vector<8x1xf32>
      %80 = tpu.reciprocal %79 {approx = true} : vector<8x1xf32> -> vector<8x1xf32>
      %81 = arith.mulf %79, %80 : vector<8x1xf32>
      %cst_57 = arith.constant 2.000000e+00 : f32
      %82 = vector.broadcast %cst_57 : f32 to vector<8x1xf32>
      %83 = arith.subf %82, %81 : vector<8x1xf32>
      %84 = arith.mulf %80, %83 : vector<8x1xf32>
      %85 = vector.broadcast %84 : vector<8x1xf32> to vector<8x128xf32>
      %86 = arith.mulf %77, %85 : vector<8x128xf32>
      %87 = vector.broadcast %63 : vector<1x128xf32> to vector<8x128xf32>
      %88 = arith.addf %86, %87 : vector<8x128xf32>
      %c0_58 = arith.constant 0 : index
      %c0_59 = arith.constant 0 : index
      %c0_60 = arith.constant 0 : index
      %89 = vector.load %arg13[%c0_58, %c0_59, %c0_60] : memref<1x8x128xf32, #tpu.memory_space<vmem>>, vector<1x8x128xf32>
      %90 = vector.shape_cast %89 : vector<1x8x128xf32> to vector<8x128xf32>
      %91 = vector.shape_cast %88 : vector<8x128xf32> to vector<1x8x128xf32>
      tpu.vector_store %arg13[%c0_58, %c0_59, %c0_60], %91 {strides = array<i32>} : memref<1x8x128xf32, #tpu.memory_space<vmem>>, vector<1x8x128xf32>,
    } else {
    }
    return
  }
  func.func @transform_0(%arg0: i32, %arg1: i32, %arg2: i32) -> (i32, i32, i32) {
    %c0_i32 = arith.constant 0 : i32
    %c0_i32_0 = arith.constant 0 : i32
    return %arg0, %arg1, %c0_i32 : i32, i32, i32
  }
  func.func @transform_1(%arg0: i32, %arg1: i32, %arg2: i32) -> (i32, i32, i32) {
    %c0_i32 = arith.constant 0 : i32
    %c0_i32_0 = arith.constant 0 : i32
    return %arg0, %arg2, %c0_i32 : i32, i32, i32
  }
  func.func @transform_2(%arg0: i32, %arg1: i32, %arg2: i32) -> (i32, i32) {
    %c0_i32 = arith.constant 0 : i32
    %c0_i32_0 = arith.constant 0 : i32
    %c0_i32_1 = arith.constant 0 : i32
    return %c0_i32, %c0_i32_0 : i32, i32
  }
  func.func @transform_3(%arg0: i32, %arg1: i32, %arg2: i32) -> (i32, i32) {
    %c0_i32 = arith.constant 0 : i32
    %c0_i32_0 = arith.constant 0 : i32
    %c0_i32_1 = arith.constant 0 : i32
    return %c0_i32, %c0_i32_0 : i32, i32
  }
  func.func @transform_4(%arg0: i32, %arg1: i32, %arg2: i32) -> (i32, i32) {
    %c0_i32 = arith.constant 0 : i32
    %c0_i32_0 = arith.constant 0 : i32
    %c0_i32_1 = arith.constant 0 : i32
    return %c0_i32, %c0_i32_0 : i32, i32
  }
  func.func @transform_5(%arg0: i32, %arg1: i32, %arg2: i32) -> (i32, i32) {
    %c0_i32 = arith.constant 0 : i32
    %c0_i32_0 = arith.constant 0 : i32
    %c0_i32_1 = arith.constant 0 : i32
    return %c0_i32, %c0_i32_0 : i32, i32
  }
  func.func @transform_6(%arg0: i32, %arg1: i32, %arg2: i32) -> (i32, i32) {
    %c0_i32 = arith.constant 0 : i32
    %c0_i32_0 = arith.constant 0 : i32
    %c0_i32_1 = arith.constant 0 : i32
    return %c0_i32, %c0_i32_0 : i32, i32
  }
  func.func @transform_7(%arg0: i32, %arg1: i32, %arg2: i32) -> (i32, i32) {
    %c0_i32 = arith.constant 0 : i32
    %c0_i32_0 = arith.constant 0 : i32
    %c0_i32_1 = arith.constant 0 : i32
    return %c0_i32, %c0_i32_0 : i32, i32
  }
  func.func @transform_8(%arg0: i32, %arg1: i32, %arg2: i32) -> (i32, i32) {
    %c0_i32 = arith.constant 0 : i32
    %c0_i32_0 = arith.constant 0 : i32
    %c0_i32_1 = arith.constant 0 : i32
    return %c0_i32, %c0_i32_0 : i32, i32
  }
  func.func @transform_9(%arg0: i32, %arg1: i32, %arg2: i32) -> (i32, i32) {
    %c0_i32 = arith.constant 0 : i32
    %c0_i32_0 = arith.constant 0 : i32
    %c0_i32_1 = arith.constant 0 : i32
    return %c0_i32, %c0_i32_0 : i32, i32
  }
  func.func @transform_10(%arg0: i32, %arg1: i32, %arg2: i32) -> (i32, i32, i32) {
    %c0_i32 = arith.constant 0 : i32
    %c0_i32_0 = arith.constant 0 : i32
    return %arg0, %arg1, %c0_i32 : i32, i32, i32
  }
}

</mosaic_0001>

<llo_original>
// kernel: _lambda_.5
$region0: #{_lambda_.5}
  #allocation0 [shape = 'u32[]', space=smem, size = 0x4, offset = 0x4, fixed_abs, tag = 'smem constant byte address 0x4 - core index']
  #allocation1 [shape = 'u32[144,128]{1,0:T(1,128)}', space=vmem, size = 0x12000, scoped, tag = 'internal scratch']
  %s0 = inlined_call_operand.vmem [shape: f32[32,128], index: 0, kind: input, shape index: {}]
  %s1 = inlined_call_operand.vmem [shape: f32[128,256], index: 1, kind: input, shape index: {}]
  %s2 = inlined_call_operand.vmem [shape: f32[1,256], index: 2, kind: input, shape index: {}]
  %s3 = inlined_call_operand.vmem [shape: f32[256,128], index: 3, kind: input, shape index: {}]
  %s4 = inlined_call_operand.vmem [shape: f32[1,128], index: 4, kind: input, shape index: {}]
  %s5 = inlined_call_operand.vmem [shape: f32[1,128], index: 5, kind: input, shape index: {}]
  %s6 = inlined_call_operand.vmem [shape: f32[1,128], index: 6, kind: input, shape index: {}]
  %s7 = inlined_call_operand.hbm [shape: f32[32,128], index: 7, kind: output, shape index: {}]
  %s8 = sld [smem:[#allocation0]]
  $region61: #{_lambda_.5} parent=0
    _
  %s10 = ssub.s32 1, %s8
  %s11 = scalar_select 0, %s10, %s8
  $region1: #{_lambda_.5} parent=0
    #allocation2 [shape = 'u8[16384]{0}', space=vmem, size = 0x4000, scoped, tag = 'output window, operand 0']
    #allocation3 [shape = 's32[2]{0}', space=sflag, size = 0x8, scoped, tag = 'scoped memory for _lambda_.5']
    %12 = vsyncpa [#allocation3], 0
    %s13 = scalar_lea.sflag [#allocation3], 1
    %14 = vsyncpa %s13, 0
    loop: start=0, step=1, limit=4
    $region2: #{_lambda_.5} parent=1 // loop_pre_header
      _
    $region3: #{_lambda_.5} parent=1 // loop_header
      %s16 = sphi 0, %s20
      %p17 = scmp.ge.s32.totalorder %s16, 4
      %s26 = sphi 0, %s28
      %s29 = sphi 0, %s26
      %s30 = sphi 0, %s29
      %s46 = sphi 0, %s30
      %s50 = sphi 0, %s50
      %s52 = sphi 0, %s50
      %s53 = sphi 0, %s52
      %s67 = sphi 0, %s53
      %s71 = sphi 0, %s71
      %s73 = sphi 0, %s71
      %s74 = sphi 0, %s73
      %s88 = sphi 0, %s74
      %s92 = sphi 0, %s92
      %s94 = sphi 0, %s92
      %s95 = sphi 0, %s94
      %s109 = sphi 0, %s95
      %s113 = sphi 0, %s113
      %s115 = sphi 0, %s113
      %s116 = sphi 0, %s115
      %s130 = sphi 0, %s116
      %s134 = sphi 0, %s134
      %s136 = sphi 0, %s134
      %s137 = sphi 0, %s136
      %s151 = sphi 0, %s137
      %s155 = sphi 0, %s155
      %s157 = sphi 0, %s155
      %s158 = sphi 0, %s157
      %s172 = sphi 0, %s158
      %s178 = sphi 0, %s180
      %s181 = sphi 0, %s178
      %s182 = sphi 0, %s181
      %s198 = sphi 0, %s182
    $region4: #{_lambda_.5} parent=1 // loop_header_branch
      %19 = sbr.rel (%p17) target = $region8
    $region5: #{_lambda_.5} parent=1 // loop_body
      %s21 = ssub.s32 %s16, 1
      %s22 = ssub.s32 %s16, 2
      %s23 = sadd.s32 %s16, 1
      %s24 = ssub.s32 %s16, %s23
      %p25 = scmp.eq.s32.totalorder %s24, 0
      %s27 = sadd.s32 %s26, 1
      %s28 = scalar_select %p25, %s26, %s27
      %p31 = pneg %p25
      %p32 = scmp.eq.s32.totalorder %s16, 1
      %p33 = por %p31, %p32
      %p34 = scmp.ne.s32.totalorder %s26, %s29
      %p35 = scmp.eq.s32.totalorder %s16, 0
      %p36 = por %p34, %p35
      %p37 = scmp.ne.s32.totalorder %s26, %s29
      %p38 = scmp.eq.s32.totalorder %s21, 1
      %p39 = por %p37, %p38
      %p40 = scmp.ne.s32.totalorder %s29, %s30
      %p41 = scmp.eq.s32.totalorder %s21, 0
      %p42 = por %p40, %p41
      %p43 = scmp.ne.s32.totalorder %s29, %s30
      %p44 = scmp.eq.s32.totalorder %s22, 1
      %p45 = por %p43, %p44
      %p47 = scmp.ne.s32.totalorder %s30, %s46
      %p48 = scmp.eq.s32.totalorder %s22, 0
      %p49 = por %p47, %p48
      %s51 = sadd.s32 %s50, 1
      %p54 = scmp.eq.s32.totalorder %s16, 1
      %p55 = scmp.ne.s32.totalorder %s50, %s52
      %p56 = scmp.eq.s32.totalorder %s16, 0
      %p57 = por %p55, %p56
      %p58 = scmp.ne.s32.totalorder %s50, %s52
      %p59 = scmp.eq.s32.totalorder %s21, 1
      %p60 = por %p58, %p59
      %p61 = scmp.ne.s32.totalorder %s52, %s53
      %p62 = scmp.eq.s32.totalorder %s21, 0
      %p63 = por %p61, %p62
      %p64 = scmp.ne.s32.totalorder %s52, %s53
      %p65 = scmp.eq.s32.totalorder %s22, 1
      %p66 = por %p64, %p65
      %p68 = scmp.ne.s32.totalorder %s53, %s67
      %p69 = scmp.eq.s32.totalorder %s22, 0
      %p70 = por %p68, %p69
      %s72 = sadd.s32 %s71, 1
      %p75 = scmp.eq.s32.totalorder %s16, 1
      %p76 = scmp.ne.s32.totalorder %s71, %s73
      %p77 = scmp.eq.s32.totalorder %s16, 0
      %p78 = por %p76, %p77
      %p79 = scmp.ne.s32.totalorder %s71, %s73
      %p80 = scmp.eq.s32.totalorder %s21, 1
      %p81 = por %p79, %p80
      %p82 = scmp.ne.s32.totalorder %s73, %s74
      %p83 = scmp.eq.s32.totalorder %s21, 0
      %p84 = por %p82, %p83
      %p85 = scmp.ne.s32.totalorder %s73, %s74
      %p86 = scmp.eq.s32.totalorder %s22, 1
      %p87 = por %p85, %p86
      %p89 = scmp.ne.s32.totalorder %s74, %s88
      %p90 = scmp.eq.s32.totalorder %s22, 0
      %p91 = por %p89, %p90
      %s93 = sadd.s32 %s92, 1
      %p96 = scmp.eq.s32.totalorder %s16, 1
      %p97 = scmp.ne.s32.totalorder %s92, %s94
      %p98 = scmp.eq.s32.totalorder %s16, 0
      %p99 = por %p97, %p98
      %p100 = scmp.ne.s32.totalorder %s92, %s94
      %p101 = scmp.eq.s32.totalorder %s21, 1
      %p102 = por %p100, %p101
      %p103 = scmp.ne.s32.totalorder %s94, %s95
      %p104 = scmp.eq.s32.totalorder %s21, 0
      %p105 = por %p103, %p104
      %p106 = scmp.ne.s32.totalorder %s94, %s95
      %p107 = scmp.eq.s32.totalorder %s22, 1
      %p108 = por %p106, %p107
      %p110 = scmp.ne.s32.totalorder %s95, %s109
      %p111 = scmp.eq.s32.totalorder %s22, 0
      %p112 = por %p110, %p111
      %s114 = sadd.s32 %s113, 1
      %p117 = scmp.eq.s32.totalorder %s16, 1
      %p118 = scmp.ne.s32.totalorder %s113, %s115
      %p119 = scmp.eq.s32.totalorder %s16, 0
      %p120 = por %p118, %p119
      %p121 = scmp.ne.s32.totalorder %s113, %s115
      %p122 = scmp.eq.s32.totalorder %s21, 1
      %p123 = por %p121, %p122
      %p124 = scmp.ne.s32.totalorder %s115, %s116
      %p125 = scmp.eq.s32.totalorder %s21, 0
      %p126 = por %p124, %p125
      %p127 = scmp.ne.s32.totalorder %s115, %s116
      %p128 = scmp.eq.s32.totalorder %s22, 1
      %p129 = por %p127, %p128
      %p131 = scmp.ne.s32.totalorder %s116, %s130
      %p132 = scmp.eq.s32.totalorder %s22, 0
      %p133 = por %p131, %p132
      %s135 = sadd.s32 %s134, 1
      %p138 = scmp.eq.s32.totalorder %s16, 1
      %p139 = scmp.ne.s32.totalorder %s134, %s136
      %p140 = scmp.eq.s32.totalorder %s16, 0
      %p141 = por %p139, %p140
      %p142 = scmp.ne.s32.totalorder %s134, %s136
      %p143 = scmp.eq.s32.totalorder %s21, 1
      %p144 = por %p142, %p143
      %p145 = scmp.ne.s32.totalorder %s136, %s137
      %p146 = scmp.eq.s32.totalorder %s21, 0
      %p147 = por %p145, %p146
      %p148 = scmp.ne.s32.totalorder %s136, %s137
      %p149 = scmp.eq.s32.totalorder %s22, 1
      %p150 = por %p148, %p149
      %p152 = scmp.ne.s32.totalorder %s137, %s151
      %p153 = scmp.eq.s32.totalorder %s22, 0
      %p154 = por %p152, %p153
      %s156 = sadd.s32 %s155, 1
      %p159 = scmp.eq.s32.totalorder %s16, 1
      %p160 = scmp.ne.s32.totalorder %s155, %s157
      %p161 = scmp.eq.s32.totalorder %s16, 0
      %p162 = por %p160, %p161
      %p163 = scmp.ne.s32.totalorder %s155, %s157
      %p164 = scmp.eq.s32.totalorder %s21, 1
      %p165 = por %p163, %p164
      %p166 = scmp.ne.s32.totalorder %s157, %s158
      %p167 = scmp.eq.s32.totalorder %s21, 0
      %p168 = por %p166, %p167
      %p169 = scmp.ne.s32.totalorder %s157, %s158
      %p170 = scmp.eq.s32.totalorder %s22, 1
      %p171 = por %p169, %p170
      %p173 = scmp.ne.s32.totalorder %s158, %s172
      %p174 = scmp.eq.s32.totalorder %s22, 0
      %p175 = por %p173, %p174
      %s176 = ssub.s32 %s16, %s23
      %p177 = scmp.eq.s32.totalorder %s176, 0
      %s179 = sadd.s32 %s178, 1
      %s180 = scalar_select %p177, %s178, %s179
      %p183 = pneg %p177
      %p184 = scmp.eq.s32.totalorder %s16, 1
      %p185 = por %p183, %p184
      %p186 = scmp.ne.s32.totalorder %s178, %s181
      %p187 = scmp.eq.s32.totalorder %s16, 0
      %p188 = por %p186, %p187
      %p189 = scmp.ne.s32.totalorder %s178, %s181
      %p190 = scmp.eq.s32.totalorder %s21, 1
      %p191 = por %p189, %p190
      %p192 = scmp.ne.s32.totalorder %s181, %s182
      %p193 = scmp.eq.s32.totalorder %s21, 0
      %p194 = por %p192, %p193
      %p195 = scmp.ne.s32.totalorder %s181, %s182
      %p196 = scmp.eq.s32.totalorder %s22, 1
      %p197 = por %p195, %p196
      %p199 = scmp.ne.s32.totalorder %s182, %s198
      %p200 = scmp.eq.s32.totalorder %s22, 0
      %p201 = por %p199, %p200
      %p202 = scmp.le.s32.totalorder 1, %s16
      %p203 = scmp.lt.s32.totalorder %s16, 3
      %p204 = pnand %p202, %p203
      %p205 = pneg %p204
      // Predicated region
      $region9: #{_lambda_.5} parent=5 // pred_check
        _
      $region10: #{_lambda_.5} parent=5 // pred_check_branch
        %207 = sbr.rel (%p204) target = $region12
      $region11: #{_lambda_.5} parent=5 // pred_region
        %s208 = ssub.s32 %s16, 1
        // Predicated region
        $region13: #{_lambda_.5} parent=11 // pred_check
          %p209 = pneg %p63
        $region14: #{_lambda_.5} parent=11 // pred_check_branch
          %211 = sbr.rel (%p209) target = $region16
        $region15: #{_lambda_.5} parent=11 // pred_region
          _
        $region16: #{_lambda_.5} parent=11 // pred_fallthru
          _
        // Predicated region
        $region17: #{_lambda_.5} parent=11 // pred_check
          %p212 = pneg %p84
        $region18: #{_lambda_.5} parent=11 // pred_check_branch
          %214 = sbr.rel (%p212) target = $region20
        $region19: #{_lambda_.5} parent=11 // pred_region
          _
        $region20: #{_lambda_.5} parent=11 // pred_fallthru
          _
        // Predicated region
        $region21: #{_lambda_.5} parent=11 // pred_check
          %p215 = pneg %p105
        $region22: #{_lambda_.5} parent=11 // pred_check_branch
          %217 = sbr.rel (%p215) target = $region24
        $region23: #{_lambda_.5} parent=11 // pred_region
          _
        $region24: #{_lambda_.5} parent=11 // pred_fallthru
          _
        // Predicated region
        $region25: #{_lambda_.5} parent=11 // pred_check
          %p218 = pneg %p126
        $region26: #{_lambda_.5} parent=11 // pred_check_branch
          %220 = sbr.rel (%p218) target = $region28
        $region27: #{_lambda_.5} parent=11 // pred_region
          _
        $region28: #{_lambda_.5} parent=11 // pred_fallthru
          _
        // Predicated region
        $region29: #{_lambda_.5} parent=11 // pred_check
          %p221 = pneg %p147
        $region30: #{_lambda_.5} parent=11 // pred_check_branch
          %223 = sbr.rel (%p221) target = $region32
        $region31: #{_lambda_.5} parent=11 // pred_region
          _
        $region32: #{_lambda_.5} parent=11 // pred_fallthru
          _
        // Predicated region
        $region33: #{_lambda_.5} parent=11 // pred_check
          %p224 = pneg %p168
        $region34: #{_lambda_.5} parent=11 // pred_check_branch
          %226 = sbr.rel (%p224) target = $region36
        $region35: #{_lambda_.5} parent=11 // pred_region
          _
        $region36: #{_lambda_.5} parent=11 // pred_fallthru
          _
      $region12: #{_lambda_.5} parent=5 // pred_fallthru
        _
      %p227 = scmp.lt.s32.totalorder %s16, 2
      // Predicated region
      $region37: #{_lambda_.5} parent=5 // pred_check
        %p228 = pneg %p227
      $region38: #{_lambda_.5} parent=5 // pred_check_branch
        %230 = sbr.rel (%p228) target = $region40
      $region39: #{_lambda_.5} parent=5 // pred_region
        // Predicated region
        $region41: #{_lambda_.5} parent=39 // pred_check
          %p231 = pneg %p36
        $region42: #{_lambda_.5} parent=39 // pred_check_branch
          %233 = sbr.rel (%p231) target = $region44
        $region43: #{_lambda_.5} parent=39 // pred_region
          %s234 = smul.u32 2, %s16
          %p235 = scmp.lt.s32.totalorder %s234, 3
          %s236 = scalar_select %p235, %s234, 3
          %s237 = smul.addr %s236, 8
          %s238 = scalar_lea.vmem %s0, %s237
          %s239 = smul.u32 2, %s16
        $region44: #{_lambda_.5} parent=39 // pred_fallthru
          _
      $region40: #{_lambda_.5} parent=5 // pred_fallthru
        _
      %p240 = scmp.le.s32.totalorder 1, %s16
      %p241 = scmp.lt.s32.totalorder %s16, 3
      %p242 = pnand %p240, %p241
      %p243 = pneg %p242
      // Predicated region
      $region45: #{_lambda_.5} parent=5 // pred_check
        _
      $region46: #{_lambda_.5} parent=5 // pred_check_branch
        %245 = sbr.rel (%p242) target = $region48
      $region47: #{_lambda_.5} parent=5 // pred_region
        %s246 = ssub.s32 %s16, 1
        %s247 = smul.u32 2, %s21
        %p248 = scmp.lt.s32.totalorder %s247, 3
        %s249 = scalar_select %p248, %s247, 3
        %s250 = smul.addr %s249, 8
        %s251 = scalar_lea.vmem %s0, %s250
        %p252 = pneg %p42
        %p253 = pneg %p39
        %p254 = pneg %p63
        %p255 = pneg %p60
        %p256 = pneg %p84
        %p257 = pneg %p81
        %p258 = pneg %p105
        %p259 = pneg %p102
        %p260 = pneg %p126
        %p261 = pneg %p123
        %p262 = pneg %p147
        %p263 = pneg %p144
        %p264 = pneg %p168
        %p265 = pneg %p165
        %p266 = pneg %p194
        %p267 = pneg %p191
        %s268 = sand.u32 %s181, 1
        %s269 = scalar_lea.sflag [#allocation3], %s268
        %s270 = sand.u32 %s181, 1
        %s271 = smul.addr %s270, 16
        %s272 = scalar_lea.vmem [#allocation2], %s271
        %s273 = smul.u32 2, %s21
        %p274 = scmp.lt.s32.totalorder %s273, 3
        %s275 = scalar_select %p274, %s273, 3
        %s276 = smul.addr %s275, 8
        %s277 = scalar_lea.vmem %s0, %s276
        %s278 = smul.u32 2, %s21
        %s279 = smul.u32 2, %s21
        %v280 = vld [vmem:[%s277] sm:$0xff]
        %v281 = vld [vmem:[%s277 + $0x8] sm:$0xff]
        %v282 = vld [vmem:[%s1] sm:$0xff]
        %v283 = vld [vmem:[%s1 + $0x8] sm:$0xff]
        %v284 = vld [vmem:[%s1 + $0x10] sm:$0xff]
        %v285 = vld [vmem:[%s1 + $0x18] sm:$0xff]
        %v286 = vld [vmem:[%s1 + $0x20] sm:$0xff]
        %v287 = vld [vmem:[%s1 + $0x28] sm:$0xff]
        %v288 = vld [vmem:[%s1 + $0x30] sm:$0xff]
        %v289 = vld [vmem:[%s1 + $0x38] sm:$0xff]
        %v290 = vld [vmem:[%s1 + $0x40] sm:$0xff]
        %v291 = vld [vmem:[%s1 + $0x48] sm:$0xff]
        %v292 = vld [vmem:[%s1 + $0x50] sm:$0xff]
        %v293 = vld [vmem:[%s1 + $0x58] sm:$0xff]
        %v294 = vld [vmem:[%s1 + $0x60] sm:$0xff]
        %v295 = vld [vmem:[%s1 + $0x68] sm:$0xff]
        %v296 = vld [vmem:[%s1 + $0x70] sm:$0xff]
        %v297 = vld [vmem:[%s1 + $0x78] sm:$0xff]
        %v298 = vld [vmem:[%s1 + $0x80] sm:$0xff]
        %v299 = vld [vmem:[%s1 + $0x88] sm:$0xff]
        %v300 = vld [vmem:[%s1 + $0x90] sm:$0xff]
        %v301 = vld [vmem:[%s1 + $0x98] sm:$0xff]
        %v302 = vld [vmem:[%s1 + $0xa0] sm:$0xff]
        %v303 = vld [vmem:[%s1 + $0xa8] sm:$0xff]
        %v304 = vld [vmem:[%s1 + $0xb0] sm:$0xff]
        %v305 = vld [vmem:[%s1 + $0xb8] sm:$0xff]
        %v306 = vld [vmem:[%s1 + $0xc0] sm:$0xff]
        %v307 = vld [vmem:[%s1 + $0xc8] sm:$0xff]
        %v308 = vld [vmem:[%s1 + $0xd0] sm:$0xff]
        %v309 = vld [vmem:[%s1 + $0xd8] sm:$0xff]
        %v310 = vld [vmem:[%s1 + $0xe0] sm:$0xff]
        %v311 = vld [vmem:[%s1 + $0xe8] sm:$0xff]
        %v312 = vld [vmem:[%s1 + $0xf0] sm:$0xff]
        %v313 = vld [vmem:[%s1 + $0xf8] sm:$0xff]
        %v314 = vld [vmem:[%s2] sm:$0x3]
        %v316 = vlaneseq
        %v317 = vshrl.u32 %v316, 7
        %v318 = vsub.s32 0, %v317
        %v319 = vrot.slane %v314, %v318
        %v320 = vlaneseq
        %v321 = vshrl.u32 %v320, 7
        %v322 = vsub.s32 1, %v321
        %v323 = vrot.slane %v314, %v322
        %326 = vmatprep.subr.mxu0 %v283
        %327 = vmatpush1.msra.mxu0 %v282
        %328 = vmatprep.subr.mxu0 %v285
        %329 = vmatpush1.msra.mxu0 %v284
        %330 = vmatprep.subr.mxu0 %v287
        %331 = vmatpush1.msra.mxu0 %v286
        %332 = vmatprep.subr.mxu0 %v289
        %333 = vmatpush1.msra.mxu0 %v288
        %334 = vmatprep.subr.mxu0 %v291
        %335 = vmatpush1.msra.mxu0 %v290
        %336 = vmatprep.subr.mxu0 %v293
        %337 = vmatpush1.msra.mxu0 %v292
        %338 = vmatprep.subr.mxu0 %v295
        %339 = vmatpush1.msra.mxu0 %v294
        %340 = vmatprep.subr.mxu0 %v297
        %341 = vmatpush1.msra.mxu0 %v296
        %342 = vmatprep.subr.mxu0 %v299
        %343 = vmatpush1.msra.mxu0 %v298
        %344 = vmatprep.subr.mxu0 %v301
        %345 = vmatpush1.msra.mxu0 %v300
        %346 = vmatprep.subr.mxu0 %v303
        %347 = vmatpush1.msra.mxu0 %v302
        %348 = vmatprep.subr.mxu0 %v305
        %349 = vmatpush1.msra.mxu0 %v304
        %350 = vmatprep.subr.mxu0 %v307
        %351 = vmatpush1.msra.mxu0 %v306
        %352 = vmatprep.subr.mxu0 %v309
        %353 = vmatpush1.msra.mxu0 %v308
        %354 = vmatprep.subr.mxu0 %v311
        %355 = vmatpush1.msra.mxu0 %v310
        %356 = vmatprep.subr.mxu0 %v313
        %357 = vmatpush1.msra.mxu0 %v312
        %358 = vmatprep.subr.mxu0 0.0
        %359 = vmatpush1.msra.mxu0 0.0
        %360 = vmatprep.subr.mxu0 0.0
        %361 = vmatpush1.msra.mxu0 0.0
        %362 = vmatprep.subr.mxu0 0.0
        %363 = vmatpush1.msra.mxu0 0.0
        %364 = vmatprep.subr.mxu0 0.0
        %365 = vmatpush1.msra.mxu0 0.0
        %366 = vmatprep.subr.mxu0 0.0
        %367 = vmatpush1.msra.mxu0 0.0
        %368 = vmatprep.subr.mxu0 0.0
        %369 = vmatpush1.msra.mxu0 0.0
        %370 = vmatprep.subr.mxu0 0.0
        %371 = vmatpush1.msra.mxu0 0.0
        %372 = vmatprep.subr.mxu0 0.0
        %373 = vmatpush1.msra.mxu0 0.0
        %374 = vmatprep.subr.mxu0 0.0
        %375 = vmatpush1.msra.mxu0 0.0
        %376 = vmatprep.subr.mxu0 0.0
        %377 = vmatpush1.msra.mxu0 0.0
        %378 = vmatprep.subr.mxu0 0.0
        %379 = vmatpush1.msra.mxu0 0.0
        %380 = vmatprep.subr.mxu0 0.0
        %381 = vmatpush1.msra.mxu0 0.0
        %382 = vmatprep.subr.mxu0 0.0
        %383 = vmatpush1.msra.mxu0 0.0
        %384 = vmatprep.subr.mxu0 0.0
        %385 = vmatpush1.msra.mxu0 0.0
        %386 = vmatprep.subr.mxu0 0.0
        %387 = vmatpush1.msra.mxu0 0.0
        %388 = vmatprep.subr.mxu0 0.0
        %389 = vmatpush1.msra.mxu0 0.0
        %390 = vmatprep.mubr.f32.mxu0 0.0
        %391 = vmatmul.mubr.f32.gmra.mrb[0].mxu0 %v280
        %v392 = vpop.f32.mrb[0].mxu0
        %v393 = vadd.f32 %v319, %v392
        %v394 = vpop.f32.mrb[0].mxu0
        %v395 = vadd.f32 %v323, %v394
        %396 = vmatprep.mubr.f32.mxu0 0.0
        %397 = vmatmul.mubr.f32.gmra.mrb[0].mxu0 %v281
        %v398 = vpop.f32.mrb[0].mxu0
        %v399 = vadd.f32 %v319, %v398
        %v400 = vpop.f32.mrb[0].mxu0
        %v401 = vadd.f32 %v323, %v400
        %402 = vdwg.mxu0
        %v403 = vmul.f32 %v393, 0.5
        %v404 = vmul.f32 %v395, 0.5
        %v405 = vmul.f32 %v399, 0.5
        %v406 = vmul.f32 %v401, 0.5
        %v407 = vmul.f32 %v393, 0.70710677
        %v408 = vmul.f32 %v395, 0.70710677
        %v409 = vmul.f32 %v399, 0.70710677
        %v410 = vmul.f32 %v401, 0.70710677
        %vm411 = vcmp.ge.f32.partialorder %v407, 0.0
        %vm412 = vcmp.ge.f32.partialorder %v408, 0.0
        %vm413 = vcmp.ge.f32.partialorder %v409, 0.0
        %vm414 = vcmp.ge.f32.partialorder %v410, 0.0
        %v415 = vsel %vm411, 1.0, -1.0
        %v416 = vsel %vm412, 1.0, -1.0
        %v417 = vsel %vm413, 1.0, -1.0
        %v418 = vsel %vm414, 1.0, -1.0
        %v419 = vand.u32 2147483647, %v407
        %v420 = vand.u32 2147483647, %v408
        %v421 = vand.u32 2147483647, %v409
        %v422 = vand.u32 2147483647, %v410
        %v423 = vmul.f32 %v419, 0.3275911
        %v424 = vmul.f32 %v420, 0.3275911
        %v425 = vmul.f32 %v421, 0.3275911
        %v426 = vmul.f32 %v422, 0.3275911
        %v427 = vadd.f32 %v423, 1.0
        %v428 = vadd.f32 %v424, 1.0
        %v429 = vadd.f32 %v425, 1.0
        %v430 = vadd.f32 %v426, 1.0
        %v431 = vrcp.pop %v427
        %v432 = vrcp.pop %v428
        %v433 = vrcp.pop %v429
        %v434 = vrcp.pop %v430
        %v435 = vmul.f32 %v427, %v431
        %v436 = vmul.f32 %v428, %v432
        %v437 = vmul.f32 %v429, %v433
        %v438 = vmul.f32 %v430, %v434
        %v439 = vsub.f32 2.0, %v435
        %v440 = vsub.f32 2.0, %v436
        %v441 = vsub.f32 2.0, %v437
        %v442 = vsub.f32 2.0, %v438
        %v443 = vmul.f32 %v431, %v439
        %v444 = vmul.f32 %v432, %v440
        %v445 = vmul.f32 %v433, %v441
        %v446 = vmul.f32 %v434, %v442
        %v447 = vmul.f32 %v443, 1.0614054
        %v448 = vmul.f32 %v444, 1.0614054
        %v449 = vmul.f32 %v445, 1.0614054
        %v450 = vmul.f32 %v446, 1.0614054
        %v451 = vadd.f32 %v447, -1.4531521
        %v452 = vadd.f32 %v448, -1.4531521
        %v453 = vadd.f32 %v449, -1.4531521
        %v454 = vadd.f32 %v450, -1.4531521
        %v455 = vmul.f32 %v451, %v443
        %v456 = vmul.f32 %v452, %v444
        %v457 = vmul.f32 %v453, %v445
        %v458 = vmul.f32 %v454, %v446
        %v459 = vadd.f32 %v455, 1.4214138
        %v460 = vadd.f32 %v456, 1.4214138
        %v461 = vadd.f32 %v457, 1.4214138
        %v462 = vadd.f32 %v458, 1.4214138
        %v463 = vmul.f32 %v459, %v443
        %v464 = vmul.f32 %v460, %v444
        %v465 = vmul.f32 %v461, %v445
        %v466 = vmul.f32 %v462, %v446
        %v467 = vadd.f32 %v463, -0.28449672
        %v468 = vadd.f32 %v464, -0.28449672
        %v469 = vadd.f32 %v465, -0.28449672
        %v470 = vadd.f32 %v466, -0.28449672
        %v471 = vmul.f32 %v467, %v443
        %v472 = vmul.f32 %v468, %v444
        %v473 = vmul.f32 %v469, %v445
        %v474 = vmul.f32 %v470, %v446
        %v475 = vadd.f32 %v471, 0.2548296
        %v476 = vadd.f32 %v472, 0.2548296
        %v477 = vadd.f32 %v473, 0.2548296
        %v478 = vadd.f32 %v474, 0.2548296
        %v479 = vmul.f32 %v475, %v443
        %v480 = vmul.f32 %v476, %v444
        %v481 = vmul.f32 %v477, %v445
        %v482 = vmul.f32 %v478, %v446
        %v483 = vsub.f32 0.0, %v419
        %v484 = vsub.f32 0.0, %v420
        %v485 = vsub.f32 0.0, %v421
        %v486 = vsub.f32 0.0, %v422
        %v487 = vmul.f32 %v483, %v419
        %v488 = vmul.f32 %v484, %v420
        %v489 = vmul.f32 %v485, %v421
        %v490 = vmul.f32 %v486, %v422
        %v491 = vmul.f32 %v487, 1.442695
        %v492 = vpow.pop %v491
        %v493 = vmul.f32 %v488, 1.442695
        %v494 = vpow.pop %v493
        %v495 = vmul.f32 %v489, 1.442695
        %v496 = vpow.pop %v495
        %v497 = vmul.f32 %v490, 1.442695
        %v498 = vpow.pop %v497
        %v499 = vmul.f32 %v479, %v492
        %v500 = vmul.f32 %v480, %v494
        %v501 = vmul.f32 %v481, %v496
        %v502 = vmul.f32 %v482, %v498
        %v503 = vsub.f32 1.0, %v499
        %v504 = vsub.f32 1.0, %v500
        %v505 = vsub.f32 1.0, %v501
        %v506 = vsub.f32 1.0, %v502
        %v507 = vmul.f32 %v415, %v503
        %v508 = vmul.f32 %v416, %v504
        %v509 = vmul.f32 %v417, %v505
        %v510 = vmul.f32 %v418, %v506
        %v511 = vadd.f32 %v507, 1.0
        %v512 = vadd.f32 %v508, 1.0
        %v513 = vadd.f32 %v509, 1.0
        %v514 = vadd.f32 %v510, 1.0
        %v515 = vmul.f32 %v403, %v511
        %v516 = vmul.f32 %v404, %v512
        %v517 = vmul.f32 %v405, %v513
        %v518 = vmul.f32 %v406, %v514
        %v519 = vld [vmem:[%s3] sm:$0xff]
        %v520 = vld [vmem:[%s3 + $0x8] sm:$0xff]
        %v521 = vld [vmem:[%s3 + $0x10] sm:$0xff]
        %v522 = vld [vmem:[%s3 + $0x18] sm:$0xff]
        %v523 = vld [vmem:[%s3 + $0x20] sm:$0xff]
        %v524 = vld [vmem:[%s3 + $0x28] sm:$0xff]
        %v525 = vld [vmem:[%s3 + $0x30] sm:$0xff]
        %v526 = vld [vmem:[%s3 + $0x38] sm:$0xff]
        %v527 = vld [vmem:[%s3 + $0x40] sm:$0xff]
        %v528 = vld [vmem:[%s3 + $0x48] sm:$0xff]
        %v529 = vld [vmem:[%s3 + $0x50] sm:$0xff]
        %v530 = vld [vmem:[%s3 + $0x58] sm:$0xff]
        %v531 = vld [vmem:[%s3 + $0x60] sm:$0xff]
        %v532 = vld [vmem:[%s3 + $0x68] sm:$0xff]
        %v533 = vld [vmem:[%s3 + $0x70] sm:$0xff]
        %v534 = vld [vmem:[%s3 + $0x78] sm:$0xff]
        %v535 = vld [vmem:[%s3 + $0x80] sm:$0xff]
        %v536 = vld [vmem:[%s3 + $0x88] sm:$0xff]
        %v537 = vld [vmem:[%s3 + $0x90] sm:$0xff]
        %v538 = vld [vmem:[%s3 + $0x98] sm:$0xff]
        %v539 = vld [vmem:[%s3 + $0xa0] sm:$0xff]
        %v540 = vld [vmem:[%s3 + $0xa8] sm:$0xff]
        %v541 = vld [vmem:[%s3 + $0xb0] sm:$0xff]
        %v542 = vld [vmem:[%s3 + $0xb8] sm:$0xff]
        %v543 = vld [vmem:[%s3 + $0xc0] sm:$0xff]
        %v544 = vld [vmem:[%s3 + $0xc8] sm:$0xff]
        %v545 = vld [vmem:[%s3 + $0xd0] sm:$0xff]
        %v546 = vld [vmem:[%s3 + $0xd8] sm:$0xff]
        %v547 = vld [vmem:[%s3 + $0xe0] sm:$0xff]
        %v548 = vld [vmem:[%s3 + $0xe8] sm:$0xff]
        %v549 = vld [vmem:[%s3 + $0xf0] sm:$0xff]
        %v550 = vld [vmem:[%s3 + $0xf8] sm:$0xff]
        %v551 = vld [vmem:[%s4] sm:$0x1]
        %v553 = vlaneseq
        %v554 = vshrl.u32 %v553, 7
        %v555 = vsub.s32 0, %v554
        %v556 = vrot.slane %v551, %v555
        %558 = vmatprep.subr.mxu0 0.0
        %559 = vmatpush1.msra.mxu0 %v519
        %560 = vmatprep.subr.mxu0 0.0
        %561 = vmatpush1.msra.mxu0 %v520
        %562 = vmatprep.subr.mxu0 0.0
        %563 = vmatpush1.msra.mxu0 %v521
        %564 = vmatprep.subr.mxu0 0.0
        %565 = vmatpush1.msra.mxu0 %v522
        %566 = vmatprep.subr.mxu0 0.0
        %567 = vmatpush1.msra.mxu0 %v523
        %568 = vmatprep.subr.mxu0 0.0
        %569 = vmatpush1.msra.mxu0 %v524
        %570 = vmatprep.subr.mxu0 0.0
        %571 = vmatpush1.msra.mxu0 %v525
        %572 = vmatprep.subr.mxu0 0.0
        %573 = vmatpush1.msra.mxu0 %v526
        %574 = vmatprep.subr.mxu0 0.0
        %575 = vmatpush1.msra.mxu0 %v527
        %576 = vmatprep.subr.mxu0 0.0
        %577 = vmatpush1.msra.mxu0 %v528
        %578 = vmatprep.subr.mxu0 0.0
        %579 = vmatpush1.msra.mxu0 %v529
        %580 = vmatprep.subr.mxu0 0.0
        %581 = vmatpush1.msra.mxu0 %v530
        %582 = vmatprep.subr.mxu0 0.0
        %583 = vmatpush1.msra.mxu0 %v531
        %584 = vmatprep.subr.mxu0 0.0
        %585 = vmatpush1.msra.mxu0 %v532
        %586 = vmatprep.subr.mxu0 0.0
        %587 = vmatpush1.msra.mxu0 %v533
        %588 = vmatprep.subr.mxu0 0.0
        %589 = vmatpush1.msra.mxu0 %v534
        %590 = vmatprep.subr.mxu0 0.0
        %591 = vmatpush1.msra.mxu0 %v535
        %592 = vmatprep.subr.mxu0 0.0
        %593 = vmatpush1.msra.mxu0 %v536
        %594 = vmatprep.subr.mxu0 0.0
        %595 = vmatpush1.msra.mxu0 %v537
        %596 = vmatprep.subr.mxu0 0.0
        %597 = vmatpush1.msra.mxu0 %v538
        %598 = vmatprep.subr.mxu0 0.0
        %599 = vmatpush1.msra.mxu0 %v539
        %600 = vmatprep.subr.mxu0 0.0
        %601 = vmatpush1.msra.mxu0 %v540
        %602 = vmatprep.subr.mxu0 0.0
        %603 = vmatpush1.msra.mxu0 %v541
        %604 = vmatprep.subr.mxu0 0.0
        %605 = vmatpush1.msra.mxu0 %v542
        %606 = vmatprep.subr.mxu0 0.0
        %607 = vmatpush1.msra.mxu0 %v543
        %608 = vmatprep.subr.mxu0 0.0
        %609 = vmatpush1.msra.mxu0 %v544
        %610 = vmatprep.subr.mxu0 0.0
        %611 = vmatpush1.msra.mxu0 %v545
        %612 = vmatprep.subr.mxu0 0.0
        %613 = vmatpush1.msra.mxu0 %v546
        %614 = vmatprep.subr.mxu0 0.0
        %615 = vmatpush1.msra.mxu0 %v547
        %616 = vmatprep.subr.mxu0 0.0
        %617 = vmatpush1.msra.mxu0 %v548
        %618 = vmatprep.subr.mxu0 0.0
        %619 = vmatpush1.msra.mxu0 %v549
        %620 = vmatprep.subr.mxu0 0.0
        %621 = vmatpush1.msra.mxu0 %v550
        %622 = vmatprep.mubr.f32.mxu0 %v516
        %623 = vmatmul.mubr.f32.gmra.mrb[0].mxu0 %v515
        %v624 = vpop.f32.mrb[0].mxu0
        %v625 = vadd.f32 %v556, %v624
        %v626 = vpop.f32.mrb[0].mxu0
        %627 = vmatprep.mubr.f32.mxu0 %v518
        %628 = vmatmul.mubr.f32.gmra.mrb[0].mxu0 %v517
        %v629 = vpop.f32.mrb[0].mxu0
        %v630 = vadd.f32 %v556, %v629
        %v631 = vpop.f32.mrb[0].mxu0
        %632 = vdwg.mxu0
        %v633 = vadd.f32 %v280, %v625
        %v634 = vadd.f32 %v281, %v630
        %v635 = vld [vmem:[%s5] sm:$0x1]
        %v636 = vld [vmem:[%s6] sm:$0x1]
        %637 = vadd.xlane.f32.xlu0 %v633
        %v638 = vpop.xlane.xlu0 %637
        %639 = vadd.xlane.f32.xlu0 %v634
        %v640 = vpop.xlane.xlu0 %639
        %v641 = vrcp.pop 128.0
        %v642 = vmul.f32 %v638, %v641
        %v643 = vmul.f32 %v640, %v641
        %v644 = vsub.f32 %v633, %v642
        %v645 = vsub.f32 %v634, %v643
        %v646 = vmul.f32 %v644, %v644
        %v647 = vmul.f32 %v645, %v645
        %648 = vadd.xlane.f32.xlu0 %v646
        %v649 = vpop.xlane.xlu0 %648
        %650 = vadd.xlane.f32.xlu0 %v647
        %v651 = vpop.xlane.xlu0 %650
        %v652 = vmul.f32 %v649, 0.007874016
        %v653 = vmul.f32 %v651, 0.007874016
        %v654 = vrsqrt.pop %v652
        %v655 = vmul.f32 %v652, %v654
        %vm656 = vcmp.eq.f32.partialorder %v652, inf
        %v657 = vsel %vm656, %v652, %v655
        %vm658 = vcmp.eq.f32.partialorder %v652, 0.0
        %v659 = vand.u32 %v652, 2147483648
        %v660 = vsel %vm658, %v659, %v657
        %v661 = vrsqrt.pop %v653
        %v662 = vmul.f32 %v653, %v661
        %vm663 = vcmp.eq.f32.partialorder %v653, inf
        %v664 = vsel %vm663, %v653, %v662
        %vm665 = vcmp.eq.f32.partialorder %v653, 0.0
        %v666 = vand.u32 %v653, 2147483648
        %v667 = vsel %vm665, %v666, %v664
        %v669 = vlaneseq
        %v670 = vshrl.u32 %v669, 7
        %v671 = vsub.s32 0, %v670
        %v672 = vrot.slane %v635, %v671
        %v674 = vmul.f32 %v672, %v644
        %v675 = vmul.f32 %v672, %v645
        %v676 = vadd.f32 %v660, 1e-05
        %v677 = vadd.f32 %v667, 1e-05
        %v678 = vrcp.pop %v676
        %v679 = vrcp.pop %v677
        %v680 = vmul.f32 %v676, %v678
        %v681 = vmul.f32 %v677, %v679
        %v682 = vsub.f32 2.0, %v680
        %v683 = vsub.f32 2.0, %v681
        %v684 = vmul.f32 %v678, %v682
        %v685 = vmul.f32 %v679, %v683
        %v686 = vmul.f32 %v674, %v684
        %v687 = vmul.f32 %v675, %v685
        %v689 = vlaneseq
        %v690 = vshrl.u32 %v689, 7
        %v691 = vsub.s32 0, %v690
        %v692 = vrot.slane %v636, %v691
        %v694 = vadd.f32 %v686, %v692
        %v695 = vadd.f32 %v687, %v692
        %696 = vst [vmem:[%s272] sm:$0xff] %v694
        %697 = vst [vmem:[%s272 + $0x8] sm:$0xff] %v695
        %s698 = sand.u32 %s181, 1
        %s699 = scalar_lea.sflag [#allocation3], %s698
        %s700 = sand.u32 %s181, 1
        %s701 = smul.addr %s700, 16
        %s702 = scalar_lea.vmem [#allocation2], %s701
        // Predicated region
        $region49: #{_lambda_.5} parent=47 // pred_check
          %p703 = pneg %p191
        $region50: #{_lambda_.5} parent=47 // pred_check_branch
          %705 = sbr.rel (%p703) target = $region52
        $region51: #{_lambda_.5} parent=47 // pred_region
          %s706 = smul.u32 2, %s21
          %s708 = ssub.s32 256, 256
          %709 = vsyncadd %s699, %s708
          %s710 = smul.addr %s706, 128
          %s711 = scalar_lea.hbm %s7, %s710
          %s712 = sshll.u32 %s702, 4
          %s713 = int_to_ptr.vmem [resolvable:$true] %s712
          %718 = dma.vmem_to_hbm [thread:$0]  %s713, 256, %s711, %s699, 128, 128, 8
        $region52: #{_lambda_.5} parent=47 // pred_fallthru
          _
      $region48: #{_lambda_.5} parent=5 // pred_fallthru
        _
      %p719 = scmp.le.s32.totalorder 2, %s16
      // Predicated region
      $region53: #{_lambda_.5} parent=5 // pred_check
        %p720 = pneg %p719
      $region54: #{_lambda_.5} parent=5 // pred_check_branch
        %722 = sbr.rel (%p720) target = $region56
      $region55: #{_lambda_.5} parent=5 // pred_region
        %s723 = ssub.s32 %s16, 2
        // Predicated region
        $region57: #{_lambda_.5} parent=55 // pred_check
          %p724 = pneg %p197
        $region58: #{_lambda_.5} parent=55 // pred_check_branch
          %726 = sbr.rel (%p724) target = $region60
        $region59: #{_lambda_.5} parent=55 // pred_region
          %s727 = sand.u32 %s182, 1
          %s728 = scalar_lea.sflag [#allocation3], %s727
          %s729 = sand.u32 %s182, 1
          %s730 = smul.addr %s729, 16
          %s731 = scalar_lea.vmem [#allocation2], %s730
          %732 = dma.done %s728, 256
        $region60: #{_lambda_.5} parent=55 // pred_fallthru
          _
      $region56: #{_lambda_.5} parent=5 // pred_fallthru
        _
    $region6: #{_lambda_.5} parent=1 // loop_footer
      %s20 = sadd.s32 1, %s16
    $region7: #{_lambda_.5} parent=1 // loop_footer_branch
      %15 = sbr.rel target = $region3
    $region8: #{_lambda_.5} parent=1 // loop_exit
      _
    %733 = vsyncpa [#allocation3], 1
    %s734 = scalar_lea.sflag [#allocation3], 1
    %735 = vsyncpa %s734, 1

// kernel: _lambda_.4
$region0: #{_lambda_.4}
  #allocation0 [shape = 'u32[]', space=smem, size = 0x4, offset = 0x4, fixed_abs, tag = 'smem constant byte address 0x4 - core index']
  #allocation1 [shape = 'u32[144,128]{1,0:T(1,128)}', space=vmem, size = 0x12000, scoped, tag = 'internal scratch']
  #allocation2 [shape = 'f32[4,8,32]{2,1,0:T(8,128)}', space=vmem, size = 0x4000, scoped, tag = 'scratch operand']
  #allocation3 [shape = 'f32[4,8,1]{2,1,0:T(8,128)}', space=vmem, size = 0x4000, scoped, tag = 'scratch operand']
  #allocation4 [shape = 'f32[4,8,1]{2,1,0:T(8,128)}', space=vmem, size = 0x4000, scoped, tag = 'scratch operand']
  #allocation5 [shape = 'f32[4,8,32]{2,1,0:T(8,128)}', space=vmem, size = 0x4000, scoped, tag = 'scratch operand']
  %s0 = inlined_call_operand.vmem [shape: f32[2,16,128], index: 0, kind: input, shape index: {}]
  %s1 = inlined_call_operand.vmem [shape: f32[2,16,128], index: 1, kind: input, shape index: {}]
  %s2 = inlined_call_operand.vmem [shape: f32[128,128], index: 2, kind: input, shape index: {}]
  %s3 = inlined_call_operand.vmem [shape: f32[1,128], index: 3, kind: input, shape index: {}]
  %s4 = inlined_call_operand.vmem [shape: f32[128,256], index: 4, kind: input, shape index: {}]
  %s5 = inlined_call_operand.vmem [shape: f32[1,256], index: 5, kind: input, shape index: {}]
  %s6 = inlined_call_operand.vmem [shape: f32[128,128], index: 6, kind: input, shape index: {}]
  %s7 = inlined_call_operand.vmem [shape: f32[1,128], index: 7, kind: input, shape index: {}]
  %s8 = inlined_call_operand.vmem [shape: f32[1,128], index: 8, kind: input, shape index: {}]
  %s9 = inlined_call_operand.vmem [shape: f32[1,128], index: 9, kind: input, shape index: {}]
  %s10 = inlined_call_operand.vmem [shape: f32[2,16,128], index: 10, kind: output, shape index: {}]
  %s11 = sld [smem:[#allocation0]]
  $region81: #{_lambda_.4} parent=0
    _
  %s13 = ssub.s32 1, %s11
  %s14 = scalar_select 0, %s13, %s11
  loop: start=0, step=1, limit=10
  $region2: #{_lambda_.4} parent=0 // loop_pre_header
    _
  $region3: #{_lambda_.4} parent=0 // loop_header
    %s16 = sphi 0, %s20
    %p17 = scmp.ge.s32.totalorder %s16, 10
    %s23 = sphi 0, %s42
    %s24 = sphi 0, %s38
    %s25 = sphi 0, %s34
    %s26 = sphi 0, %s23
    %s27 = sphi 0, %s24
    %s28 = sphi 0, %s25
    %s29 = sphi 0, %s26
    %s30 = sphi 0, %s27
    %s31 = sphi 0, %s28
    %s47 = sphi 0, %s49
    %s50 = sphi 0, %s47
    %s51 = sphi 0, %s50
    %s67 = sphi 0, %s51
    %s75 = sphi 0, %s77
    %s78 = sphi 0, %s75
    %s79 = sphi 0, %s78
    %s95 = sphi 0, %s79
    %s99 = sphi 0, %s99
    %s101 = sphi 0, %s99
    %s102 = sphi 0, %s101
    %s116 = sphi 0, %s102
    %s120 = sphi 0, %s120
    %s122 = sphi 0, %s120
    %s123 = sphi 0, %s122
    %s137 = sphi 0, %s123
    %s141 = sphi 0, %s141
    %s143 = sphi 0, %s141
    %s144 = sphi 0, %s143
    %s158 = sphi 0, %s144
    %s162 = sphi 0, %s162
    %s164 = sphi 0, %s162
    %s165 = sphi 0, %s164
    %s179 = sphi 0, %s165
    %s183 = sphi 0, %s183
    %s185 = sphi 0, %s183
    %s186 = sphi 0, %s185
    %s200 = sphi 0, %s186
    %s204 = sphi 0, %s204
    %s206 = sphi 0, %s204
    %s207 = sphi 0, %s206
    %s221 = sphi 0, %s207
    %s225 = sphi 0, %s225
    %s227 = sphi 0, %s225
    %s228 = sphi 0, %s227
    %s242 = sphi 0, %s228
    %s246 = sphi 0, %s246
    %s248 = sphi 0, %s246
    %s249 = sphi 0, %s248
    %s263 = sphi 0, %s249
    %s271 = sphi 0, %s273
    %s274 = sphi 0, %s271
    %s275 = sphi 0, %s274
    %s291 = sphi 0, %s275
  $region4: #{_lambda_.4} parent=0 // loop_header_branch
    %19 = sbr.rel (%p17) target = $region8
  $region5: #{_lambda_.4} parent=0 // loop_body
    %s21 = ssub.s32 %s16, 1
    %s22 = ssub.s32 %s16, 2
    %s32 = sadd.s32 1, %s25
    %p33 = scmp.ge.s32.totalorder %s32, 2
    %s34 = scalar_select %p33, 0, %s32
    %s35 = sadd.s32 1, %s24
    %s36 = scalar_select %p33, %s35, %s24
    %p37 = scmp.ge.s32.totalorder %s36, 2
    %s38 = scalar_select %p37, 0, %s36
    %s39 = sadd.s32 1, %s23
    %s40 = scalar_select %p37, %s39, %s23
    %p41 = scmp.ge.s32.totalorder %s40, 2
    %s42 = scalar_select %p41, 0, %s40
    %s43 = ssub.s32 %s23, %s42
    %s44 = ssub.s32 %s24, %s38
    %s45 = sor.u32 %s43, %s44
    %p46 = scmp.eq.s32.totalorder %s45, 0
    %s48 = sadd.s32 %s47, 1
    %s49 = scalar_select %p46, %s47, %s48
    %p52 = pneg %p46
    %p53 = scmp.eq.s32.totalorder %s16, 7
    %p54 = por %p52, %p53
    %p55 = scmp.ne.s32.totalorder %s47, %s50
    %p56 = scmp.eq.s32.totalorder %s16, 0
    %p57 = por %p55, %p56
    %p58 = scmp.ne.s32.totalorder %s47, %s50
    %p59 = scmp.eq.s32.totalorder %s21, 7
    %p60 = por %p58, %p59
    %p61 = scmp.ne.s32.totalorder %s50, %s51
    %p62 = scmp.eq.s32.totalorder %s21, 0
    %p63 = por %p61, %p62
    %p64 = scmp.ne.s32.totalorder %s50, %s51
    %p65 = scmp.eq.s32.totalorder %s22, 7
    %p66 = por %p64, %p65
    %p68 = scmp.ne.s32.totalorder %s51, %s67
    %p69 = scmp.eq.s32.totalorder %s22, 0
    %p70 = por %p68, %p69
    %s71 = ssub.s32 %s23, %s42
    %s72 = ssub.s32 %s25, %s34
    %s73 = sor.u32 %s71, %s72
    %p74 = scmp.eq.s32.totalorder %s73, 0
    %s76 = sadd.s32 %s75, 1
    %s77 = scalar_select %p74, %s75, %s76
    %p80 = pneg %p74
    %p81 = scmp.eq.s32.totalorder %s16, 7
    %p82 = por %p80, %p81
    %p83 = scmp.ne.s32.totalorder %s75, %s78
    %p84 = scmp.eq.s32.totalorder %s16, 0
    %p85 = por %p83, %p84
    %p86 = scmp.ne.s32.totalorder %s75, %s78
    %p87 = scmp.eq.s32.totalorder %s21, 7
    %p88 = por %p86, %p87
    %p89 = scmp.ne.s32.totalorder %s78, %s79
    %p90 = scmp.eq.s32.totalorder %s21, 0
    %p91 = por %p89, %p90
    %p92 = scmp.ne.s32.totalorder %s78, %s79
    %p93 = scmp.eq.s32.totalorder %s22, 7
    %p94 = por %p92, %p93
    %p96 = scmp.ne.s32.totalorder %s79, %s95
    %p97 = scmp.eq.s32.totalorder %s22, 0
    %p98 = por %p96, %p97
    %s100 = sadd.s32 %s99, 1
    %p103 = scmp.eq.s32.totalorder %s16, 7
    %p104 = scmp.ne.s32.totalorder %s99, %s101
    %p105 = scmp.eq.s32.totalorder %s16, 0
    %p106 = por %p104, %p105
    %p107 = scmp.ne.s32.totalorder %s99, %s101
    %p108 = scmp.eq.s32.totalorder %s21, 7
    %p109 = por %p107, %p108
    %p110 = scmp.ne.s32.totalorder %s101, %s102
    %p111 = scmp.eq.s32.totalorder %s21, 0
    %p112 = por %p110, %p111
    %p113 = scmp.ne.s32.totalorder %s101, %s102
    %p114 = scmp.eq.s32.totalorder %s22, 7
    %p115 = por %p113, %p114
    %p117 = scmp.ne.s32.totalorder %s102, %s116
    %p118 = scmp.eq.s32.totalorder %s22, 0
    %p119 = por %p117, %p118
    %s121 = sadd.s32 %s120, 1
    %p124 = scmp.eq.s32.totalorder %s16, 7
    %p125 = scmp.ne.s32.totalorder %s120, %s122
    %p126 = scmp.eq.s32.totalorder %s16, 0
    %p127 = por %p125, %p126
    %p128 = scmp.ne.s32.totalorder %s120, %s122
    %p129 = scmp.eq.s32.totalorder %s21, 7
    %p130 = por %p128, %p129
    %p131 = scmp.ne.s32.totalorder %s122, %s123
    %p132 = scmp.eq.s32.totalorder %s21, 0
    %p133 = por %p131, %p132
    %p134 = scmp.ne.s32.totalorder %s122, %s123
    %p135 = scmp.eq.s32.totalorder %s22, 7
    %p136 = por %p134, %p135
    %p138 = scmp.ne.s32.totalorder %s123, %s137
    %p139 = scmp.eq.s32.totalorder %s22, 0
    %p140 = por %p138, %p139
    %s142 = sadd.s32 %s141, 1
    %p145 = scmp.eq.s32.totalorder %s16, 7
    %p146 = scmp.ne.s32.totalorder %s141, %s143
    %p147 = scmp.eq.s32.totalorder %s16, 0
    %p148 = por %p146, %p147
    %p149 = scmp.ne.s32.totalorder %s141, %s143
    %p150 = scmp.eq.s32.totalorder %s21, 7
    %p151 = por %p149, %p150
    %p152 = scmp.ne.s32.totalorder %s143, %s144
    %p153 = scmp.eq.s32.totalorder %s21, 0
    %p154 = por %p152, %p153
    %p155 = scmp.ne.s32.totalorder %s143, %s144
    %p156 = scmp.eq.s32.totalorder %s22, 7
    %p157 = por %p155, %p156
    %p159 = scmp.ne.s32.totalorder %s144, %s158
    %p160 = scmp.eq.s32.totalorder %s22, 0
    %p161 = por %p159, %p160
    %s163 = sadd.s32 %s162, 1
    %p166 = scmp.eq.s32.totalorder %s16, 7
    %p167 = scmp.ne.s32.totalorder %s162, %s164
    %p168 = scmp.eq.s32.totalorder %s16, 0
    %p169 = por %p167, %p168
    %p170 = scmp.ne.s32.totalorder %s162, %s164
    %p171 = scmp.eq.s32.totalorder %s21, 7
    %p172 = por %p170, %p171
    %p173 = scmp.ne.s32.totalorder %s164, %s165
    %p174 = scmp.eq.s32.totalorder %s21, 0
    %p175 = por %p173, %p174
    %p176 = scmp.ne.s32.totalorder %s164, %s165
    %p177 = scmp.eq.s32.totalorder %s22, 7
    %p178 = por %p176, %p177
    %p180 = scmp.ne.s32.totalorder %s165, %s179
    %p181 = scmp.eq.s32.totalorder %s22, 0
    %p182 = por %p180, %p181
    %s184 = sadd.s32 %s183, 1
    %p187 = scmp.eq.s32.totalorder %s16, 7
    %p188 = scmp.ne.s32.totalorder %s183, %s185
    %p189 = scmp.eq.s32.totalorder %s16, 0
    %p190 = por %p188, %p189
    %p191 = scmp.ne.s32.totalorder %s183, %s185
    %p192 = scmp.eq.s32.totalorder %s21, 7
    %p193 = por %p191, %p192
    %p194 = scmp.ne.s32.totalorder %s185, %s186
    %p195 = scmp.eq.s32.totalorder %s21, 0
    %p196 = por %p194, %p195
    %p197 = scmp.ne.s32.totalorder %s185, %s186
    %p198 = scmp.eq.s32.totalorder %s22, 7
    %p199 = por %p197, %p198
    %p201 = scmp.ne.s32.totalorder %s186, %s200
    %p202 = scmp.eq.s32.totalorder %s22, 0
    %p203 = por %p201, %p202
    %s205 = sadd.s32 %s204, 1
    %p208 = scmp.eq.s32.totalorder %s16, 7
    %p209 = scmp.ne.s32.totalorder %s204, %s206
    %p210 = scmp.eq.s32.totalorder %s16, 0
    %p211 = por %p209, %p210
    %p212 = scmp.ne.s32.totalorder %s204, %s206
    %p213 = scmp.eq.s32.totalorder %s21, 7
    %p214 = por %p212, %p213
    %p215 = scmp.ne.s32.totalorder %s206, %s207
    %p216 = scmp.eq.s32.totalorder %s21, 0
    %p217 = por %p215, %p216
    %p218 = scmp.ne.s32.totalorder %s206, %s207
    %p219 = scmp.eq.s32.totalorder %s22, 7
    %p220 = por %p218, %p219
    %p222 = scmp.ne.s32.totalorder %s207, %s221
    %p223 = scmp.eq.s32.totalorder %s22, 0
    %p224 = por %p222, %p223
    %s226 = sadd.s32 %s225, 1
    %p229 = scmp.eq.s32.totalorder %s16, 7
    %p230 = scmp.ne.s32.totalorder %s225, %s227
    %p231 = scmp.eq.s32.totalorder %s16, 0
    %p232 = por %p230, %p231
    %p233 = scmp.ne.s32.totalorder %s225, %s227
    %p234 = scmp.eq.s32.totalorder %s21, 7
    %p235 = por %p233, %p234
    %p236 = scmp.ne.s32.totalorder %s227, %s228
    %p237 = scmp.eq.s32.totalorder %s21, 0
    %p238 = por %p236, %p237
    %p239 = scmp.ne.s32.totalorder %s227, %s228
    %p240 = scmp.eq.s32.totalorder %s22, 7
    %p241 = por %p239, %p240
    %p243 = scmp.ne.s32.totalorder %s228, %s242
    %p244 = scmp.eq.s32.totalorder %s22, 0
    %p245 = por %p243, %p244
    %s247 = sadd.s32 %s246, 1
    %p250 = scmp.eq.s32.totalorder %s16, 7
    %p251 = scmp.ne.s32.totalorder %s246, %s248
    %p252 = scmp.eq.s32.totalorder %s16, 0
    %p253 = por %p251, %p252
    %p254 = scmp.ne.s32.totalorder %s246, %s248
    %p255 = scmp.eq.s32.totalorder %s21, 7
    %p256 = por %p254, %p255
    %p257 = scmp.ne.s32.totalorder %s248, %s249
    %p258 = scmp.eq.s32.totalorder %s21, 0
    %p259 = por %p257, %p258
    %p260 = scmp.ne.s32.totalorder %s248, %s249
    %p261 = scmp.eq.s32.totalorder %s22, 7
    %p262 = por %p260, %p261
    %p264 = scmp.ne.s32.totalorder %s249, %s263
    %p265 = scmp.eq.s32.totalorder %s22, 0
    %p266 = por %p264, %p265
    %s267 = ssub.s32 %s23, %s42
    %s268 = ssub.s32 %s24, %s38
    %s269 = sor.u32 %s267, %s268
    %p270 = scmp.eq.s32.totalorder %s269, 0
    %s272 = sadd.s32 %s271, 1
    %s273 = scalar_select %p270, %s271, %s272
    %p276 = pneg %p270
    %p277 = scmp.eq.s32.totalorder %s16, 7
    %p278 = por %p276, %p277
    %p279 = scmp.ne.s32.totalorder %s271, %s274
    %p280 = scmp.eq.s32.totalorder %s16, 0
    %p281 = por %p279, %p280
    %p282 = scmp.ne.s32.totalorder %s271, %s274
    %p283 = scmp.eq.s32.totalorder %s21, 7
    %p284 = por %p282, %p283
    %p285 = scmp.ne.s32.totalorder %s274, %s275
    %p286 = scmp.eq.s32.totalorder %s21, 0
    %p287 = por %p285, %p286
    %p288 = scmp.ne.s32.totalorder %s274, %s275
    %p289 = scmp.eq.s32.totalorder %s22, 7
    %p290 = por %p288, %p289
    %p292 = scmp.ne.s32.totalorder %s275, %s291
    %p293 = scmp.eq.s32.totalorder %s22, 0
    %p294 = por %p292, %p293
    %p295 = scmp.le.s32.totalorder 1, %s16
    %p296 = scmp.lt.s32.totalorder %s16, 9
    %p297 = pnand %p295, %p296
    %p298 = pneg %p297
    // Predicated region
    $region9: #{_lambda_.4} parent=5 // pred_check
      _
    $region10: #{_lambda_.4} parent=5 // pred_check_branch
      %300 = sbr.rel (%p297) target = $region12
    $region11: #{_lambda_.4} parent=5 // pred_region
      %s301 = ssub.s32 %s16, 1
      // Predicated region
      $region13: #{_lambda_.4} parent=11 // pred_check
        %p302 = pneg %p112
      $region14: #{_lambda_.4} parent=11 // pred_check_branch
        %304 = sbr.rel (%p302) target = $region16
      $region15: #{_lambda_.4} parent=11 // pred_region
        _
      $region16: #{_lambda_.4} parent=11 // pred_fallthru
        _
      // Predicated region
      $region17: #{_lambda_.4} parent=11 // pred_check
        %p305 = pneg %p133
      $region18: #{_lambda_.4} parent=11 // pred_check_branch
        %307 = sbr.rel (%p305) target = $region20
      $region19: #{_lambda_.4} parent=11 // pred_region
        _
      $region20: #{_lambda_.4} parent=11 // pred_fallthru
        _
      // Predicated region
      $region21: #{_lambda_.4} parent=11 // pred_check
        %p308 = pneg %p154
      $region22: #{_lambda_.4} parent=11 // pred_check_branch
        %310 = sbr.rel (%p308) target = $region24
      $region23: #{_lambda_.4} parent=11 // pred_region
        _
      $region24: #{_lambda_.4} parent=11 // pred_fallthru
        _
      // Predicated region
      $region25: #{_lambda_.4} parent=11 // pred_check
        %p311 = pneg %p175
      $region26: #{_lambda_.4} parent=11 // pred_check_branch
        %313 = sbr.rel (%p311) target = $region28
      $region27: #{_lambda_.4} parent=11 // pred_region
        _
      $region28: #{_lambda_.4} parent=11 // pred_fallthru
        _
      // Predicated region
      $region29: #{_lambda_.4} parent=11 // pred_check
        %p314 = pneg %p196
      $region30: #{_lambda_.4} parent=11 // pred_check_branch
        %316 = sbr.rel (%p314) target = $region32
      $region31: #{_lambda_.4} parent=11 // pred_region
        _
      $region32: #{_lambda_.4} parent=11 // pred_fallthru
        _
      // Predicated region
      $region33: #{_lambda_.4} parent=11 // pred_check
        %p317 = pneg %p217
      $region34: #{_lambda_.4} parent=11 // pred_check_branch
        %319 = sbr.rel (%p317) target = $region36
      $region35: #{_lambda_.4} parent=11 // pred_region
        _
      $region36: #{_lambda_.4} parent=11 // pred_fallthru
        _
      // Predicated region
      $region37: #{_lambda_.4} parent=11 // pred_check
        %p320 = pneg %p238
      $region38: #{_lambda_.4} parent=11 // pred_check_branch
        %322 = sbr.rel (%p320) target = $region40
      $region39: #{_lambda_.4} parent=11 // pred_region
        _
      $region40: #{_lambda_.4} parent=11 // pred_fallthru
        _
      // Predicated region
      $region41: #{_lambda_.4} parent=11 // pred_check
        %p323 = pneg %p259
      $region42: #{_lambda_.4} parent=11 // pred_check_branch
        %325 = sbr.rel (%p323) target = $region44
      $region43: #{_lambda_.4} parent=11 // pred_region
        _
      $region44: #{_lambda_.4} parent=11 // pred_fallthru
        _
    $region12: #{_lambda_.4} parent=5 // pred_fallthru
      _
    %p326 = scmp.lt.s32.totalorder %s16, 8
    // Predicated region
    $region45: #{_lambda_.4} parent=5 // pred_check
      %p327 = pneg %p326
    $region46: #{_lambda_.4} parent=5 // pred_check_branch
      %329 = sbr.rel (%p327) target = $region48
    $region47: #{_lambda_.4} parent=5 // pred_region
      // Predicated region
      $region49: #{_lambda_.4} parent=47 // pred_check
        %p330 = pneg %p57
      $region50: #{_lambda_.4} parent=47 // pred_check_branch
        %332 = sbr.rel (%p330) target = $region52
      $region51: #{_lambda_.4} parent=47 // pred_region
        %p333 = scmp.lt.s32.totalorder %s23, 1
        %s334 = scalar_select %p333, %s23, 1
        %p335 = scmp.lt.s32.totalorder %s24, 1
        %s336 = scalar_select %p335, %s24, 1
        %s337 = smul.addr %s334, 2
        %s338 = sadd.s32 %s336, %s337
        %s339 = smul.addr %s338, 8
        %s340 = scalar_lea.vmem %s0, %s339
      $region52: #{_lambda_.4} parent=47 // pred_fallthru
        _
      // Predicated region
      $region53: #{_lambda_.4} parent=47 // pred_check
        %p341 = pneg %p85
      $region54: #{_lambda_.4} parent=47 // pred_check_branch
        %343 = sbr.rel (%p341) target = $region56
      $region55: #{_lambda_.4} parent=47 // pred_region
        %p344 = scmp.lt.s32.totalorder %s23, 1
        %s345 = scalar_select %p344, %s23, 1
        %p346 = scmp.lt.s32.totalorder %s25, 1
        %s347 = scalar_select %p346, %s25, 1
        %s348 = smul.addr %s345, 2
        %s349 = sadd.s32 %s347, %s348
        %s350 = smul.addr %s349, 8
        %s351 = scalar_lea.vmem %s1, %s350
      $region56: #{_lambda_.4} parent=47 // pred_fallthru
        _
    $region48: #{_lambda_.4} parent=5 // pred_fallthru
      _
    %p352 = scmp.le.s32.totalorder 1, %s16
    %p353 = scmp.lt.s32.totalorder %s16, 9
    %p354 = pnand %p352, %p353
    %p355 = pneg %p354
    // Predicated region
    $region57: #{_lambda_.4} parent=5 // pred_check
      _
    $region58: #{_lambda_.4} parent=5 // pred_check_branch
      %357 = sbr.rel (%p354) target = $region60
    $region59: #{_lambda_.4} parent=5 // pred_region
      %s358 = ssub.s32 %s16, 1
      %p359 = scmp.lt.s32.totalorder %s26, 1
      %s360 = scalar_select %p359, %s26, 1
      %p361 = scmp.lt.s32.totalorder %s27, 1
      %s362 = scalar_select %p361, %s27, 1
      %s363 = smul.addr %s360, 2
      %s364 = sadd.s32 %s362, %s363
      %s365 = smul.addr %s364, 8
      %s366 = scalar_lea.vmem %s0, %s365
      %p367 = pneg %p63
      %p368 = pneg %p60
      %p369 = scmp.lt.s32.totalorder %s26, 1
      %s370 = scalar_select %p369, %s26, 1
      %p371 = scmp.lt.s32.totalorder %s28, 1
      %s372 = scalar_select %p371, %s28, 1
      %s373 = smul.addr %s370, 2
      %s374 = sadd.s32 %s372, %s373
      %s375 = smul.addr %s374, 8
      %s376 = scalar_lea.vmem %s1, %s375
      %p377 = pneg %p91
      %p378 = pneg %p88
      %p379 = pneg %p112
      %p380 = pneg %p109
      %p381 = pneg %p133
      %p382 = pneg %p130
      %p383 = pneg %p154
      %p384 = pneg %p151
      %p385 = pneg %p175
      %p386 = pneg %p172
      %p387 = pneg %p196
      %p388 = pneg %p193
      %p389 = pneg %p217
      %p390 = pneg %p214
      %p391 = pneg %p238
      %p392 = pneg %p235
      %p393 = pneg %p259
      %p394 = pneg %p256
      %p395 = pneg %p287
      %p396 = pneg %p284
      %p397 = scmp.lt.s32.totalorder %s26, 1
      %s398 = scalar_select %p397, %s26, 1
      %p399 = scmp.lt.s32.totalorder %s27, 1
      %s400 = scalar_select %p399, %s27, 1
      %s401 = smul.addr %s398, 2
      %s402 = sadd.s32 %s400, %s401
      %s403 = smul.addr %s402, 8
      %s404 = scalar_lea.vmem %s10, %s403
      %p405 = scmp.lt.s32.totalorder %s26, 1
      %s406 = scalar_select %p405, %s26, 1
      %p407 = scmp.lt.s32.totalorder %s27, 1
      %s408 = scalar_select %p407, %s27, 1
      %s409 = smul.addr %s406, 2
      %s410 = sadd.s32 %s408, %s409
      %s411 = smul.addr %s410, 8
      %s412 = scalar_lea.vmem %s0, %s411
      %p413 = scmp.lt.s32.totalorder %s26, 1
      %s414 = scalar_select %p413, %s26, 1
      %p415 = scmp.lt.s32.totalorder %s28, 1
      %s416 = scalar_select %p415, %s28, 1
      %s417 = smul.addr %s414, 2
      %s418 = sadd.s32 %s416, %s417
      %s419 = smul.addr %s418, 8
      %s420 = scalar_lea.vmem %s1, %s419
      %p421 = scmp.lt.s32.totalorder %s26, 1
      %s422 = scalar_select %p421, %s26, 1
      %p423 = scmp.lt.s32.totalorder %s27, 1
      %s424 = scalar_select %p423, %s27, 1
      %s425 = smul.addr %s422, 2
      %s426 = sadd.s32 %s424, %s425
      %s427 = smul.addr %s426, 8
      %s428 = scalar_lea.vmem %s10, %s427
      %v429 = vld [vmem:[%s412] sm:$0xff]
      %p430 = scmp.eq.s32.totalorder %s28, 0
      // Predicated region
      $region61: #{_lambda_.4} parent=59 // pred_check
        %p431 = pneg %p430
      $region62: #{_lambda_.4} parent=59 // pred_check_branch
        %433 = sbr.rel (%p431) target = $region64
      $region63: #{_lambda_.4} parent=59 // pred_region
        %vm434 = vcmask 7168
        %435 = vst.msk [vmem:[#allocation3] sm:$0xff] %vm434, -inf
        %436 = vst.msk [vmem:[#allocation3 + $0x8] sm:$0xff] %vm434, -inf
        %437 = vst.msk [vmem:[#allocation3 + $0x10] sm:$0xff] %vm434, -inf
        %438 = vst.msk [vmem:[#allocation3 + $0x18] sm:$0xff] %vm434, -inf
        %439 = vst.msk [vmem:[#allocation4] sm:$0xff] %vm434, 0.0
        %440 = vst.msk [vmem:[#allocation4 + $0x8] sm:$0xff] %vm434, 0.0
        %441 = vst.msk [vmem:[#allocation4 + $0x10] sm:$0xff] %vm434, 0.0
        %442 = vst.msk [vmem:[#allocation4 + $0x18] sm:$0xff] %vm434, 0.0
        %vm443 = vcmask 261120
        %444 = vst.msk [vmem:[#allocation5] sm:$0xff] %vm443, 0.0
        %445 = vst.msk [vmem:[#allocation5 + $0x8] sm:$0xff] %vm443, 0.0
        %446 = vst.msk [vmem:[#allocation5 + $0x10] sm:$0xff] %vm443, 0.0
        %447 = vst.msk [vmem:[#allocation5 + $0x18] sm:$0xff] %vm443, 0.0
        %v448 = vld [vmem:[%s2] sm:$0xff]
        %v449 = vld [vmem:[%s2 + $0x8] sm:$0xff]
        %v450 = vld [vmem:[%s2 + $0x10] sm:$0xff]
        %v451 = vld [vmem:[%s2 + $0x18] sm:$0xff]
        %v452 = vld [vmem:[%s2 + $0x20] sm:$0xff]
        %v453 = vld [vmem:[%s2 + $0x28] sm:$0xff]
        %v454 = vld [vmem:[%s2 + $0x30] sm:$0xff]
        %v455 = vld [vmem:[%s2 + $0x38] sm:$0xff]
        %v456 = vld [vmem:[%s2 + $0x40] sm:$0xff]
        %v457 = vld [vmem:[%s2 + $0x48] sm:$0xff]
        %v458 = vld [vmem:[%s2 + $0x50] sm:$0xff]
        %v459 = vld [vmem:[%s2 + $0x58] sm:$0xff]
        %v460 = vld [vmem:[%s2 + $0x60] sm:$0xff]
        %v461 = vld [vmem:[%s2 + $0x68] sm:$0xff]
        %v462 = vld [vmem:[%s2 + $0x70] sm:$0xff]
        %v463 = vld [vmem:[%s2 + $0x78] sm:$0xff]
        %v464 = vld [vmem:[%s3] sm:$0x1]
        %v466 = vlaneseq
        %v467 = vshrl.u32 %v466, 7
        %v468 = vsub.s32 0, %v467
        %v469 = vrot.slane %v464, %v468
        %471 = vmatprep.subr.mxu0 0.0
        %472 = vmatpush1.msra.mxu0 %v448
        %473 = vmatprep.subr.mxu0 0.0
        %474 = vmatpush1.msra.mxu0 %v449
        %475 = vmatprep.subr.mxu0 0.0
        %476 = vmatpush1.msra.mxu0 %v450
        %477 = vmatprep.subr.mxu0 0.0
        %478 = vmatpush1.msra.mxu0 %v451
        %479 = vmatprep.subr.mxu0 0.0
        %480 = vmatpush1.msra.mxu0 %v452
        %481 = vmatprep.subr.mxu0 0.0
        %482 = vmatpush1.msra.mxu0 %v453
        %483 = vmatprep.subr.mxu0 0.0
        %484 = vmatpush1.msra.mxu0 %v454
        %485 = vmatprep.subr.mxu0 0.0
        %486 = vmatpush1.msra.mxu0 %v455
        %487 = vmatprep.subr.mxu0 0.0
        %488 = vmatpush1.msra.mxu0 %v456
        %489 = vmatprep.subr.mxu0 0.0
        %490 = vmatpush1.msra.mxu0 %v457
        %491 = vmatprep.subr.mxu0 0.0
        %492 = vmatpush1.msra.mxu0 %v458
        %493 = vmatprep.subr.mxu0 0.0
        %494 = vmatpush1.msra.mxu0 %v459
        %495 = vmatprep.subr.mxu0 0.0
        %496 = vmatpush1.msra.mxu0 %v460
        %497 = vmatprep.subr.mxu0 0.0
        %498 = vmatpush1.msra.mxu0 %v461
        %499 = vmatprep.subr.mxu0 0.0
        %500 = vmatpush1.msra.mxu0 %v462
        %501 = vmatprep.subr.mxu0 0.0
        %502 = vmatpush1.msra.mxu0 %v463
        %503 = vmatprep.subr.mxu0 0.0
        %504 = vmatpush1.msra.mxu0 0.0
        %505 = vmatprep.subr.mxu0 0.0
        %506 = vmatpush1.msra.mxu0 0.0
        %507 = vmatprep.subr.mxu0 0.0
        %508 = vmatpush1.msra.mxu0 0.0
        %509 = vmatprep.subr.mxu0 0.0
        %510 = vmatpush1.msra.mxu0 0.0
        %511 = vmatprep.subr.mxu0 0.0
        %512 = vmatpush1.msra.mxu0 0.0
        %513 = vmatprep.subr.mxu0 0.0
        %514 = vmatpush1.msra.mxu0 0.0
        %515 = vmatprep.subr.mxu0 0.0
        %516 = vmatpush1.msra.mxu0 0.0
        %517 = vmatprep.subr.mxu0 0.0
        %518 = vmatpush1.msra.mxu0 0.0
        %519 = vmatprep.subr.mxu0 0.0
        %520 = vmatpush1.msra.mxu0 0.0
        %521 = vmatprep.subr.mxu0 0.0
        %522 = vmatpush1.msra.mxu0 0.0
        %523 = vmatprep.subr.mxu0 0.0
        %524 = vmatpush1.msra.mxu0 0.0
        %525 = vmatprep.subr.mxu0 0.0
        %526 = vmatpush1.msra.mxu0 0.0
        %527 = vmatprep.subr.mxu0 0.0
        %528 = vmatpush1.msra.mxu0 0.0
        %529 = vmatprep.subr.mxu0 0.0
        %530 = vmatpush1.msra.mxu0 0.0
        %531 = vmatprep.subr.mxu0 0.0
        %532 = vmatpush1.msra.mxu0 0.0
        %533 = vmatprep.subr.mxu0 0.0
        %534 = vmatpush1.msra.mxu0 0.0
        %535 = vmatprep.mubr.f32.mxu0 0.0
        %536 = vmatmul.mubr.f32.gmra.mrb[0].mxu0 %v429
        %v537 = vpop.f32.mrb[0].mxu0
        %v538 = vadd.f32 %v469, %v537
        %v539 = vpop.f32.mrb[0].mxu0
        %540 = vdwg.mxu0
        %v541 = vmul.f32 %v538, 0.17677669
        %543 = vrot.lane.b32.xlu0 %v541, 96
        %v544 = vpop.permute.xlu0 %543
        %546 = vrot.lane.b32.xlu0 %v541, 64
        %v547 = vpop.permute.xlu0 %546
        %549 = vrot.lane.b32.xlu0 %v541, 32
        %v550 = vpop.permute.xlu0 %549
        %v552 = vcombine.low %v541, %v547
        %v553 = vcombine.high %v541, %v547
        %v555 = vunpack.c.l.s4 1983009808
        %v556 = vunpack.c.0.s8 %v555
        %v557 = vlaneseq
        %v558 = vshrl.u32 %v557, 7
        %v559 = vsub.s32 %v556, %v558
        %v560 = vrot.slane %v552, %v559
        %v562 = vunpack.c.l.s4 1983009808
        %v563 = vunpack.c.0.s8 %v562
        %v564 = vlaneseq
        %v565 = vshrl.u32 %v564, 7
        %v566 = vsub.s32 %v563, %v565
        %v567 = vrot.slane %v553, %v566
        %v568 = vcombine.low %v544, %v550
        %v569 = vcombine.high %v544, %v550
        %v571 = vunpack.c.l.s4 1983009808
        %v572 = vunpack.c.0.s8 %v571
        %v573 = vlaneseq
        %v574 = vshrl.u32 %v573, 7
        %v575 = vsub.s32 %v572, %v574
        %v576 = vrot.slane %v568, %v575
        %v578 = vunpack.c.l.s4 1983009808
        %v579 = vunpack.c.0.s8 %v578
        %v580 = vlaneseq
        %v581 = vshrl.u32 %v580, 7
        %v582 = vsub.s32 %v579, %v581
        %v583 = vrot.slane %v569, %v582
        %v584 = vcombine.low %v560, %v576
        %v585 = vcombine.high %v560, %v576
        %v587 = vunpack.c.l.s4 1934713408
        %v588 = vunpack.c.0.s8 %v587
        %v589 = vlaneseq
        %v590 = vshrl.u32 %v589, 7
        %v591 = vsub.s32 %v588, %v590
        %v592 = vrot.slane %v584, %v591
        %v594 = vunpack.c.l.s4 1934713408
        %v595 = vunpack.c.0.s8 %v594
        %v596 = vlaneseq
        %v597 = vshrl.u32 %v596, 7
        %v598 = vsub.s32 %v595, %v597
        %v599 = vrot.slane %v585, %v598
        %v600 = vcombine.low %v567, %v583
        %v601 = vcombine.high %v567, %v583
        %v603 = vunpack.c.l.s4 1934713408
        %v604 = vunpack.c.0.s8 %v603
        %v605 = vlaneseq
        %v606 = vshrl.u32 %v605, 7
        %v607 = vsub.s32 %v604, %v606
        %v608 = vrot.slane %v600, %v607
        %v610 = vunpack.c.l.s4 1934713408
        %v611 = vunpack.c.0.s8 %v610
        %v612 = vlaneseq
        %v613 = vshrl.u32 %v612, 7
        %v614 = vsub.s32 %v611, %v613
        %v615 = vrot.slane %v601, %v614
        %v616 = vcombine.high %v592, 0.0
        %v617 = vcombine.high %v599, 0.0
        %v618 = vcombine.high %v608, 0.0
        %v619 = vcombine.high %v615, 0.0
        %v620 = vcombine.low %v592, %v599
        %v622 = vunpack.c.l.s4 1983009808
        %v623 = vunpack.c.0.s8 %v622
        %v624 = vlaneseq
        %v625 = vshrl.u32 %v624, 7
        %v626 = vsub.s32 %v623, %v625
        %v627 = vrot.slane %v620, %v626
        %v628 = vcombine.low %v616, %v617
        %v630 = vunpack.c.l.s4 1983009808
        %v631 = vunpack.c.0.s8 %v630
        %v632 = vlaneseq
        %v633 = vshrl.u32 %v632, 7
        %v634 = vsub.s32 %v631, %v633
        %v635 = vrot.slane %v628, %v634
        %v636 = vcombine.low %v608, %v615
        %v638 = vunpack.c.l.s4 1983009808
        %v639 = vunpack.c.0.s8 %v638
        %v640 = vlaneseq
        %v641 = vshrl.u32 %v640, 7
        %v642 = vsub.s32 %v639, %v641
        %v643 = vrot.slane %v636, %v642
        %v644 = vcombine.low %v618, %v619
        %v646 = vunpack.c.l.s4 1983009808
        %v647 = vunpack.c.0.s8 %v646
        %v648 = vlaneseq
        %v649 = vshrl.u32 %v648, 7
        %v650 = vsub.s32 %v647, %v649
        %v651 = vrot.slane %v644, %v650
        %v652 = vcombine.low %v627, %v635
        %v653 = vcombine.high %v627, %v635
        %v655 = vunpack.c.l.s4 1934713408
        %v656 = vunpack.c.0.s8 %v655
        %v657 = vlaneseq
        %v658 = vshrl.u32 %v657, 7
        %v659 = vsub.s32 %v656, %v658
        %v660 = vrot.slane %v652, %v659
        %v662 = vunpack.c.l.s4 1934713408
        %v663 = vunpack.c.0.s8 %v662
        %v664 = vlaneseq
        %v665 = vshrl.u32 %v664, 7
        %v666 = vsub.s32 %v663, %v665
        %v667 = vrot.slane %v653, %v666
        %v668 = vcombine.low %v643, %v651
        %v669 = vcombine.high %v643, %v651
        %v671 = vunpack.c.l.s4 1934713408
        %v672 = vunpack.c.0.s8 %v671
        %v673 = vlaneseq
        %v674 = vshrl.u32 %v673, 7
        %v675 = vsub.s32 %v672, %v674
        %v676 = vrot.slane %v668, %v675
        %v678 = vunpack.c.l.s4 1934713408
        %v679 = vunpack.c.0.s8 %v678
        %v680 = vlaneseq
        %v681 = vshrl.u32 %v680, 7
        %v682 = vsub.s32 %v679, %v681
        %v683 = vrot.slane %v669, %v682
        %v684 = vcombine.low %v660, %v676
        %v685 = vcombine.high %v660, %v676
        %v686 = vcombine.low %v667, %v683
        %v687 = vcombine.high %v667, %v683
        %688 = vst.msk [vmem:[#allocation2] sm:$0xff] %vm443, %v684
        %689 = vst.msk [vmem:[#allocation2 + $0x8] sm:$0xff] %vm443, %v685
        %690 = vst.msk [vmem:[#allocation2 + $0x10] sm:$0xff] %vm443, %v686
        %691 = vst.msk [vmem:[#allocation2 + $0x18] sm:$0xff] %vm443, %v687
      $region64: #{_lambda_.4} parent=59 // pred_fallthru
        _
      %v692 = vld [vmem:[%s420] sm:$0xff]
      %v693 = vld [vmem:[%s4] sm:$0xff]
      %v694 = vld [vmem:[%s4 + $0x8] sm:$0xff]
      %v695 = vld [vmem:[%s4 + $0x10] sm:$0xff]
      %v696 = vld [vmem:[%s4 + $0x18] sm:$0xff]
      %v697 = vld [vmem:[%s4 + $0x20] sm:$0xff]
      %v698 = vld [vmem:[%s4 + $0x28] sm:$0xff]
      %v699 = vld [vmem:[%s4 + $0x30] sm:$0xff]
      %v700 = vld [vmem:[%s4 + $0x38] sm:$0xff]
      %v701 = vld [vmem:[%s4 + $0x40] sm:$0xff]
      %v702 = vld [vmem:[%s4 + $0x48] sm:$0xff]
      %v703 = vld [vmem:[%s4 + $0x50] sm:$0xff]
      %v704 = vld [vmem:[%s4 + $0x58] sm:$0xff]
      %v705 = vld [vmem:[%s4 + $0x60] sm:$0xff]
      %v706 = vld [vmem:[%s4 + $0x68] sm:$0xff]
      %v707 = vld [vmem:[%s4 + $0x70] sm:$0xff]
      %v708 = vld [vmem:[%s4 + $0x78] sm:$0xff]
      %v709 = vld [vmem:[%s4 + $0x80] sm:$0xff]
      %v710 = vld [vmem:[%s4 + $0x88] sm:$0xff]
      %v711 = vld [vmem:[%s4 + $0x90] sm:$0xff]
      %v712 = vld [vmem:[%s4 + $0x98] sm:$0xff]
      %v713 = vld [vmem:[%s4 + $0xa0] sm:$0xff]
      %v714 = vld [vmem:[%s4 + $0xa8] sm:$0xff]
      %v715 = vld [vmem:[%s4 + $0xb0] sm:$0xff]
      %v716 = vld [vmem:[%s4 + $0xb8] sm:$0xff]
      %v717 = vld [vmem:[%s4 + $0xc0] sm:$0xff]
      %v718 = vld [vmem:[%s4 + $0xc8] sm:$0xff]
      %v719 = vld [vmem:[%s4 + $0xd0] sm:$0xff]
      %v720 = vld [vmem:[%s4 + $0xd8] sm:$0xff]
      %v721 = vld [vmem:[%s4 + $0xe0] sm:$0xff]
      %v722 = vld [vmem:[%s4 + $0xe8] sm:$0xff]
      %v723 = vld [vmem:[%s4 + $0xf0] sm:$0xff]
      %v724 = vld [vmem:[%s4 + $0xf8] sm:$0xff]
      %v725 = vld [vmem:[%s5] sm:$0x3]
      %v727 = vlaneseq
      %v728 = vshrl.u32 %v727, 7
      %v729 = vsub.s32 0, %v728
      %v730 = vrot.slane %v725, %v729
      %v731 = vlaneseq
      %v732 = vshrl.u32 %v731, 7
      %v733 = vsub.s32 1, %v732
      %v734 = vrot.slane %v725, %v733
      %737 = vmatprep.subr.mxu0 %v694
      %738 = vmatpush1.msra.mxu0 %v693
      %739 = vmatprep.subr.mxu0 %v696
      %740 = vmatpush1.msra.mxu0 %v695
      %741 = vmatprep.subr.mxu0 %v698
      %742 = vmatpush1.msra.mxu0 %v697
      %743 = vmatprep.subr.mxu0 %v700
      %744 = vmatpush1.msra.mxu0 %v699
      %745 = vmatprep.subr.mxu0 %v702
      %746 = vmatpush1.msra.mxu0 %v701
      %747 = vmatprep.subr.mxu0 %v704
      %748 = vmatpush1.msra.mxu0 %v703
      %749 = vmatprep.subr.mxu0 %v706
      %750 = vmatpush1.msra.mxu0 %v705
      %751 = vmatprep.subr.mxu0 %v708
      %752 = vmatpush1.msra.mxu0 %v707
      %753 = vmatprep.subr.mxu0 %v710
      %754 = vmatpush1.msra.mxu0 %v709
      %755 = vmatprep.subr.mxu0 %v712
      %756 = vmatpush1.msra.mxu0 %v711
      %757 = vmatprep.subr.mxu0 %v714
      %758 = vmatpush1.msra.mxu0 %v713
      %759 = vmatprep.subr.mxu0 %v716
      %760 = vmatpush1.msra.mxu0 %v715
      %761 = vmatprep.subr.mxu0 %v718
      %762 = vmatpush1.msra.mxu0 %v717
      %763 = vmatprep.subr.mxu0 %v720
      %764 = vmatpush1.msra.mxu0 %v719
      %765 = vmatprep.subr.mxu0 %v722
      %766 = vmatpush1.msra.mxu0 %v721
      %767 = vmatprep.subr.mxu0 %v724
      %768 = vmatpush1.msra.mxu0 %v723
      %769 = vmatprep.subr.mxu0 0.0
      %770 = vmatpush1.msra.mxu0 0.0
      %771 = vmatprep.subr.mxu0 0.0
      %772 = vmatpush1.msra.mxu0 0.0
      %773 = vmatprep.subr.mxu0 0.0
      %774 = vmatpush1.msra.mxu0 0.0
      %775 = vmatprep.subr.mxu0 0.0
      %776 = vmatpush1.msra.mxu0 0.0
      %777 = vmatprep.subr.mxu0 0.0
      %778 = vmatpush1.msra.mxu0 0.0
      %779 = vmatprep.subr.mxu0 0.0
      %780 = vmatpush1.msra.mxu0 0.0
      %781 = vmatprep.subr.mxu0 0.0
      %782 = vmatpush1.msra.mxu0 0.0
      %783 = vmatprep.subr.mxu0 0.0
      %784 = vmatpush1.msra.mxu0 0.0
      %785 = vmatprep.subr.mxu0 0.0
      %786 = vmatpush1.msra.mxu0 0.0
      %787 = vmatprep.subr.mxu0 0.0
      %788 = vmatpush1.msra.mxu0 0.0
      %789 = vmatprep.subr.mxu0 0.0
      %790 = vmatpush1.msra.mxu0 0.0
      %791 = vmatprep.subr.mxu0 0.0
      %792 = vmatpush1.msra.mxu0 0.0
      %793 = vmatprep.subr.mxu0 0.0
      %794 = vmatpush1.msra.mxu0 0.0
      %795 = vmatprep.subr.mxu0 0.0
      %796 = vmatpush1.msra.mxu0 0.0
      %797 = vmatprep.subr.mxu0 0.0
      %798 = vmatpush1.msra.mxu0 0.0
      %799 = vmatprep.subr.mxu0 0.0
      %800 = vmatpush1.msra.mxu0 0.0
      %801 = vmatprep.mubr.f32.mxu0 0.0
      %802 = vmatmul.mubr.f32.gmra.mrb[0].mxu0 %v692
      %v803 = vpop.f32.mrb[0].mxu0
      %v804 = vadd.f32 %v730, %v803
      %v805 = vpop.f32.mrb[0].mxu0
      %v806 = vadd.f32 %v734, %v805
      %807 = vdwg.mxu0
      %809 = vrot.lane.b32.xlu0 %v804, 96
      %v810 = vpop.permute.xlu0 %809
      %812 = vrot.lane.b32.xlu0 %v804, 64
      %v813 = vpop.permute.xlu0 %812
      %815 = vrot.lane.b32.xlu0 %v804, 32
      %v816 = vpop.permute.xlu0 %815
      %v818 = vcombine.low %v804, %v813
      %v819 = vcombine.high %v804, %v813
      %v821 = vunpack.c.l.s4 1983009808
      %v822 = vunpack.c.0.s8 %v821
      %v823 = vlaneseq
      %v824 = vshrl.u32 %v823, 7
      %v825 = vsub.s32 %v822, %v824
      %v826 = vrot.slane %v818, %v825
      %v828 = vunpack.c.l.s4 1983009808
      %v829 = vunpack.c.0.s8 %v828
      %v830 = vlaneseq
      %v831 = vshrl.u32 %v830, 7
      %v832 = vsub.s32 %v829, %v831
      %v833 = vrot.slane %v819, %v832
      %v834 = vcombine.low %v810, %v816
      %v835 = vcombine.high %v810, %v816
      %v837 = vunpack.c.l.s4 1983009808
      %v838 = vunpack.c.0.s8 %v837
      %v839 = vlaneseq
      %v840 = vshrl.u32 %v839, 7
      %v841 = vsub.s32 %v838, %v840
      %v842 = vrot.slane %v834, %v841
      %v844 = vunpack.c.l.s4 1983009808
      %v845 = vunpack.c.0.s8 %v844
      %v846 = vlaneseq
      %v847 = vshrl.u32 %v846, 7
      %v848 = vsub.s32 %v845, %v847
      %v849 = vrot.slane %v835, %v848
      %v850 = vcombine.low %v826, %v842
      %v851 = vcombine.high %v826, %v842
      %v853 = vunpack.c.l.s4 1934713408
      %v854 = vunpack.c.0.s8 %v853
      %v855 = vlaneseq
      %v856 = vshrl.u32 %v855, 7
      %v857 = vsub.s32 %v854, %v856
      %v858 = vrot.slane %v850, %v857
      %v860 = vunpack.c.l.s4 1934713408
      %v861 = vunpack.c.0.s8 %v860
      %v862 = vlaneseq
      %v863 = vshrl.u32 %v862, 7
      %v864 = vsub.s32 %v861, %v863
      %v865 = vrot.slane %v851, %v864
      %v866 = vcombine.low %v833, %v849
      %v867 = vcombine.high %v833, %v849
      %v869 = vunpack.c.l.s4 1934713408
      %v870 = vunpack.c.0.s8 %v869
      %v871 = vlaneseq
      %v872 = vshrl.u32 %v871, 7
      %v873 = vsub.s32 %v870, %v872
      %v874 = vrot.slane %v866, %v873
      %v876 = vunpack.c.l.s4 1934713408
      %v877 = vunpack.c.0.s8 %v876
      %v878 = vlaneseq
      %v879 = vshrl.u32 %v878, 7
      %v880 = vsub.s32 %v877, %v879
      %v881 = vrot.slane %v867, %v880
      %v882 = vcombine.high %v858, 0.0
      %v883 = vcombine.high %v865, 0.0
      %v884 = vcombine.high %v874, 0.0
      %v885 = vcombine.high %v881, 0.0
      %v886 = vcombine.low %v858, %v865
      %v888 = vunpack.c.l.s4 1983009808
      %v889 = vunpack.c.0.s8 %v888
      %v890 = vlaneseq
      %v891 = vshrl.u32 %v890, 7
      %v892 = vsub.s32 %v889, %v891
      %v893 = vrot.slane %v886, %v892
      %v894 = vcombine.low %v882, %v883
      %v896 = vunpack.c.l.s4 1983009808
      %v897 = vunpack.c.0.s8 %v896
      %v898 = vlaneseq
      %v899 = vshrl.u32 %v898, 7
      %v900 = vsub.s32 %v897, %v899
      %v901 = vrot.slane %v894, %v900
      %v902 = vcombine.low %v874, %v881
      %v904 = vunpack.c.l.s4 1983009808
      %v905 = vunpack.c.0.s8 %v904
      %v906 = vlaneseq
      %v907 = vshrl.u32 %v906, 7
      %v908 = vsub.s32 %v905, %v907
      %v909 = vrot.slane %v902, %v908
      %v910 = vcombine.low %v884, %v885
      %v912 = vunpack.c.l.s4 1983009808
      %v913 = vunpack.c.0.s8 %v912
      %v914 = vlaneseq
      %v915 = vshrl.u32 %v914, 7
      %v916 = vsub.s32 %v913, %v915
      %v917 = vrot.slane %v910, %v916
      %v918 = vcombine.low %v893, %v901
      %v919 = vcombine.high %v893, %v901
      %v921 = vunpack.c.l.s4 1934713408
      %v922 = vunpack.c.0.s8 %v921
      %v923 = vlaneseq
      %v924 = vshrl.u32 %v923, 7
      %v925 = vsub.s32 %v922, %v924
      %v926 = vrot.slane %v918, %v925
      %v928 = vunpack.c.l.s4 1934713408
      %v929 = vunpack.c.0.s8 %v928
      %v930 = vlaneseq
      %v931 = vshrl.u32 %v930, 7
      %v932 = vsub.s32 %v929, %v931
      %v933 = vrot.slane %v919, %v932
      %v934 = vcombine.low %v909, %v917
      %v935 = vcombine.high %v909, %v917
      %v937 = vunpack.c.l.s4 1934713408
      %v938 = vunpack.c.0.s8 %v937
      %v939 = vlaneseq
      %v940 = vshrl.u32 %v939, 7
      %v941 = vsub.s32 %v938, %v940
      %v942 = vrot.slane %v934, %v941
      %v944 = vunpack.c.l.s4 1934713408
      %v945 = vunpack.c.0.s8 %v944
      %v946 = vlaneseq
      %v947 = vshrl.u32 %v946, 7
      %v948 = vsub.s32 %v945, %v947
      %v949 = vrot.slane %v935, %v948
      %v950 = vcombine.low %v926, %v942
      %v951 = vcombine.high %v926, %v942
      %v952 = vcombine.low %v933, %v949
      %v953 = vcombine.high %v933, %v949
      %955 = vrot.lane.b32.xlu0 %v806, 96
      %v956 = vpop.permute.xlu0 %955
      %958 = vrot.lane.b32.xlu0 %v806, 64
      %v959 = vpop.permute.xlu0 %958
      %961 = vrot.lane.b32.xlu0 %v806, 32
      %v962 = vpop.permute.xlu0 %961
      %v964 = vcombine.low %v806, %v959
      %v965 = vcombine.high %v806, %v959
      %v967 = vunpack.c.l.s4 1983009808
      %v968 = vunpack.c.0.s8 %v967
      %v969 = vlaneseq
      %v970 = vshrl.u32 %v969, 7
      %v971 = vsub.s32 %v968, %v970
      %v972 = vrot.slane %v964, %v971
      %v974 = vunpack.c.l.s4 1983009808
      %v975 = vunpack.c.0.s8 %v974
      %v976 = vlaneseq
      %v977 = vshrl.u32 %v976, 7
      %v978 = vsub.s32 %v975, %v977
      %v979 = vrot.slane %v965, %v978
      %v980 = vcombine.low %v956, %v962
      %v981 = vcombine.high %v956, %v962
      %v983 = vunpack.c.l.s4 1983009808
      %v984 = vunpack.c.0.s8 %v983
      %v985 = vlaneseq
      %v986 = vshrl.u32 %v985, 7
      %v987 = vsub.s32 %v984, %v986
      %v988 = vrot.slane %v980, %v987
      %v990 = vunpack.c.l.s4 1983009808
      %v991 = vunpack.c.0.s8 %v990
      %v992 = vlaneseq
      %v993 = vshrl.u32 %v992, 7
      %v994 = vsub.s32 %v991, %v993
      %v995 = vrot.slane %v981, %v994
      %v996 = vcombine.low %v972, %v988
      %v997 = vcombine.high %v972, %v988
      %v999 = vunpack.c.l.s4 1934713408
      %v1000 = vunpack.c.0.s8 %v999
      %v1001 = vlaneseq
      %v1002 = vshrl.u32 %v1001, 7
      %v1003 = vsub.s32 %v1000, %v1002
      %v1004 = vrot.slane %v996, %v1003
      %v1006 = vunpack.c.l.s4 1934713408
      %v1007 = vunpack.c.0.s8 %v1006
      %v1008 = vlaneseq
      %v1009 = vshrl.u32 %v1008, 7
      %v1010 = vsub.s32 %v1007, %v1009
      %v1011 = vrot.slane %v997, %v1010
      %v1012 = vcombine.low %v979, %v995
      %v1013 = vcombine.high %v979, %v995
      %v1015 = vunpack.c.l.s4 1934713408
      %v1016 = vunpack.c.0.s8 %v1015
      %v1017 = vlaneseq
      %v1018 = vshrl.u32 %v1017, 7
      %v1019 = vsub.s32 %v1016, %v1018
      %v1020 = vrot.slane %v1012, %v1019
      %v1022 = vunpack.c.l.s4 1934713408
      %v1023 = vunpack.c.0.s8 %v1022
      %v1024 = vlaneseq
      %v1025 = vshrl.u32 %v1024, 7
      %v1026 = vsub.s32 %v1023, %v1025
      %v1027 = vrot.slane %v1013, %v1026
      %v1028 = vcombine.high %v1004, 0.0
      %v1029 = vcombine.high %v1011, 0.0
      %v1030 = vcombine.high %v1020, 0.0
      %v1031 = vcombine.high %v1027, 0.0
      %v1032 = vcombine.low %v1004, %v1011
      %v1034 = vunpack.c.l.s4 1983009808
      %v1035 = vunpack.c.0.s8 %v1034
      %v1036 = vlaneseq
      %v1037 = vshrl.u32 %v1036, 7
      %v1038 = vsub.s32 %v1035, %v1037
      %v1039 = vrot.slane %v1032, %v1038
      %v1040 = vcombine.low %v1028, %v1029
      %v1042 = vunpack.c.l.s4 1983009808
      %v1043 = vunpack.c.0.s8 %v1042
      %v1044 = vlaneseq
      %v1045 = vshrl.u32 %v1044, 7
      %v1046 = vsub.s32 %v1043, %v1045
      %v1047 = vrot.slane %v1040, %v1046
      %v1048 = vcombine.low %v1020, %v1027
      %v1050 = vunpack.c.l.s4 1983009808
      %v1051 = vunpack.c.0.s8 %v1050
      %v1052 = vlaneseq
      %v1053 = vshrl.u32 %v1052, 7
      %v1054 = vsub.s32 %v1051, %v1053
      %v1055 = vrot.slane %v1048, %v1054
      %v1056 = vcombine.low %v1030, %v1031
      %v1058 = vunpack.c.l.s4 1983009808
      %v1059 = vunpack.c.0.s8 %v1058
      %v1060 = vlaneseq
      %v1061 = vshrl.u32 %v1060, 7
      %v1062 = vsub.s32 %v1059, %v1061
      %v1063 = vrot.slane %v1056, %v1062
      %v1064 = vcombine.low %v1039, %v1047
      %v1065 = vcombine.high %v1039, %v1047
      %v1067 = vunpack.c.l.s4 1934713408
      %v1068 = vunpack.c.0.s8 %v1067
      %v1069 = vlaneseq
      %v1070 = vshrl.u32 %v1069, 7
      %v1071 = vsub.s32 %v1068, %v1070
      %v1072 = vrot.slane %v1064, %v1071
      %v1074 = vunpack.c.l.s4 1934713408
      %v1075 = vunpack.c.0.s8 %v1074
      %v1076 = vlaneseq
      %v1077 = vshrl.u32 %v1076, 7
      %v1078 = vsub.s32 %v1075, %v1077
      %v1079 = vrot.slane %v1065, %v1078
      %v1080 = vcombine.low %v1055, %v1063
      %v1081 = vcombine.high %v1055, %v1063
      %v1083 = vunpack.c.l.s4 1934713408
      %v1084 = vunpack.c.0.s8 %v1083
      %v1085 = vlaneseq
      %v1086 = vshrl.u32 %v1085, 7
      %v1087 = vsub.s32 %v1084, %v1086
      %v1088 = vrot.slane %v1080, %v1087
      %v1090 = vunpack.c.l.s4 1934713408
      %v1091 = vunpack.c.0.s8 %v1090
      %v1092 = vlaneseq
      %v1093 = vshrl.u32 %v1092, 7
      %v1094 = vsub.s32 %v1091, %v1093
      %v1095 = vrot.slane %v1081, %v1094
      %v1096 = vcombine.low %v1072, %v1088
      %v1097 = vcombine.high %v1072, %v1088
      %v1098 = vcombine.low %v1079, %v1095
      %v1099 = vcombine.high %v1079, %v1095
      %v1100 = vld [vmem:[#allocation2] sm:$0xff]
      %v1101 = vld [vmem:[#allocation2 + $0x8] sm:$0xff]
      %v1102 = vld [vmem:[#allocation2 + $0x10] sm:$0xff]
      %v1103 = vld [vmem:[#allocation2 + $0x18] sm:$0xff]
      %vm1104 = vcmask 261120
      %v1106 = vsel %vm1104, %v1100, 0
      %v1109 = vsel %vm1104, %v950, 0
      %1111 = vmatprep.subr.mxu0 0.0
      %1112 = vmatpush1.xpose.msra.mxu0 %v1109
      %1113 = vmatprep.subr.mxu0 0.0
      %1114 = vmatpush1.xpose.msra.mxu0 0.0
      %1115 = vmatprep.subr.mxu0 0.0
      %1116 = vmatpush1.xpose.msra.mxu0 0.0
      %1117 = vmatprep.subr.mxu0 0.0
      %1118 = vmatpush1.xpose.msra.mxu0 0.0
      %1119 = vmatprep.subr.mxu0 0.0
      %1120 = vmatpush1.xpose.msra.mxu0 0.0
      %1121 = vmatprep.subr.mxu0 0.0
      %1122 = vmatpush1.xpose.msra.mxu0 0.0
      %1123 = vmatprep.subr.mxu0 0.0
      %1124 = vmatpush1.xpose.msra.mxu0 0.0
      %1125 = vmatprep.subr.mxu0 0.0
      %1126 = vmatpush1.xpose.msra.mxu0 0.0
      %1127 = vmatprep.subr.mxu0 0.0
      %1128 = vmatpush1.xpose.msra.mxu0 0.0
      %1129 = vmatprep.subr.mxu0 0.0
      %1130 = vmatpush1.xpose.msra.mxu0 0.0
      %1131 = vmatprep.subr.mxu0 0.0
      %1132 = vmatpush1.xpose.msra.mxu0 0.0
      %1133 = vmatprep.subr.mxu0 0.0
      %1134 = vmatpush1.xpose.msra.mxu0 0.0
      %1135 = vmatprep.subr.mxu0 0.0
      %1136 = vmatpush1.xpose.msra.mxu0 0.0
      %1137 = vmatprep.subr.mxu0 0.0
      %1138 = vmatpush1.xpose.msra.mxu0 0.0
      %1139 = vmatprep.subr.mxu0 0.0
      %1140 = vmatpush1.xpose.msra.mxu0 0.0
      %1141 = vmatprep.subr.mxu0 0.0
      %1142 = vmatpush1.xpose.msra.mxu0 0.0
      %1143 = vmatprep.subr.mxu0 0.0
      %1144 = vmatpush1.xpose.msra.mxu0 0.0
      %1145 = vmatprep.subr.mxu0 0.0
      %1146 = vmatpush1.xpose.msra.mxu0 0.0
      %1147 = vmatprep.subr.mxu0 0.0
      %1148 = vmatpush1.xpose.msra.mxu0 0.0
      %1149 = vmatprep.subr.mxu0 0.0
      %1150 = vmatpush1.xpose.msra.mxu0 0.0
      %1151 = vmatprep.subr.mxu0 0.0
      %1152 = vmatpush1.xpose.msra.mxu0 0.0
      %1153 = vmatprep.subr.mxu0 0.0
      %1154 = vmatpush1.xpose.msra.mxu0 0.0
      %1155 = vmatprep.subr.mxu0 0.0
      %1156 = vmatpush1.xpose.msra.mxu0 0.0
      %1157 = vmatprep.subr.mxu0 0.0
      %1158 = vmatpush1.xpose.msra.mxu0 0.0
      %1159 = vmatprep.subr.mxu0 0.0
      %1160 = vmatpush1.xpose.msra.mxu0 0.0
      %1161 = vmatprep.subr.mxu0 0.0
      %1162 = vmatpush1.xpose.msra.mxu0 0.0
      %1163 = vmatprep.subr.mxu0 0.0
      %1164 = vmatpush1.xpose.msra.mxu0 0.0
      %1165 = vmatprep.subr.mxu0 0.0
      %1166 = vmatpush1.xpose.msra.mxu0 0.0
      %1167 = vmatprep.subr.mxu0 0.0
      %1168 = vmatpush1.xpose.msra.mxu0 0.0
      %1169 = vmatprep.subr.mxu0 0.0
      %1170 = vmatpush1.xpose.msra.mxu0 0.0
      %1171 = vmatprep.subr.mxu0 0.0
      %1172 = vmatpush1.xpose.msra.mxu0 0.0
      %1173 = vmatprep.subr.mxu0 0.0
      %1174 = vmatpush1.xpose.msra.mxu0 0.0
      %1175 = vmatprep.mubr.f32.mxu0 0.0
      %1176 = vmatmul.mubr.f32.gmra.mrb[0].mxu0 %v1106
      %v1177 = vpop.f32.mrb[0].mxu0
      %v1178 = vadd.f32 0.0, %v1177
      %v1179 = vpop.f32.mrb[0].mxu0
      %1180 = vdwg.mxu0
      %v1182 = vsel %vm1104, %v1101, 0
      %v1185 = vsel %vm1104, %v951, 0
      %1187 = vmatprep.subr.mxu0 0.0
      %1188 = vmatpush1.xpose.msra.mxu0 %v1185
      %1189 = vmatprep.subr.mxu0 0.0
      %1190 = vmatpush1.xpose.msra.mxu0 0.0
      %1191 = vmatprep.subr.mxu0 0.0
      %1192 = vmatpush1.xpose.msra.mxu0 0.0
      %1193 = vmatprep.subr.mxu0 0.0
      %1194 = vmatpush1.xpose.msra.mxu0 0.0
      %1195 = vmatprep.subr.mxu0 0.0
      %1196 = vmatpush1.xpose.msra.mxu0 0.0
      %1197 = vmatprep.subr.mxu0 0.0
      %1198 = vmatpush1.xpose.msra.mxu0 0.0
      %1199 = vmatprep.subr.mxu0 0.0
      %1200 = vmatpush1.xpose.msra.mxu0 0.0
      %1201 = vmatprep.subr.mxu0 0.0
      %1202 = vmatpush1.xpose.msra.mxu0 0.0
      %1203 = vmatprep.subr.mxu0 0.0
      %1204 = vmatpush1.xpose.msra.mxu0 0.0
      %1205 = vmatprep.subr.mxu0 0.0
      %1206 = vmatpush1.xpose.msra.mxu0 0.0
      %1207 = vmatprep.subr.mxu0 0.0
      %1208 = vmatpush1.xpose.msra.mxu0 0.0
      %1209 = vmatprep.subr.mxu0 0.0
      %1210 = vmatpush1.xpose.msra.mxu0 0.0
      %1211 = vmatprep.subr.mxu0 0.0
      %1212 = vmatpush1.xpose.msra.mxu0 0.0
      %1213 = vmatprep.subr.mxu0 0.0
      %1214 = vmatpush1.xpose.msra.mxu0 0.0
      %1215 = vmatprep.subr.mxu0 0.0
      %1216 = vmatpush1.xpose.msra.mxu0 0.0
      %1217 = vmatprep.subr.mxu0 0.0
      %1218 = vmatpush1.xpose.msra.mxu0 0.0
      %1219 = vmatprep.subr.mxu0 0.0
      %1220 = vmatpush1.xpose.msra.mxu0 0.0
      %1221 = vmatprep.subr.mxu0 0.0
      %1222 = vmatpush1.xpose.msra.mxu0 0.0
      %1223 = vmatprep.subr.mxu0 0.0
      %1224 = vmatpush1.xpose.msra.mxu0 0.0
      %1225 = vmatprep.subr.mxu0 0.0
      %1226 = vmatpush1.xpose.msra.mxu0 0.0
      %1227 = vmatprep.subr.mxu0 0.0
      %1228 = vmatpush1.xpose.msra.mxu0 0.0
      %1229 = vmatprep.subr.mxu0 0.0
      %1230 = vmatpush1.xpose.msra.mxu0 0.0
      %1231 = vmatprep.subr.mxu0 0.0
      %1232 = vmatpush1.xpose.msra.mxu0 0.0
      %1233 = vmatprep.subr.mxu0 0.0
      %1234 = vmatpush1.xpose.msra.mxu0 0.0
      %1235 = vmatprep.subr.mxu0 0.0
      %1236 = vmatpush1.xpose.msra.mxu0 0.0
      %1237 = vmatprep.subr.mxu0 0.0
      %1238 = vmatpush1.xpose.msra.mxu0 0.0
      %1239 = vmatprep.subr.mxu0 0.0
      %1240 = vmatpush1.xpose.msra.mxu0 0.0
      %1241 = vmatprep.subr.mxu0 0.0
      %1242 = vmatpush1.xpose.msra.mxu0 0.0
      %1243 = vmatprep.subr.mxu0 0.0
      %1244 = vmatpush1.xpose.msra.mxu0 0.0
      %1245 = vmatprep.subr.mxu0 0.0
      %1246 = vmatpush1.xpose.msra.mxu0 0.0
      %1247 = vmatprep.subr.mxu0 0.0
      %1248 = vmatpush1.xpose.msra.mxu0 0.0
      %1249 = vmatprep.subr.mxu0 0.0
      %1250 = vmatpush1.xpose.msra.mxu0 0.0
      %1251 = vmatprep.mubr.f32.mxu0 0.0
      %1252 = vmatmul.mubr.f32.gmra.mrb[0].mxu0 %v1182
      %v1253 = vpop.f32.mrb[0].mxu0
      %v1254 = vadd.f32 0.0, %v1253
      %v1255 = vpop.f32.mrb[0].mxu0
      %1256 = vdwg.mxu0
      %v1258 = vsel %vm1104, %v1102, 0
      %v1261 = vsel %vm1104, %v952, 0
      %1263 = vmatprep.subr.mxu0 0.0
      %1264 = vmatpush1.xpose.msra.mxu0 %v1261
      %1265 = vmatprep.subr.mxu0 0.0
      %1266 = vmatpush1.xpose.msra.mxu0 0.0
      %1267 = vmatprep.subr.mxu0 0.0
      %1268 = vmatpush1.xpose.msra.mxu0 0.0
      %1269 = vmatprep.subr.mxu0 0.0
      %1270 = vmatpush1.xpose.msra.mxu0 0.0
      %1271 = vmatprep.subr.mxu0 0.0
      %1272 = vmatpush1.xpose.msra.mxu0 0.0
      %1273 = vmatprep.subr.mxu0 0.0
      %1274 = vmatpush1.xpose.msra.mxu0 0.0
      %1275 = vmatprep.subr.mxu0 0.0
      %1276 = vmatpush1.xpose.msra.mxu0 0.0
      %1277 = vmatprep.subr.mxu0 0.0
      %1278 = vmatpush1.xpose.msra.mxu0 0.0
      %1279 = vmatprep.subr.mxu0 0.0
      %1280 = vmatpush1.xpose.msra.mxu0 0.0
      %1281 = vmatprep.subr.mxu0 0.0
      %1282 = vmatpush1.xpose.msra.mxu0 0.0
      %1283 = vmatprep.subr.mxu0 0.0
      %1284 = vmatpush1.xpose.msra.mxu0 0.0
      %1285 = vmatprep.subr.mxu0 0.0
      %1286 = vmatpush1.xpose.msra.mxu0 0.0
      %1287 = vmatprep.subr.mxu0 0.0
      %1288 = vmatpush1.xpose.msra.mxu0 0.0
      %1289 = vmatprep.subr.mxu0 0.0
      %1290 = vmatpush1.xpose.msra.mxu0 0.0
      %1291 = vmatprep.subr.mxu0 0.0
      %1292 = vmatpush1.xpose.msra.mxu0 0.0
      %1293 = vmatprep.subr.mxu0 0.0
      %1294 = vmatpush1.xpose.msra.mxu0 0.0
      %1295 = vmatprep.subr.mxu0 0.0
      %1296 = vmatpush1.xpose.msra.mxu0 0.0
      %1297 = vmatprep.subr.mxu0 0.0
      %1298 = vmatpush1.xpose.msra.mxu0 0.0
      %1299 = vmatprep.subr.mxu0 0.0
      %1300 = vmatpush1.xpose.msra.mxu0 0.0
      %1301 = vmatprep.subr.mxu0 0.0
      %1302 = vmatpush1.xpose.msra.mxu0 0.0
      %1303 = vmatprep.subr.mxu0 0.0
      %1304 = vmatpush1.xpose.msra.mxu0 0.0
      %1305 = vmatprep.subr.mxu0 0.0
      %1306 = vmatpush1.xpose.msra.mxu0 0.0
      %1307 = vmatprep.subr.mxu0 0.0
      %1308 = vmatpush1.xpose.msra.mxu0 0.0
      %1309 = vmatprep.subr.mxu0 0.0
      %1310 = vmatpush1.xpose.msra.mxu0 0.0
      %1311 = vmatprep.subr.mxu0 0.0
      %1312 = vmatpush1.xpose.msra.mxu0 0.0
      %1313 = vmatprep.subr.mxu0 0.0
      %1314 = vmatpush1.xpose.msra.mxu0 0.0
      %1315 = vmatprep.subr.mxu0 0.0
      %1316 = vmatpush1.xpose.msra.mxu0 0.0
      %1317 = vmatprep.subr.mxu0 0.0
      %1318 = vmatpush1.xpose.msra.mxu0 0.0
      %1319 = vmatprep.subr.mxu0 0.0
      %1320 = vmatpush1.xpose.msra.mxu0 0.0
      %1321 = vmatprep.subr.mxu0 0.0
      %1322 = vmatpush1.xpose.msra.mxu0 0.0
      %1323 = vmatprep.subr.mxu0 0.0
      %1324 = vmatpush1.xpose.msra.mxu0 0.0
      %1325 = vmatprep.subr.mxu0 0.0
      %1326 = vmatpush1.xpose.msra.mxu0 0.0
      %1327 = vmatprep.mubr.f32.mxu0 0.0
      %1328 = vmatmul.mubr.f32.gmra.mrb[0].mxu0 %v1258
      %v1329 = vpop.f32.mrb[0].mxu0
      %v1330 = vadd.f32 0.0, %v1329
      %v1331 = vpop.f32.mrb[0].mxu0
      %1332 = vdwg.mxu0
      %v1334 = vsel %vm1104, %v1103, 0
      %v1337 = vsel %vm1104, %v953, 0
      %1339 = vmatprep.subr.mxu0 0.0
      %1340 = vmatpush1.xpose.msra.mxu0 %v1337
      %1341 = vmatprep.subr.mxu0 0.0
      %1342 = vmatpush1.xpose.msra.mxu0 0.0
      %1343 = vmatprep.subr.mxu0 0.0
      %1344 = vmatpush1.xpose.msra.mxu0 0.0
      %1345 = vmatprep.subr.mxu0 0.0
      %1346 = vmatpush1.xpose.msra.mxu0 0.0
      %1347 = vmatprep.subr.mxu0 0.0
      %1348 = vmatpush1.xpose.msra.mxu0 0.0
      %1349 = vmatprep.subr.mxu0 0.0
      %1350 = vmatpush1.xpose.msra.mxu0 0.0
      %1351 = vmatprep.subr.mxu0 0.0
      %1352 = vmatpush1.xpose.msra.mxu0 0.0
      %1353 = vmatprep.subr.mxu0 0.0
      %1354 = vmatpush1.xpose.msra.mxu0 0.0
      %1355 = vmatprep.subr.mxu0 0.0
      %1356 = vmatpush1.xpose.msra.mxu0 0.0
      %1357 = vmatprep.subr.mxu0 0.0
      %1358 = vmatpush1.xpose.msra.mxu0 0.0
      %1359 = vmatprep.subr.mxu0 0.0
      %1360 = vmatpush1.xpose.msra.mxu0 0.0
      %1361 = vmatprep.subr.mxu0 0.0
      %1362 = vmatpush1.xpose.msra.mxu0 0.0
      %1363 = vmatprep.subr.mxu0 0.0
      %1364 = vmatpush1.xpose.msra.mxu0 0.0
      %1365 = vmatprep.subr.mxu0 0.0
      %1366 = vmatpush1.xpose.msra.mxu0 0.0
      %1367 = vmatprep.subr.mxu0 0.0
      %1368 = vmatpush1.xpose.msra.mxu0 0.0
      %1369 = vmatprep.subr.mxu0 0.0
      %1370 = vmatpush1.xpose.msra.mxu0 0.0
      %1371 = vmatprep.subr.mxu0 0.0
      %1372 = vmatpush1.xpose.msra.mxu0 0.0
      %1373 = vmatprep.subr.mxu0 0.0
      %1374 = vmatpush1.xpose.msra.mxu0 0.0
      %1375 = vmatprep.subr.mxu0 0.0
      %1376 = vmatpush1.xpose.msra.mxu0 0.0
      %1377 = vmatprep.subr.mxu0 0.0
      %1378 = vmatpush1.xpose.msra.mxu0 0.0
      %1379 = vmatprep.subr.mxu0 0.0
      %1380 = vmatpush1.xpose.msra.mxu0 0.0
      %1381 = vmatprep.subr.mxu0 0.0
      %1382 = vmatpush1.xpose.msra.mxu0 0.0
      %1383 = vmatprep.subr.mxu0 0.0
      %1384 = vmatpush1.xpose.msra.mxu0 0.0
      %1385 = vmatprep.subr.mxu0 0.0
      %1386 = vmatpush1.xpose.msra.mxu0 0.0
      %1387 = vmatprep.subr.mxu0 0.0
      %1388 = vmatpush1.xpose.msra.mxu0 0.0
      %1389 = vmatprep.subr.mxu0 0.0
      %1390 = vmatpush1.xpose.msra.mxu0 0.0
      %1391 = vmatprep.subr.mxu0 0.0
      %1392 = vmatpush1.xpose.msra.mxu0 0.0
      %1393 = vmatprep.subr.mxu0 0.0
      %1394 = vmatpush1.xpose.msra.mxu0 0.0
      %1395 = vmatprep.subr.mxu0 0.0
      %1396 = vmatpush1.xpose.msra.mxu0 0.0
      %1397 = vmatprep.subr.mxu0 0.0
      %1398 = vmatpush1.xpose.msra.mxu0 0.0
      %1399 = vmatprep.subr.mxu0 0.0
      %1400 = vmatpush1.xpose.msra.mxu0 0.0
      %1401 = vmatprep.subr.mxu0 0.0
      %1402 = vmatpush1.xpose.msra.mxu0 0.0
      %1403 = vmatprep.mubr.f32.mxu0 0.0
      %1404 = vmatmul.mubr.f32.gmra.mrb[0].mxu0 %v1334
      %v1405 = vpop.f32.mrb[0].mxu0
      %v1406 = vadd.f32 0.0, %v1405
      %v1407 = vpop.f32.mrb[0].mxu0
      %1408 = vdwg.mxu0
      %v1409 = vld [vmem:[#allocation3] sm:$0xff]
      %v1410 = vld [vmem:[#allocation3 + $0x8] sm:$0xff]
      %v1411 = vld [vmem:[#allocation3 + $0x10] sm:$0xff]
      %v1412 = vld [vmem:[#allocation3 + $0x18] sm:$0xff]
      %vm1413 = vcmask 64512
      %v1414 = vsel %vm1413, %v1178, -inf
      %1415 = vmax.xlane.f32.xlu0 %v1414
      %v1416 = vpop.xlane.xlu0 %1415
      %v1417 = vsel %vm1413, %v1254, -inf
      %1418 = vmax.xlane.f32.xlu0 %v1417
      %v1419 = vpop.xlane.xlu0 %1418
      %v1420 = vsel %vm1413, %v1330, -inf
      %1421 = vmax.xlane.f32.xlu0 %v1420
      %v1422 = vpop.xlane.xlu0 %1421
      %v1423 = vsel %vm1413, %v1406, -inf
      %1424 = vmax.xlane.f32.xlu0 %v1423
      %v1425 = vpop.xlane.xlu0 %1424
      %v1426 = vmax.f32 %v1409, %v1416
      %v1427 = vmax.f32 %v1410, %v1419
      %v1428 = vmax.f32 %v1411, %v1422
      %v1429 = vmax.f32 %v1412, %v1425
      %v1430 = vsub.f32 %v1409, %v1426
      %v1431 = vsub.f32 %v1410, %v1427
      %v1432 = vsub.f32 %v1411, %v1428
      %v1433 = vsub.f32 %v1412, %v1429
      %v1434 = vmul.f32 %v1430, 1.442695
      %v1435 = vpow.pop %v1434
      %v1436 = vmul.f32 %v1431, 1.442695
      %v1437 = vpow.pop %v1436
      %v1438 = vmul.f32 %v1432, 1.442695
      %v1439 = vpow.pop %v1438
      %v1440 = vmul.f32 %v1433, 1.442695
      %v1441 = vpow.pop %v1440
      %1443 = vset.pattern.permute.xlu0 0
      %1444 = vperm.xlu0 %1443, %v1426
      %v1445 = vpop.permute.xlu0 %1444
      %1448 = vset.pattern.permute.xlu0 0
      %1449 = vperm.xlu0 %1448, %v1427
      %v1450 = vpop.permute.xlu0 %1449
      %1453 = vset.pattern.permute.xlu0 0
      %1454 = vperm.xlu0 %1453, %v1428
      %v1455 = vpop.permute.xlu0 %1454
      %1458 = vset.pattern.permute.xlu0 0
      %1459 = vperm.xlu0 %1458, %v1429
      %v1460 = vpop.permute.xlu0 %1459
      %v1462 = vsub.f32 %v1178, %v1445
      %v1463 = vsub.f32 %v1254, %v1450
      %v1464 = vsub.f32 %v1330, %v1455
      %v1465 = vsub.f32 %v1406, %v1460
      %v1466 = vmul.f32 %v1462, 1.442695
      %v1467 = vpow.pop %v1466
      %v1468 = vmul.f32 %v1463, 1.442695
      %v1469 = vpow.pop %v1468
      %v1470 = vmul.f32 %v1464, 1.442695
      %v1471 = vpow.pop %v1470
      %v1472 = vmul.f32 %v1465, 1.442695
      %v1473 = vpow.pop %v1472
      %v1474 = vld [vmem:[#allocation4] sm:$0xff]
      %v1475 = vld [vmem:[#allocation4 + $0x8] sm:$0xff]
      %v1476 = vld [vmem:[#allocation4 + $0x10] sm:$0xff]
      %v1477 = vld [vmem:[#allocation4 + $0x18] sm:$0xff]
      %v1478 = vmul.f32 %v1435, %v1474
      %v1479 = vmul.f32 %v1437, %v1475
      %v1480 = vmul.f32 %v1439, %v1476
      %v1481 = vmul.f32 %v1441, %v1477
      %v1482 = vsel %vm1413, %v1467, 0.0
      %1483 = vadd.xlane.f32.xlu0 %v1482
      %v1484 = vpop.xlane.xlu0 %1483
      %v1485 = vsel %vm1413, %v1469, 0.0
      %1486 = vadd.xlane.f32.xlu0 %v1485
      %v1487 = vpop.xlane.xlu0 %1486
      %v1488 = vsel %vm1413, %v1471, 0.0
      %1489 = vadd.xlane.f32.xlu0 %v1488
      %v1490 = vpop.xlane.xlu0 %1489
      %v1491 = vsel %vm1413, %v1473, 0.0
      %1492 = vadd.xlane.f32.xlu0 %v1491
      %v1493 = vpop.xlane.xlu0 %1492
      %v1494 = vadd.f32 %v1478, %v1484
      %v1495 = vadd.f32 %v1479, %v1487
      %v1496 = vadd.f32 %v1480, %v1490
      %v1497 = vadd.f32 %v1481, %v1493
      %vm1498 = vcmask 7168
      %1499 = vst.msk [vmem:[#allocation4] sm:$0xff] %vm1498, %v1494
      %1500 = vst.msk [vmem:[#allocation4 + $0x8] sm:$0xff] %vm1498, %v1495
      %1501 = vst.msk [vmem:[#allocation4 + $0x10] sm:$0xff] %vm1498, %v1496
      %1502 = vst.msk [vmem:[#allocation4 + $0x18] sm:$0xff] %vm1498, %v1497
      %v1503 = vld [vmem:[#allocation5] sm:$0xff]
      %v1504 = vld [vmem:[#allocation5 + $0x8] sm:$0xff]
      %v1505 = vld [vmem:[#allocation5 + $0x10] sm:$0xff]
      %v1506 = vld [vmem:[#allocation5 + $0x18] sm:$0xff]
      %1508 = vset.pattern.permute.xlu0 0
      %1509 = vperm.xlu0 %1508, %v1435
      %v1510 = vpop.permute.xlu0 %1509
      %1513 = vset.pattern.permute.xlu0 0
      %1514 = vperm.xlu0 %1513, %v1437
      %v1515 = vpop.permute.xlu0 %1514
      %1518 = vset.pattern.permute.xlu0 0
      %1519 = vperm.xlu0 %1518, %v1439
      %v1520 = vpop.permute.xlu0 %1519
      %1523 = vset.pattern.permute.xlu0 0
      %1524 = vperm.xlu0 %1523, %v1441
      %v1525 = vpop.permute.xlu0 %1524
      %v1527 = vmul.f32 %v1510, %v1503
      %v1528 = vmul.f32 %v1515, %v1504
      %v1529 = vmul.f32 %v1520, %v1505
      %v1530 = vmul.f32 %v1525, %v1506
      %v1532 = vsel %vm1413, %v1467, 0
      %1534 = vmatprep.subr.mxu0 0.0
      %1535 = vmatpush1.msra.mxu0 %v1096
      %1536 = vmatprep.subr.mxu0 0.0
      %1537 = vmatpush1.msra.mxu0 0.0
      %1538 = vmatprep.subr.mxu0 0.0
      %1539 = vmatpush1.msra.mxu0 0.0
      %1540 = vmatprep.subr.mxu0 0.0
      %1541 = vmatpush1.msra.mxu0 0.0
      %1542 = vmatprep.subr.mxu0 0.0
      %1543 = vmatpush1.msra.mxu0 0.0
      %1544 = vmatprep.subr.mxu0 0.0
      %1545 = vmatpush1.msra.mxu0 0.0
      %1546 = vmatprep.subr.mxu0 0.0
      %1547 = vmatpush1.msra.mxu0 0.0
      %1548 = vmatprep.subr.mxu0 0.0
      %1549 = vmatpush1.msra.mxu0 0.0
      %1550 = vmatprep.subr.mxu0 0.0
      %1551 = vmatpush1.msra.mxu0 0.0
      %1552 = vmatprep.subr.mxu0 0.0
      %1553 = vmatpush1.msra.mxu0 0.0
      %1554 = vmatprep.subr.mxu0 0.0
      %1555 = vmatpush1.msra.mxu0 0.0
      %1556 = vmatprep.subr.mxu0 0.0
      %1557 = vmatpush1.msra.mxu0 0.0
      %1558 = vmatprep.subr.mxu0 0.0
      %1559 = vmatpush1.msra.mxu0 0.0
      %1560 = vmatprep.subr.mxu0 0.0
      %1561 = vmatpush1.msra.mxu0 0.0
      %1562 = vmatprep.subr.mxu0 0.0
      %1563 = vmatpush1.msra.mxu0 0.0
      %1564 = vmatprep.subr.mxu0 0.0
      %1565 = vmatpush1.msra.mxu0 0.0
      %1566 = vmatprep.subr.mxu0 0.0
      %1567 = vmatpush1.msra.mxu0 0.0
      %1568 = vmatprep.subr.mxu0 0.0
      %1569 = vmatpush1.msra.mxu0 0.0
      %1570 = vmatprep.subr.mxu0 0.0
      %1571 = vmatpush1.msra.mxu0 0.0
      %1572 = vmatprep.subr.mxu0 0.0
      %1573 = vmatpush1.msra.mxu0 0.0
      %1574 = vmatprep.subr.mxu0 0.0
      %1575 = vmatpush1.msra.mxu0 0.0
      %1576 = vmatprep.subr.mxu0 0.0
      %1577 = vmatpush1.msra.mxu0 0.0
      %1578 = vmatprep.subr.mxu0 0.0
      %1579 = vmatpush1.msra.mxu0 0.0
      %1580 = vmatprep.subr.mxu0 0.0
      %1581 = vmatpush1.msra.mxu0 0.0
      %1582 = vmatprep.subr.mxu0 0.0
      %1583 = vmatpush1.msra.mxu0 0.0
      %1584 = vmatprep.subr.mxu0 0.0
      %1585 = vmatpush1.msra.mxu0 0.0
      %1586 = vmatprep.subr.mxu0 0.0
      %1587 = vmatpush1.msra.mxu0 0.0
      %1588 = vmatprep.subr.mxu0 0.0
      %1589 = vmatpush1.msra.mxu0 0.0
      %1590 = vmatprep.subr.mxu0 0.0
      %1591 = vmatpush1.msra.mxu0 0.0
      %1592 = vmatprep.subr.mxu0 0.0
      %1593 = vmatpush1.msra.mxu0 0.0
      %1594 = vmatprep.subr.mxu0 0.0
      %1595 = vmatpush1.msra.mxu0 0.0
      %1596 = vmatprep.subr.mxu0 0.0
      %1597 = vmatpush1.msra.mxu0 0.0
      %1598 = vmatprep.mubr.f32.mxu0 0.0
      %1599 = vmatmul.mubr.f32.gmra.mrb[0].mxu0 %v1532
      %v1600 = vpop.f32.mrb[0].mxu0
      %v1601 = vadd.f32 0.0, %v1600
      %v1602 = vpop.f32.mrb[0].mxu0
      %1603 = vdwg.mxu0
      %v1605 = vsel %vm1413, %v1469, 0
      %1607 = vmatprep.subr.mxu0 0.0
      %1608 = vmatpush1.msra.mxu0 %v1097
      %1609 = vmatprep.subr.mxu0 0.0
      %1610 = vmatpush1.msra.mxu0 0.0
      %1611 = vmatprep.subr.mxu0 0.0
      %1612 = vmatpush1.msra.mxu0 0.0
      %1613 = vmatprep.subr.mxu0 0.0
      %1614 = vmatpush1.msra.mxu0 0.0
      %1615 = vmatprep.subr.mxu0 0.0
      %1616 = vmatpush1.msra.mxu0 0.0
      %1617 = vmatprep.subr.mxu0 0.0
      %1618 = vmatpush1.msra.mxu0 0.0
      %1619 = vmatprep.subr.mxu0 0.0
      %1620 = vmatpush1.msra.mxu0 0.0
      %1621 = vmatprep.subr.mxu0 0.0
      %1622 = vmatpush1.msra.mxu0 0.0
      %1623 = vmatprep.subr.mxu0 0.0
      %1624 = vmatpush1.msra.mxu0 0.0
      %1625 = vmatprep.subr.mxu0 0.0
      %1626 = vmatpush1.msra.mxu0 0.0
      %1627 = vmatprep.subr.mxu0 0.0
      %1628 = vmatpush1.msra.mxu0 0.0
      %1629 = vmatprep.subr.mxu0 0.0
      %1630 = vmatpush1.msra.mxu0 0.0
      %1631 = vmatprep.subr.mxu0 0.0
      %1632 = vmatpush1.msra.mxu0 0.0
      %1633 = vmatprep.subr.mxu0 0.0
      %1634 = vmatpush1.msra.mxu0 0.0
      %1635 = vmatprep.subr.mxu0 0.0
      %1636 = vmatpush1.msra.mxu0 0.0
      %1637 = vmatprep.subr.mxu0 0.0
      %1638 = vmatpush1.msra.mxu0 0.0
      %1639 = vmatprep.subr.mxu0 0.0
      %1640 = vmatpush1.msra.mxu0 0.0
      %1641 = vmatprep.subr.mxu0 0.0
      %1642 = vmatpush1.msra.mxu0 0.0
      %1643 = vmatprep.subr.mxu0 0.0
      %1644 = vmatpush1.msra.mxu0 0.0
      %1645 = vmatprep.subr.mxu0 0.0
      %1646 = vmatpush1.msra.mxu0 0.0
      %1647 = vmatprep.subr.mxu0 0.0
      %1648 = vmatpush1.msra.mxu0 0.0
      %1649 = vmatprep.subr.mxu0 0.0
      %1650 = vmatpush1.msra.mxu0 0.0
      %1651 = vmatprep.subr.mxu0 0.0
      %1652 = vmatpush1.msra.mxu0 0.0
      %1653 = vmatprep.subr.mxu0 0.0
      %1654 = vmatpush1.msra.mxu0 0.0
      %1655 = vmatprep.subr.mxu0 0.0
      %1656 = vmatpush1.msra.mxu0 0.0
      %1657 = vmatprep.subr.mxu0 0.0
      %1658 = vmatpush1.msra.mxu0 0.0
      %1659 = vmatprep.subr.mxu0 0.0
      %1660 = vmatpush1.msra.mxu0 0.0
      %1661 = vmatprep.subr.mxu0 0.0
      %1662 = vmatpush1.msra.mxu0 0.0
      %1663 = vmatprep.subr.mxu0 0.0
      %1664 = vmatpush1.msra.mxu0 0.0
      %1665 = vmatprep.subr.mxu0 0.0
      %1666 = vmatpush1.msra.mxu0 0.0
      %1667 = vmatprep.subr.mxu0 0.0
      %1668 = vmatpush1.msra.mxu0 0.0
      %1669 = vmatprep.subr.mxu0 0.0
      %1670 = vmatpush1.msra.mxu0 0.0
      %1671 = vmatprep.mubr.f32.mxu0 0.0
      %1672 = vmatmul.mubr.f32.gmra.mrb[0].mxu0 %v1605
      %v1673 = vpop.f32.mrb[0].mxu0
      %v1674 = vadd.f32 0.0, %v1673
      %v1675 = vpop.f32.mrb[0].mxu0
      %1676 = vdwg.mxu0
      %v1678 = vsel %vm1413, %v1471, 0
      %1680 = vmatprep.subr.mxu0 0.0
      %1681 = vmatpush1.msra.mxu0 %v1098
      %1682 = vmatprep.subr.mxu0 0.0
      %1683 = vmatpush1.msra.mxu0 0.0
      %1684 = vmatprep.subr.mxu0 0.0
      %1685 = vmatpush1.msra.mxu0 0.0
      %1686 = vmatprep.subr.mxu0 0.0
      %1687 = vmatpush1.msra.mxu0 0.0
      %1688 = vmatprep.subr.mxu0 0.0
      %1689 = vmatpush1.msra.mxu0 0.0
      %1690 = vmatprep.subr.mxu0 0.0
      %1691 = vmatpush1.msra.mxu0 0.0
      %1692 = vmatprep.subr.mxu0 0.0
      %1693 = vmatpush1.msra.mxu0 0.0
      %1694 = vmatprep.subr.mxu0 0.0
      %1695 = vmatpush1.msra.mxu0 0.0
      %1696 = vmatprep.subr.mxu0 0.0
      %1697 = vmatpush1.msra.mxu0 0.0
      %1698 = vmatprep.subr.mxu0 0.0
      %1699 = vmatpush1.msra.mxu0 0.0
      %1700 = vmatprep.subr.mxu0 0.0
      %1701 = vmatpush1.msra.mxu0 0.0
      %1702 = vmatprep.subr.mxu0 0.0
      %1703 = vmatpush1.msra.mxu0 0.0
      %1704 = vmatprep.subr.mxu0 0.0
      %1705 = vmatpush1.msra.mxu0 0.0
      %1706 = vmatprep.subr.mxu0 0.0
      %1707 = vmatpush1.msra.mxu0 0.0
      %1708 = vmatprep.subr.mxu0 0.0
      %1709 = vmatpush1.msra.mxu0 0.0
      %1710 = vmatprep.subr.mxu0 0.0
      %1711 = vmatpush1.msra.mxu0 0.0
      %1712 = vmatprep.subr.mxu0 0.0
      %1713 = vmatpush1.msra.mxu0 0.0
      %1714 = vmatprep.subr.mxu0 0.0
      %1715 = vmatpush1.msra.mxu0 0.0
      %1716 = vmatprep.subr.mxu0 0.0
      %1717 = vmatpush1.msra.mxu0 0.0
      %1718 = vmatprep.subr.mxu0 0.0
      %1719 = vmatpush1.msra.mxu0 0.0
      %1720 = vmatprep.subr.mxu0 0.0
      %1721 = vmatpush1.msra.mxu0 0.0
      %1722 = vmatprep.subr.mxu0 0.0
      %1723 = vmatpush1.msra.mxu0 0.0
      %1724 = vmatprep.subr.mxu0 0.0
      %1725 = vmatpush1.msra.mxu0 0.0
      %1726 = vmatprep.subr.mxu0 0.0
      %1727 = vmatpush1.msra.mxu0 0.0
      %1728 = vmatprep.subr.mxu0 0.0
      %1729 = vmatpush1.msra.mxu0 0.0
      %1730 = vmatprep.subr.mxu0 0.0
      %1731 = vmatpush1.msra.mxu0 0.0
      %1732 = vmatprep.subr.mxu0 0.0
      %1733 = vmatpush1.msra.mxu0 0.0
      %1734 = vmatprep.subr.mxu0 0.0
      %1735 = vmatpush1.msra.mxu0 0.0
      %1736 = vmatprep.subr.mxu0 0.0
      %1737 = vmatpush1.msra.mxu0 0.0
      %1738 = vmatprep.subr.mxu0 0.0
      %1739 = vmatpush1.msra.mxu0 0.0
      %1740 = vmatprep.subr.mxu0 0.0
      %1741 = vmatpush1.msra.mxu0 0.0
      %1742 = vmatprep.subr.mxu0 0.0
      %1743 = vmatpush1.msra.mxu0 0.0
      %1744 = vmatprep.mubr.f32.mxu0 0.0
      %1745 = vmatmul.mubr.f32.gmra.mrb[0].mxu0 %v1678
      %v1746 = vpop.f32.mrb[0].mxu0
      %v1747 = vadd.f32 0.0, %v1746
      %v1748 = vpop.f32.mrb[0].mxu0
      %1749 = vdwg.mxu0
      %v1751 = vsel %vm1413, %v1473, 0
      %1753 = vmatprep.subr.mxu0 0.0
      %1754 = vmatpush1.msra.mxu0 %v1099
      %1755 = vmatprep.subr.mxu0 0.0
      %1756 = vmatpush1.msra.mxu0 0.0
      %1757 = vmatprep.subr.mxu0 0.0
      %1758 = vmatpush1.msra.mxu0 0.0
      %1759 = vmatprep.subr.mxu0 0.0
      %1760 = vmatpush1.msra.mxu0 0.0
      %1761 = vmatprep.subr.mxu0 0.0
      %1762 = vmatpush1.msra.mxu0 0.0
      %1763 = vmatprep.subr.mxu0 0.0
      %1764 = vmatpush1.msra.mxu0 0.0
      %1765 = vmatprep.subr.mxu0 0.0
      %1766 = vmatpush1.msra.mxu0 0.0
      %1767 = vmatprep.subr.mxu0 0.0
      %1768 = vmatpush1.msra.mxu0 0.0
      %1769 = vmatprep.subr.mxu0 0.0
      %1770 = vmatpush1.msra.mxu0 0.0
      %1771 = vmatprep.subr.mxu0 0.0
      %1772 = vmatpush1.msra.mxu0 0.0
      %1773 = vmatprep.subr.mxu0 0.0
      %1774 = vmatpush1.msra.mxu0 0.0
      %1775 = vmatprep.subr.mxu0 0.0
      %1776 = vmatpush1.msra.mxu0 0.0
      %1777 = vmatprep.subr.mxu0 0.0
      %1778 = vmatpush1.msra.mxu0 0.0
      %1779 = vmatprep.subr.mxu0 0.0
      %1780 = vmatpush1.msra.mxu0 0.0
      %1781 = vmatprep.subr.mxu0 0.0
      %1782 = vmatpush1.msra.mxu0 0.0
      %1783 = vmatprep.subr.mxu0 0.0
      %1784 = vmatpush1.msra.mxu0 0.0
      %1785 = vmatprep.subr.mxu0 0.0
      %1786 = vmatpush1.msra.mxu0 0.0
      %1787 = vmatprep.subr.mxu0 0.0
      %1788 = vmatpush1.msra.mxu0 0.0
      %1789 = vmatprep.subr.mxu0 0.0
      %1790 = vmatpush1.msra.mxu0 0.0
      %1791 = vmatprep.subr.mxu0 0.0
      %1792 = vmatpush1.msra.mxu0 0.0
      %1793 = vmatprep.subr.mxu0 0.0
      %1794 = vmatpush1.msra.mxu0 0.0
      %1795 = vmatprep.subr.mxu0 0.0
      %1796 = vmatpush1.msra.mxu0 0.0
      %1797 = vmatprep.subr.mxu0 0.0
      %1798 = vmatpush1.msra.mxu0 0.0
      %1799 = vmatprep.subr.mxu0 0.0
      %1800 = vmatpush1.msra.mxu0 0.0
      %1801 = vmatprep.subr.mxu0 0.0
      %1802 = vmatpush1.msra.mxu0 0.0
      %1803 = vmatprep.subr.mxu0 0.0
      %1804 = vmatpush1.msra.mxu0 0.0
      %1805 = vmatprep.subr.mxu0 0.0
      %1806 = vmatpush1.msra.mxu0 0.0
      %1807 = vmatprep.subr.mxu0 0.0
      %1808 = vmatpush1.msra.mxu0 0.0
      %1809 = vmatprep.subr.mxu0 0.0
      %1810 = vmatpush1.msra.mxu0 0.0
      %1811 = vmatprep.subr.mxu0 0.0
      %1812 = vmatpush1.msra.mxu0 0.0
      %1813 = vmatprep.subr.mxu0 0.0
      %1814 = vmatpush1.msra.mxu0 0.0
      %1815 = vmatprep.subr.mxu0 0.0
      %1816 = vmatpush1.msra.mxu0 0.0
      %1817 = vmatprep.mubr.f32.mxu0 0.0
      %1818 = vmatmul.mubr.f32.gmra.mrb[0].mxu0 %v1751
      %v1819 = vpop.f32.mrb[0].mxu0
      %v1820 = vadd.f32 0.0, %v1819
      %v1821 = vpop.f32.mrb[0].mxu0
      %1822 = vdwg.mxu0
      %v1823 = vadd.f32 %v1527, %v1601
      %v1824 = vadd.f32 %v1528, %v1674
      %v1825 = vadd.f32 %v1529, %v1747
      %v1826 = vadd.f32 %v1530, %v1820
      %1827 = vst.msk [vmem:[#allocation5] sm:$0xff] %vm1104, %v1823
      %1828 = vst.msk [vmem:[#allocation5 + $0x8] sm:$0xff] %vm1104, %v1824
      %1829 = vst.msk [vmem:[#allocation5 + $0x10] sm:$0xff] %vm1104, %v1825
      %1830 = vst.msk [vmem:[#allocation5 + $0x18] sm:$0xff] %vm1104, %v1826
      %1831 = vst.msk [vmem:[#allocation3] sm:$0xff] %vm1498, %v1426
      %1832 = vst.msk [vmem:[#allocation3 + $0x8] sm:$0xff] %vm1498, %v1427
      %1833 = vst.msk [vmem:[#allocation3 + $0x10] sm:$0xff] %vm1498, %v1428
      %1834 = vst.msk [vmem:[#allocation3 + $0x18] sm:$0xff] %vm1498, %v1429
      %p1835 = scmp.eq.s32.totalorder %s28, 1
      // Predicated region
      $region65: #{_lambda_.4} parent=59 // pred_check
        %p1836 = pneg %p1835
      $region66: #{_lambda_.4} parent=59 // pred_check_branch
        %1838 = sbr.rel (%p1836) target = $region68
      $region67: #{_lambda_.4} parent=59 // pred_region
        %v1839 = vld [vmem:[#allocation5] sm:$0xff]
        %v1840 = vld [vmem:[#allocation5 + $0x8] sm:$0xff]
        %v1841 = vld [vmem:[#allocation5 + $0x10] sm:$0xff]
        %v1842 = vld [vmem:[#allocation5 + $0x18] sm:$0xff]
        %v1843 = vld [vmem:[#allocation4] sm:$0xff]
        %v1844 = vld [vmem:[#allocation4 + $0x8] sm:$0xff]
        %v1845 = vld [vmem:[#allocation4 + $0x10] sm:$0xff]
        %v1846 = vld [vmem:[#allocation4 + $0x18] sm:$0xff]
        %v1847 = vrcp.pop %v1843
        %v1848 = vrcp.pop %v1844
        %v1849 = vrcp.pop %v1845
        %v1850 = vrcp.pop %v1846
        %v1851 = vmul.f32 %v1843, %v1847
        %v1852 = vmul.f32 %v1844, %v1848
        %v1853 = vmul.f32 %v1845, %v1849
        %v1854 = vmul.f32 %v1846, %v1850
        %v1855 = vsub.f32 2.0, %v1851
        %v1856 = vsub.f32 2.0, %v1852
        %v1857 = vsub.f32 2.0, %v1853
        %v1858 = vsub.f32 2.0, %v1854
        %v1859 = vmul.f32 %v1847, %v1855
        %v1860 = vmul.f32 %v1848, %v1856
        %v1861 = vmul.f32 %v1849, %v1857
        %v1862 = vmul.f32 %v1850, %v1858
        %1864 = vset.pattern.permute.xlu0 0
        %1865 = vperm.xlu0 %1864, %v1859
        %v1866 = vpop.permute.xlu0 %1865
        %1869 = vset.pattern.permute.xlu0 0
        %1870 = vperm.xlu0 %1869, %v1860
        %v1871 = vpop.permute.xlu0 %1870
        %1874 = vset.pattern.permute.xlu0 0
        %1875 = vperm.xlu0 %1874, %v1861
        %v1876 = vpop.permute.xlu0 %1875
        %1879 = vset.pattern.permute.xlu0 0
        %1880 = vperm.xlu0 %1879, %v1862
        %v1881 = vpop.permute.xlu0 %1880
        %v1883 = vmul.f32 %v1839, %v1866
        %v1884 = vmul.f32 %v1840, %v1871
        %v1885 = vmul.f32 %v1841, %v1876
        %v1886 = vmul.f32 %v1842, %v1881
        %v1887 = vcombine.low %v1883, %v1885
        %v1888 = vcombine.high %v1883, %v1885
        %v1890 = vunpack.c.l.s4 1983009808
        %v1891 = vunpack.c.0.s8 %v1890
        %v1892 = vlaneseq
        %v1893 = vshrl.u32 %v1892, 7
        %v1894 = vsub.s32 %v1891, %v1893
        %v1895 = vrot.slane %v1887, %v1894
        %v1897 = vunpack.c.l.s4 1983009808
        %v1898 = vunpack.c.0.s8 %v1897
        %v1899 = vlaneseq
        %v1900 = vshrl.u32 %v1899, 7
        %v1901 = vsub.s32 %v1898, %v1900
        %v1902 = vrot.slane %v1888, %v1901
        %v1903 = vcombine.low %v1884, %v1886
        %v1904 = vcombine.high %v1884, %v1886
        %v1906 = vunpack.c.l.s4 1983009808
        %v1907 = vunpack.c.0.s8 %v1906
        %v1908 = vlaneseq
        %v1909 = vshrl.u32 %v1908, 7
        %v1910 = vsub.s32 %v1907, %v1909
        %v1911 = vrot.slane %v1903, %v1910
        %v1913 = vunpack.c.l.s4 1983009808
        %v1914 = vunpack.c.0.s8 %v1913
        %v1915 = vlaneseq
        %v1916 = vshrl.u32 %v1915, 7
        %v1917 = vsub.s32 %v1914, %v1916
        %v1918 = vrot.slane %v1904, %v1917
        %v1919 = vcombine.low %v1895, %v1911
        %v1920 = vcombine.high %v1895, %v1911
        %v1922 = vunpack.c.l.s4 1934713408
        %v1923 = vunpack.c.0.s8 %v1922
        %v1924 = vlaneseq
        %v1925 = vshrl.u32 %v1924, 7
        %v1926 = vsub.s32 %v1923, %v1925
        %v1927 = vrot.slane %v1919, %v1926
        %v1929 = vunpack.c.l.s4 1934713408
        %v1930 = vunpack.c.0.s8 %v1929
        %v1931 = vlaneseq
        %v1932 = vshrl.u32 %v1931, 7
        %v1933 = vsub.s32 %v1930, %v1932
        %v1934 = vrot.slane %v1920, %v1933
        %v1935 = vcombine.low %v1902, %v1918
        %v1936 = vcombine.high %v1902, %v1918
        %v1938 = vunpack.c.l.s4 1934713408
        %v1939 = vunpack.c.0.s8 %v1938
        %v1940 = vlaneseq
        %v1941 = vshrl.u32 %v1940, 7
        %v1942 = vsub.s32 %v1939, %v1941
        %v1943 = vrot.slane %v1935, %v1942
        %v1945 = vunpack.c.l.s4 1934713408
        %v1946 = vunpack.c.0.s8 %v1945
        %v1947 = vlaneseq
        %v1948 = vshrl.u32 %v1947, 7
        %v1949 = vsub.s32 %v1946, %v1948
        %v1950 = vrot.slane %v1936, %v1949
        %v1951 = vcombine.high %v1927, 0.0
        %v1952 = vcombine.high %v1934, 0.0
        %v1953 = vcombine.high %v1943, 0.0
        %v1954 = vcombine.high %v1950, 0.0
        %v1955 = vcombine.low %v1927, %v1934
        %v1957 = vunpack.c.l.s4 1983009808
        %v1958 = vunpack.c.0.s8 %v1957
        %v1959 = vlaneseq
        %v1960 = vshrl.u32 %v1959, 7
        %v1961 = vsub.s32 %v1958, %v1960
        %v1962 = vrot.slane %v1955, %v1961
        %v1963 = vcombine.low %v1951, %v1952
        %v1965 = vunpack.c.l.s4 1983009808
        %v1966 = vunpack.c.0.s8 %v1965
        %v1967 = vlaneseq
        %v1968 = vshrl.u32 %v1967, 7
        %v1969 = vsub.s32 %v1966, %v1968
        %v1970 = vrot.slane %v1963, %v1969
        %v1971 = vcombine.low %v1943, %v1950
        %v1973 = vunpack.c.l.s4 1983009808
        %v1974 = vunpack.c.0.s8 %v1973
        %v1975 = vlaneseq
        %v1976 = vshrl.u32 %v1975, 7
        %v1977 = vsub.s32 %v1974, %v1976
        %v1978 = vrot.slane %v1971, %v1977
        %v1979 = vcombine.low %v1953, %v1954
        %v1981 = vunpack.c.l.s4 1983009808
        %v1982 = vunpack.c.0.s8 %v1981
        %v1983 = vlaneseq
        %v1984 = vshrl.u32 %v1983, 7
        %v1985 = vsub.s32 %v1982, %v1984
        %v1986 = vrot.slane %v1979, %v1985
        %v1987 = vcombine.low %v1962, %v1970
        %v1988 = vcombine.high %v1962, %v1970
        %v1990 = vunpack.c.l.s4 1934713408
        %v1991 = vunpack.c.0.s8 %v1990
        %v1992 = vlaneseq
        %v1993 = vshrl.u32 %v1992, 7
        %v1994 = vsub.s32 %v1991, %v1993
        %v1995 = vrot.slane %v1987, %v1994
        %v1997 = vunpack.c.l.s4 1934713408
        %v1998 = vunpack.c.0.s8 %v1997
        %v1999 = vlaneseq
        %v2000 = vshrl.u32 %v1999, 7
        %v2001 = vsub.s32 %v1998, %v2000
        %v2002 = vrot.slane %v1988, %v2001
        %v2003 = vcombine.low %v1978, %v1986
        %v2004 = vcombine.high %v1978, %v1986
        %v2006 = vunpack.c.l.s4 1934713408
        %v2007 = vunpack.c.0.s8 %v2006
        %v2008 = vlaneseq
        %v2009 = vshrl.u32 %v2008, 7
        %v2010 = vsub.s32 %v2007, %v2009
        %v2011 = vrot.slane %v2003, %v2010
        %v2013 = vunpack.c.l.s4 1934713408
        %v2014 = vunpack.c.0.s8 %v2013
        %v2015 = vlaneseq
        %v2016 = vshrl.u32 %v2015, 7
        %v2017 = vsub.s32 %v2014, %v2016
        %v2018 = vrot.slane %v2004, %v2017
        %v2019 = vcombine.low %v1995, %v2011
        %v2020 = vcombine.high %v1995, %v2011
        %v2021 = vcombine.low %v2002, %v2018
        %v2022 = vcombine.high %v2002, %v2018
        %2024 = vrot.lane.b32.xlu0 %v2020, 32
        %v2025 = vpop.permute.xlu0 %2024
        %2028 = vrot.lane.b32.xlu0 %v2021, 64
        %v2029 = vpop.permute.xlu0 %2028
        %2032 = vrot.lane.b32.xlu0 %v2022, 96
        %v2033 = vpop.permute.xlu0 %2032
        %v2035 = vsel %vm1104, %v2019, %v2025
        %vm2036 = vcmask 523264
        %v2037 = vsel %vm2036, %v2035, %v2029
        %vm2038 = vcmask 785408
        %v2039 = vsel %vm2038, %v2037, %v2033
        %v2040 = vld [vmem:[%s6] sm:$0xff]
        %v2041 = vld [vmem:[%s6 + $0x8] sm:$0xff]
        %v2042 = vld [vmem:[%s6 + $0x10] sm:$0xff]
        %v2043 = vld [vmem:[%s6 + $0x18] sm:$0xff]
        %v2044 = vld [vmem:[%s6 + $0x20] sm:$0xff]
        %v2045 = vld [vmem:[%s6 + $0x28] sm:$0xff]
        %v2046 = vld [vmem:[%s6 + $0x30] sm:$0xff]
        %v2047 = vld [vmem:[%s6 + $0x38] sm:$0xff]
        %v2048 = vld [vmem:[%s6 + $0x40] sm:$0xff]
        %v2049 = vld [vmem:[%s6 + $0x48] sm:$0xff]
        %v2050 = vld [vmem:[%s6 + $0x50] sm:$0xff]
        %v2051 = vld [vmem:[%s6 + $0x58] sm:$0xff]
        %v2052 = vld [vmem:[%s6 + $0x60] sm:$0xff]
        %v2053 = vld [vmem:[%s6 + $0x68] sm:$0xff]
        %v2054 = vld [vmem:[%s6 + $0x70] sm:$0xff]
        %v2055 = vld [vmem:[%s6 + $0x78] sm:$0xff]
        %v2056 = vld [vmem:[%s7] sm:$0x1]
        %v2058 = vlaneseq
        %v2059 = vshrl.u32 %v2058, 7
        %v2060 = vsub.s32 0, %v2059
        %v2061 = vrot.slane %v2056, %v2060
        %2063 = vmatprep.subr.mxu0 0.0
        %2064 = vmatpush1.msra.mxu0 %v2040
        %2065 = vmatprep.subr.mxu0 0.0
        %2066 = vmatpush1.msra.mxu0 %v2041
        %2067 = vmatprep.subr.mxu0 0.0
        %2068 = vmatpush1.msra.mxu0 %v2042
        %2069 = vmatprep.subr.mxu0 0.0
        %2070 = vmatpush1.msra.mxu0 %v2043
        %2071 = vmatprep.subr.mxu0 0.0
        %2072 = vmatpush1.msra.mxu0 %v2044
        %2073 = vmatprep.subr.mxu0 0.0
        %2074 = vmatpush1.msra.mxu0 %v2045
        %2075 = vmatprep.subr.mxu0 0.0
        %2076 = vmatpush1.msra.mxu0 %v2046
        %2077 = vmatprep.subr.mxu0 0.0
        %2078 = vmatpush1.msra.mxu0 %v2047
        %2079 = vmatprep.subr.mxu0 0.0
        %2080 = vmatpush1.msra.mxu0 %v2048
        %2081 = vmatprep.subr.mxu0 0.0
        %2082 = vmatpush1.msra.mxu0 %v2049
        %2083 = vmatprep.subr.mxu0 0.0
        %2084 = vmatpush1.msra.mxu0 %v2050
        %2085 = vmatprep.subr.mxu0 0.0
        %2086 = vmatpush1.msra.mxu0 %v2051
        %2087 = vmatprep.subr.mxu0 0.0
        %2088 = vmatpush1.msra.mxu0 %v2052
        %2089 = vmatprep.subr.mxu0 0.0
        %2090 = vmatpush1.msra.mxu0 %v2053
        %2091 = vmatprep.subr.mxu0 0.0
        %2092 = vmatpush1.msra.mxu0 %v2054
        %2093 = vmatprep.subr.mxu0 0.0
        %2094 = vmatpush1.msra.mxu0 %v2055
        %2095 = vmatprep.subr.mxu0 0.0
        %2096 = vmatpush1.msra.mxu0 0.0
        %2097 = vmatprep.subr.mxu0 0.0
        %2098 = vmatpush1.msra.mxu0 0.0
        %2099 = vmatprep.subr.mxu0 0.0
        %2100 = vmatpush1.msra.mxu0 0.0
        %2101 = vmatprep.subr.mxu0 0.0
        %2102 = vmatpush1.msra.mxu0 0.0
        %2103 = vmatprep.subr.mxu0 0.0
        %2104 = vmatpush1.msra.mxu0 0.0
        %2105 = vmatprep.subr.mxu0 0.0
        %2106 = vmatpush1.msra.mxu0 0.0
        %2107 = vmatprep.subr.mxu0 0.0
        %2108 = vmatpush1.msra.mxu0 0.0
        %2109 = vmatprep.subr.mxu0 0.0
        %2110 = vmatpush1.msra.mxu0 0.0
        %2111 = vmatprep.subr.mxu0 0.0
        %2112 = vmatpush1.msra.mxu0 0.0
        %2113 = vmatprep.subr.mxu0 0.0
        %2114 = vmatpush1.msra.mxu0 0.0
        %2115 = vmatprep.subr.mxu0 0.0
        %2116 = vmatpush1.msra.mxu0 0.0
        %2117 = vmatprep.subr.mxu0 0.0
        %2118 = vmatpush1.msra.mxu0 0.0
        %2119 = vmatprep.subr.mxu0 0.0
        %2120 = vmatpush1.msra.mxu0 0.0
        %2121 = vmatprep.subr.mxu0 0.0
        %2122 = vmatpush1.msra.mxu0 0.0
        %2123 = vmatprep.subr.mxu0 0.0
        %2124 = vmatpush1.msra.mxu0 0.0
        %2125 = vmatprep.subr.mxu0 0.0
        %2126 = vmatpush1.msra.mxu0 0.0
        %2127 = vmatprep.mubr.f32.mxu0 0.0
        %2128 = vmatmul.mubr.f32.gmra.mrb[0].mxu0 %v2039
        %v2129 = vpop.f32.mrb[0].mxu0
        %v2130 = vadd.f32 %v2061, %v2129
        %v2131 = vpop.f32.mrb[0].mxu0
        %2132 = vdwg.mxu0
        %v2133 = vadd.f32 %v429, %v2130
        %v2134 = vld [vmem:[%s8] sm:$0x1]
        %v2135 = vld [vmem:[%s9] sm:$0x1]
        %2136 = vadd.xlane.f32.xlu0 %v2133
        %v2137 = vpop.xlane.xlu0 %2136
        %v2138 = vrcp.pop 128.0
        %v2139 = vmul.f32 %v2137, %v2138
        %v2140 = vsub.f32 %v2133, %v2139
        %v2141 = vmul.f32 %v2140, %v2140
        %2142 = vadd.xlane.f32.xlu0 %v2141
        %v2143 = vpop.xlane.xlu0 %2142
        %v2144 = vmul.f32 %v2143, 0.007874016
        %v2145 = vrsqrt.pop %v2144
        %v2146 = vmul.f32 %v2144, %v2145
        %vm2147 = vcmp.eq.f32.partialorder %v2144, inf
        %v2148 = vsel %vm2147, %v2144, %v2146
        %vm2149 = vcmp.eq.f32.partialorder %v2144, 0.0
        %v2150 = vand.u32 %v2144, 2147483648
        %v2151 = vsel %vm2149, %v2150, %v2148
        %v2153 = vlaneseq
        %v2154 = vshrl.u32 %v2153, 7
        %v2155 = vsub.s32 0, %v2154
        %v2156 = vrot.slane %v2134, %v2155
        %v2158 = vmul.f32 %v2156, %v2140
        %v2159 = vadd.f32 %v2151, 1e-05
        %v2160 = vrcp.pop %v2159
        %v2161 = vmul.f32 %v2159, %v2160
        %v2162 = vsub.f32 2.0, %v2161
        %v2163 = vmul.f32 %v2160, %v2162
        %v2164 = vmul.f32 %v2158, %v2163
        %v2166 = vlaneseq
        %v2167 = vshrl.u32 %v2166, 7
        %v2168 = vsub.s32 0, %v2167
        %v2169 = vrot.slane %v2135, %v2168
        %v2171 = vadd.f32 %v2164, %v2169
        %2172 = vst [vmem:[%s428] sm:$0xff] %v2171
      $region68: #{_lambda_.4} parent=59 // pred_fallthru
        _
      %p2173 = scmp.lt.s32.totalorder %s26, 1
      %s2174 = scalar_select %p2173, %s26, 1
      %p2175 = scmp.lt.s32.totalorder %s27, 1
      %s2176 = scalar_select %p2175, %s27, 1
      %s2177 = smul.addr %s2174, 2
      %s2178 = sadd.s32 %s2176, %s2177
      %s2179 = smul.addr %s2178, 8
      %s2180 = scalar_lea.vmem %s10, %s2179
      // Predicated region
      $region69: #{_lambda_.4} parent=59 // pred_check
        %p2181 = pneg %p284
      $region70: #{_lambda_.4} parent=59 // pred_check_branch
        %2183 = sbr.rel (%p2181) target = $region72
      $region71: #{_lambda_.4} parent=59 // pred_region
        _
      $region72: #{_lambda_.4} parent=59 // pred_fallthru
        _
    $region60: #{_lambda_.4} parent=5 // pred_fallthru
      _
    %p2184 = scmp.le.s32.totalorder 2, %s16
    // Predicated region
    $region73: #{_lambda_.4} parent=5 // pred_check
      %p2185 = pneg %p2184
    $region74: #{_lambda_.4} parent=5 // pred_check_branch
      %2187 = sbr.rel (%p2185) target = $region76
    $region75: #{_lambda_.4} parent=5 // pred_region
      %s2188 = ssub.s32 %s16, 2
      // Predicated region
      $region77: #{_lambda_.4} parent=75 // pred_check
        %p2189 = pneg %p290
      $region78: #{_lambda_.4} parent=75 // pred_check_branch
        %2191 = sbr.rel (%p2189) target = $region80
      $region79: #{_lambda_.4} parent=75 // pred_region
        %p2192 = scmp.lt.s32.totalorder %s29, 1
        %s2193 = scalar_select %p2192, %s29, 1
        %p2194 = scmp.lt.s32.totalorder %s30, 1
        %s2195 = scalar_select %p2194, %s30, 1
        %s2196 = smul.addr %s2193, 2
        %s2197 = sadd.s32 %s2195, %s2196
        %s2198 = smul.addr %s2197, 8
        %s2199 = scalar_lea.vmem %s10, %s2198
      $region80: #{_lambda_.4} parent=75 // pred_fallthru
        _
    $region76: #{_lambda_.4} parent=5 // pred_fallthru
      _
  $region6: #{_lambda_.4} parent=0 // loop_footer
    %s20 = sadd.s32 1, %s16
  $region7: #{_lambda_.4} parent=0 // loop_footer_branch
    %15 = sbr.rel target = $region3
  $region8: #{_lambda_.4} parent=0 // loop_exit
    _

// kernel: _lambda_.3
$region0: #{_lambda_.3}
  #allocation0 [shape = 'u32[]', space=smem, size = 0x4, offset = 0x4, fixed_abs, tag = 'smem constant byte address 0x4 - core index']
  #allocation1 [shape = 'u32[144,128]{1,0:T(1,128)}', space=vmem, size = 0x12000, scoped, tag = 'internal scratch']
  #allocation2 [shape = 'f32[4,8,32]{2,1,0:T(8,128)}', space=vmem, size = 0x4000, scoped, tag = 'scratch operand']
  #allocation3 [shape = 'f32[4,8,1]{2,1,0:T(8,128)}', space=vmem, size = 0x4000, scoped, tag = 'scratch operand']
  #allocation4 [shape = 'f32[4,8,1]{2,1,0:T(8,128)}', space=vmem, size = 0x4000, scoped, tag = 'scratch operand']
  #allocation5 [shape = 'f32[4,8,32]{2,1,0:T(8,128)}', space=vmem, size = 0x4000, scoped, tag = 'scratch operand']
  %s0 = inlined_call_operand.hbm [shape: f32[2,16,128], index: 0, kind: input, shape index: {}, may-alias: {0,1}]
  %s1 = inlined_call_operand.hbm [shape: f32[2,16,128], index: 1, kind: input, shape index: {}, may-alias: {0,1}]
  %s2 = inlined_call_operand.hbm [shape: f32[128,128], index: 2, kind: input, shape index: {}]
  %s3 = inlined_call_operand.vmem [shape: f32[1,128], index: 3, kind: input, shape index: {}]
  %s4 = inlined_call_operand.hbm [shape: f32[128,256], index: 4, kind: input, shape index: {}]
  %s5 = inlined_call_operand.vmem [shape: f32[1,256], index: 5, kind: input, shape index: {}]
  %s6 = inlined_call_operand.hbm [shape: f32[128,128], index: 6, kind: input, shape index: {}]
  %s7 = inlined_call_operand.vmem [shape: f32[1,128], index: 7, kind: input, shape index: {}]
  %s8 = inlined_call_operand.vmem [shape: f32[1,128], index: 8, kind: input, shape index: {}]
  %s9 = inlined_call_operand.vmem [shape: f32[1,128], index: 9, kind: input, shape index: {}]
  %s10 = inlined_call_operand.vmem [shape: f32[2,16,128], index: 10, kind: output, shape index: {}]
  %s11 = sld [smem:[#allocation0]]
  $region101: #{_lambda_.3} parent=0
    _
  %s13 = ssub.s32 1, %s11
  %s14 = scalar_select 0, %s13, %s11
  $region1: #{_lambda_.3} parent=0
    #allocation6 [shape = 'u8[8192]{0}', space=vmem, size = 0x2000, scoped, tag = 'input window, operand 0']
    #allocation7 [shape = 's32[2]{0}', space=sflag, size = 0x8, scoped, tag = 'scoped memory for _lambda_.3']
    #allocation8 [shape = 'u8[8192]{0}', space=vmem, size = 0x2000, scoped, tag = 'input window, operand 1']
    #allocation9 [shape = 's32[2]{0}', space=sflag, size = 0x8, scoped, tag = 'scoped memory for _lambda_.3']
    #allocation10 [shape = 'u8[65536]{0}', space=vmem, size = 0x10000, scoped, tag = 'input window, operand 2, single buffered']
    #allocation11 [shape = 'u8[131072]{0}', space=vmem, size = 0x20000, scoped, tag = 'input window, operand 4, single buffered']
    #allocation12 [shape = 's32[1]{0}', space=sflag, size = 0x4, scoped, tag = 'scoped memory for _lambda_.3']
    #allocation13 [shape = 'u8[65536]{0}', space=vmem, size = 0x10000, scoped, tag = 'input window, operand 6, single buffered']
    %15 = vsyncpa [#allocation7], 0
    %s16 = scalar_lea.sflag [#allocation7], 1
    %17 = vsyncpa %s16, 0
    %18 = vsyncpa [#allocation9], 0
    %s19 = scalar_lea.sflag [#allocation9], 1
    %20 = vsyncpa %s19, 0
    %21 = vsyncpa [#allocation12], 0
    loop: start=0, step=1, limit=10
    $region2: #{_lambda_.3} parent=1 // loop_pre_header
      _
    $region3: #{_lambda_.3} parent=1 // loop_header
      %s23 = sphi 0, %s27
      %p24 = scmp.ge.s32.totalorder %s23, 10
      %s30 = sphi 0, %s49
      %s31 = sphi 0, %s45
      %s32 = sphi 0, %s41
      %s33 = sphi 0, %s30
      %s34 = sphi 0, %s31
      %s35 = sphi 0, %s32
      %s36 = sphi 0, %s33
      %s37 = sphi 0, %s34
      %s38 = sphi 0, %s35
      %s54 = sphi 0, %s56
      %s57 = sphi 0, %s54
      %s58 = sphi 0, %s57
      %s74 = sphi 0, %s58
      %s82 = sphi 0, %s84
      %s85 = sphi 0, %s82
      %s86 = sphi 0, %s85
      %s102 = sphi 0, %s86
      %s106 = sphi 0, %s106
      %s108 = sphi 0, %s106
      %s109 = sphi 0, %s108
      %s123 = sphi 0, %s109
      %s127 = sphi 0, %s127
      %s129 = sphi 0, %s127
      %s130 = sphi 0, %s129
      %s144 = sphi 0, %s130
      %s148 = sphi 0, %s148
      %s150 = sphi 0, %s148
      %s151 = sphi 0, %s150
      %s165 = sphi 0, %s151
      %s169 = sphi 0, %s169
      %s171 = sphi 0, %s169
      %s172 = sphi 0, %s171
      %s186 = sphi 0, %s172
      %s190 = sphi 0, %s190
      %s192 = sphi 0, %s190
      %s193 = sphi 0, %s192
      %s207 = sphi 0, %s193
      %s211 = sphi 0, %s211
      %s213 = sphi 0, %s211
      %s214 = sphi 0, %s213
      %s228 = sphi 0, %s214
      %s232 = sphi 0, %s232
      %s234 = sphi 0, %s232
      %s235 = sphi 0, %s234
      %s249 = sphi 0, %s235
      %s253 = sphi 0, %s253
      %s255 = sphi 0, %s253
      %s256 = sphi 0, %s255
      %s270 = sphi 0, %s256
      %s278 = sphi 0, %s280
      %s281 = sphi 0, %s278
      %s282 = sphi 0, %s281
      %s298 = sphi 0, %s282
    $region4: #{_lambda_.3} parent=1 // loop_header_branch
      %26 = sbr.rel (%p24) target = $region8
    $region5: #{_lambda_.3} parent=1 // loop_body
      %s28 = ssub.s32 %s23, 1
      %s29 = ssub.s32 %s23, 2
      %s39 = sadd.s32 1, %s32
      %p40 = scmp.ge.s32.totalorder %s39, 2
      %s41 = scalar_select %p40, 0, %s39
      %s42 = sadd.s32 1, %s31
      %s43 = scalar_select %p40, %s42, %s31
      %p44 = scmp.ge.s32.totalorder %s43, 2
      %s45 = scalar_select %p44, 0, %s43
      %s46 = sadd.s32 1, %s30
      %s47 = scalar_select %p44, %s46, %s30
      %p48 = scmp.ge.s32.totalorder %s47, 2
      %s49 = scalar_select %p48, 0, %s47
      %s50 = ssub.s32 %s30, %s49
      %s51 = ssub.s32 %s31, %s45
      %s52 = sor.u32 %s50, %s51
      %p53 = scmp.eq.s32.totalorder %s52, 0
      %s55 = sadd.s32 %s54, 1
      %s56 = scalar_select %p53, %s54, %s55
      %p59 = pneg %p53
      %p60 = scmp.eq.s32.totalorder %s23, 7
      %p61 = por %p59, %p60
      %p62 = scmp.ne.s32.totalorder %s54, %s57
      %p63 = scmp.eq.s32.totalorder %s23, 0
      %p64 = por %p62, %p63
      %p65 = scmp.ne.s32.totalorder %s54, %s57
      %p66 = scmp.eq.s32.totalorder %s28, 7
      %p67 = por %p65, %p66
      %p68 = scmp.ne.s32.totalorder %s57, %s58
      %p69 = scmp.eq.s32.totalorder %s28, 0
      %p70 = por %p68, %p69
      %p71 = scmp.ne.s32.totalorder %s57, %s58
      %p72 = scmp.eq.s32.totalorder %s29, 7
      %p73 = por %p71, %p72
      %p75 = scmp.ne.s32.totalorder %s58, %s74
      %p76 = scmp.eq.s32.totalorder %s29, 0
      %p77 = por %p75, %p76
      %s78 = ssub.s32 %s30, %s49
      %s79 = ssub.s32 %s32, %s41
      %s80 = sor.u32 %s78, %s79
      %p81 = scmp.eq.s32.totalorder %s80, 0
      %s83 = sadd.s32 %s82, 1
      %s84 = scalar_select %p81, %s82, %s83
      %p87 = pneg %p81
      %p88 = scmp.eq.s32.totalorder %s23, 7
      %p89 = por %p87, %p88
      %p90 = scmp.ne.s32.totalorder %s82, %s85
      %p91 = scmp.eq.s32.totalorder %s23, 0
      %p92 = por %p90, %p91
      %p93 = scmp.ne.s32.totalorder %s82, %s85
      %p94 = scmp.eq.s32.totalorder %s28, 7
      %p95 = por %p93, %p94
      %p96 = scmp.ne.s32.totalorder %s85, %s86
      %p97 = scmp.eq.s32.totalorder %s28, 0
      %p98 = por %p96, %p97
      %p99 = scmp.ne.s32.totalorder %s85, %s86
      %p100 = scmp.eq.s32.totalorder %s29, 7
      %p101 = por %p99, %p100
      %p103 = scmp.ne.s32.totalorder %s86, %s102
      %p104 = scmp.eq.s32.totalorder %s29, 0
      %p105 = por %p103, %p104
      %s107 = sadd.s32 %s106, 1
      %p110 = scmp.eq.s32.totalorder %s23, 7
      %p111 = scmp.ne.s32.totalorder %s106, %s108
      %p112 = scmp.eq.s32.totalorder %s23, 0
      %p113 = por %p111, %p112
      %p114 = scmp.ne.s32.totalorder %s106, %s108
      %p115 = scmp.eq.s32.totalorder %s28, 7
      %p116 = por %p114, %p115
      %p117 = scmp.ne.s32.totalorder %s108, %s109
      %p118 = scmp.eq.s32.totalorder %s28, 0
      %p119 = por %p117, %p118
      %p120 = scmp.ne.s32.totalorder %s108, %s109
      %p121 = scmp.eq.s32.totalorder %s29, 7
      %p122 = por %p120, %p121
      %p124 = scmp.ne.s32.totalorder %s109, %s123
      %p125 = scmp.eq.s32.totalorder %s29, 0
      %p126 = por %p124, %p125
      %s128 = sadd.s32 %s127, 1
      %p131 = scmp.eq.s32.totalorder %s23, 7
      %p132 = scmp.ne.s32.totalorder %s127, %s129
      %p133 = scmp.eq.s32.totalorder %s23, 0
      %p134 = por %p132, %p133
      %p135 = scmp.ne.s32.totalorder %s127, %s129
      %p136 = scmp.eq.s32.totalorder %s28, 7
      %p137 = por %p135, %p136
      %p138 = scmp.ne.s32.totalorder %s129, %s130
      %p139 = scmp.eq.s32.totalorder %s28, 0
      %p140 = por %p138, %p139
      %p141 = scmp.ne.s32.totalorder %s129, %s130
      %p142 = scmp.eq.s32.totalorder %s29, 7
      %p143 = por %p141, %p142
      %p145 = scmp.ne.s32.totalorder %s130, %s144
      %p146 = scmp.eq.s32.totalorder %s29, 0
      %p147 = por %p145, %p146
      %s149 = sadd.s32 %s148, 1
      %p152 = scmp.eq.s32.totalorder %s23, 7
      %p153 = scmp.ne.s32.totalorder %s148, %s150
      %p154 = scmp.eq.s32.totalorder %s23, 0
      %p155 = por %p153, %p154
      %p156 = scmp.ne.s32.totalorder %s148, %s150
      %p157 = scmp.eq.s32.totalorder %s28, 7
      %p158 = por %p156, %p157
      %p159 = scmp.ne.s32.totalorder %s150, %s151
      %p160 = scmp.eq.s32.totalorder %s28, 0
      %p161 = por %p159, %p160
      %p162 = scmp.ne.s32.totalorder %s150, %s151
      %p163 = scmp.eq.s32.totalorder %s29, 7
      %p164 = por %p162, %p163
      %p166 = scmp.ne.s32.totalorder %s151, %s165
      %p167 = scmp.eq.s32.totalorder %s29, 0
      %p168 = por %p166, %p167
      %s170 = sadd.s32 %s169, 1
      %p173 = scmp.eq.s32.totalorder %s23, 7
      %p174 = scmp.ne.s32.totalorder %s169, %s171
      %p175 = scmp.eq.s32.totalorder %s23, 0
      %p176 = por %p174, %p175
      %p177 = scmp.ne.s32.totalorder %s169, %s171
      %p178 = scmp.eq.s32.totalorder %s28, 7
      %p179 = por %p177, %p178
      %p180 = scmp.ne.s32.totalorder %s171, %s172
      %p181 = scmp.eq.s32.totalorder %s28, 0
      %p182 = por %p180, %p181
      %p183 = scmp.ne.s32.totalorder %s171, %s172
      %p184 = scmp.eq.s32.totalorder %s29, 7
      %p185 = por %p183, %p184
      %p187 = scmp.ne.s32.totalorder %s172, %s186
      %p188 = scmp.eq.s32.totalorder %s29, 0
      %p189 = por %p187, %p188
      %s191 = sadd.s32 %s190, 1
      %p194 = scmp.eq.s32.totalorder %s23, 7
      %p195 = scmp.ne.s32.totalorder %s190, %s192
      %p196 = scmp.eq.s32.totalorder %s23, 0
      %p197 = por %p195, %p196
      %p198 = scmp.ne.s32.totalorder %s190, %s192
      %p199 = scmp.eq.s32.totalorder %s28, 7
      %p200 = por %p198, %p199
      %p201 = scmp.ne.s32.totalorder %s192, %s193
      %p202 = scmp.eq.s32.totalorder %s28, 0
      %p203 = por %p201, %p202
      %p204 = scmp.ne.s32.totalorder %s192, %s193
      %p205 = scmp.eq.s32.totalorder %s29, 7
      %p206 = por %p204, %p205
      %p208 = scmp.ne.s32.totalorder %s193, %s207
      %p209 = scmp.eq.s32.totalorder %s29, 0
      %p210 = por %p208, %p209
      %s212 = sadd.s32 %s211, 1
      %p215 = scmp.eq.s32.totalorder %s23, 7
      %p216 = scmp.ne.s32.totalorder %s211, %s213
      %p217 = scmp.eq.s32.totalorder %s23, 0
      %p218 = por %p216, %p217
      %p219 = scmp.ne.s32.totalorder %s211, %s213
      %p220 = scmp.eq.s32.totalorder %s28, 7
      %p221 = por %p219, %p220
      %p222 = scmp.ne.s32.totalorder %s213, %s214
      %p223 = scmp.eq.s32.totalorder %s28, 0
      %p224 = por %p222, %p223
      %p225 = scmp.ne.s32.totalorder %s213, %s214
      %p226 = scmp.eq.s32.totalorder %s29, 7
      %p227 = por %p225, %p226
      %p229 = scmp.ne.s32.totalorder %s214, %s228
      %p230 = scmp.eq.s32.totalorder %s29, 0
      %p231 = por %p229, %p230
      %s233 = sadd.s32 %s232, 1
      %p236 = scmp.eq.s32.totalorder %s23, 7
      %p237 = scmp.ne.s32.totalorder %s232, %s234
      %p238 = scmp.eq.s32.totalorder %s23, 0
      %p239 = por %p237, %p238
      %p240 = scmp.ne.s32.totalorder %s232, %s234
      %p241 = scmp.eq.s32.totalorder %s28, 7
      %p242 = por %p240, %p241
      %p243 = scmp.ne.s32.totalorder %s234, %s235
      %p244 = scmp.eq.s32.totalorder %s28, 0
      %p245 = por %p243, %p244
      %p246 = scmp.ne.s32.totalorder %s234, %s235
      %p247 = scmp.eq.s32.totalorder %s29, 7
      %p248 = por %p246, %p247
      %p250 = scmp.ne.s32.totalorder %s235, %s249
      %p251 = scmp.eq.s32.totalorder %s29, 0
      %p252 = por %p250, %p251
      %s254 = sadd.s32 %s253, 1
      %p257 = scmp.eq.s32.totalorder %s23, 7
      %p258 = scmp.ne.s32.totalorder %s253, %s255
      %p259 = scmp.eq.s32.totalorder %s23, 0
      %p260 = por %p258, %p259
      %p261 = scmp.ne.s32.totalorder %s253, %s255
      %p262 = scmp.eq.s32.totalorder %s28, 7
      %p263 = por %p261, %p262
      %p264 = scmp.ne.s32.totalorder %s255, %s256
      %p265 = scmp.eq.s32.totalorder %s28, 0
      %p266 = por %p264, %p265
      %p267 = scmp.ne.s32.totalorder %s255, %s256
      %p268 = scmp.eq.s32.totalorder %s29, 7
      %p269 = por %p267, %p268
      %p271 = scmp.ne.s32.totalorder %s256, %s270
      %p272 = scmp.eq.s32.totalorder %s29, 0
      %p273 = por %p271, %p272
      %s274 = ssub.s32 %s30, %s49
      %s275 = ssub.s32 %s31, %s45
      %s276 = sor.u32 %s274, %s275
      %p277 = scmp.eq.s32.totalorder %s276, 0
      %s279 = sadd.s32 %s278, 1
      %s280 = scalar_select %p277, %s278, %s279
      %p283 = pneg %p277
      %p284 = scmp.eq.s32.totalorder %s23, 7
      %p285 = por %p283, %p284
      %p286 = scmp.ne.s32.totalorder %s278, %s281
      %p287 = scmp.eq.s32.totalorder %s23, 0
      %p288 = por %p286, %p287
      %p289 = scmp.ne.s32.totalorder %s278, %s281
      %p290 = scmp.eq.s32.totalorder %s28, 7
      %p291 = por %p289, %p290
      %p292 = scmp.ne.s32.totalorder %s281, %s282
      %p293 = scmp.eq.s32.totalorder %s28, 0
      %p294 = por %p292, %p293
      %p295 = scmp.ne.s32.totalorder %s281, %s282
      %p296 = scmp.eq.s32.totalorder %s29, 7
      %p297 = por %p295, %p296
      %p299 = scmp.ne.s32.totalorder %s282, %s298
      %p300 = scmp.eq.s32.totalorder %s29, 0
      %p301 = por %p299, %p300
      %p302 = scmp.le.s32.totalorder 1, %s23
      %p303 = scmp.lt.s32.totalorder %s23, 9
      %p304 = pnand %p302, %p303
      %p305 = pneg %p304
      // Predicated region
      $region9: #{_lambda_.3} parent=5 // pred_check
        _
      $region10: #{_lambda_.3} parent=5 // pred_check_branch
        %307 = sbr.rel (%p304) target = $region12
      $region11: #{_lambda_.3} parent=5 // pred_region
        %s308 = ssub.s32 %s23, 1
        // Predicated region
        $region13: #{_lambda_.3} parent=11 // pred_check
          %p309 = pneg %p119
        $region14: #{_lambda_.3} parent=11 // pred_check_branch
          %311 = sbr.rel (%p309) target = $region16
        $region15: #{_lambda_.3} parent=11 // pred_region
          %s313 = ssub.s32 2048, 2048
          %314 = vsyncadd [#allocation9], %s313
          %s315 = sshll.u32 [#allocation10], 4
          %s316 = int_to_ptr.vmem [resolvable:$true] %s315
          %321 = dma.hbm_to_vmem [thread:$0]  %s2, 2048, %s316, [#allocation9], 128, 128, 8
        $region16: #{_lambda_.3} parent=11 // pred_fallthru
          _
        // Predicated region
        $region17: #{_lambda_.3} parent=11 // pred_check
          %p322 = pneg %p140
        $region18: #{_lambda_.3} parent=11 // pred_check_branch
          %324 = sbr.rel (%p322) target = $region20
        $region19: #{_lambda_.3} parent=11 // pred_region
          _
        $region20: #{_lambda_.3} parent=11 // pred_fallthru
          _
        // Predicated region
        $region21: #{_lambda_.3} parent=11 // pred_check
          %p325 = pneg %p161
        $region22: #{_lambda_.3} parent=11 // pred_check_branch
          %327 = sbr.rel (%p325) target = $region24
        $region23: #{_lambda_.3} parent=11 // pred_region
          %s329 = ssub.s32 4096, 4096
          %330 = vsyncadd [#allocation12], %s329
          %s331 = sshll.u32 [#allocation11], 4
          %s332 = int_to_ptr.vmem [resolvable:$true] %s331
          %337 = dma.hbm_to_vmem [thread:$0]  %s4, 4096, %s332, [#allocation12], 256, 256, 16
        $region24: #{_lambda_.3} parent=11 // pred_fallthru
          _
        // Predicated region
        $region25: #{_lambda_.3} parent=11 // pred_check
          %p338 = pneg %p182
        $region26: #{_lambda_.3} parent=11 // pred_check_branch
          %340 = sbr.rel (%p338) target = $region28
        $region27: #{_lambda_.3} parent=11 // pred_region
          _
        $region28: #{_lambda_.3} parent=11 // pred_fallthru
          _
        // Predicated region
        $region29: #{_lambda_.3} parent=11 // pred_check
          %p341 = pneg %p203
        $region30: #{_lambda_.3} parent=11 // pred_check_branch
          %343 = sbr.rel (%p341) target = $region32
        $region31: #{_lambda_.3} parent=11 // pred_region
          %s345 = ssub.s32 2048, 2048
          %346 = vsyncadd [#allocation12], %s345
          %s347 = sshll.u32 [#allocation13], 4
          %s348 = int_to_ptr.vmem [resolvable:$true] %s347
          %353 = dma.hbm_to_vmem [thread:$0]  %s6, 2048, %s348, [#allocation12], 128, 128, 8
        $region32: #{_lambda_.3} parent=11 // pred_fallthru
          _
        // Predicated region
        $region33: #{_lambda_.3} parent=11 // pred_check
          %p354 = pneg %p224
        $region34: #{_lambda_.3} parent=11 // pred_check_branch
          %356 = sbr.rel (%p354) target = $region36
        $region35: #{_lambda_.3} parent=11 // pred_region
          _
        $region36: #{_lambda_.3} parent=11 // pred_fallthru
          _
        // Predicated region
        $region37: #{_lambda_.3} parent=11 // pred_check
          %p357 = pneg %p245
        $region38: #{_lambda_.3} parent=11 // pred_check_branch
          %359 = sbr.rel (%p357) target = $region40
        $region39: #{_lambda_.3} parent=11 // pred_region
          _
        $region40: #{_lambda_.3} parent=11 // pred_fallthru
          _
        // Predicated region
        $region41: #{_lambda_.3} parent=11 // pred_check
          %p360 = pneg %p266
        $region42: #{_lambda_.3} parent=11 // pred_check_branch
          %362 = sbr.rel (%p360) target = $region44
        $region43: #{_lambda_.3} parent=11 // pred_region
          _
        $region44: #{_lambda_.3} parent=11 // pred_fallthru
          _
      $region12: #{_lambda_.3} parent=5 // pred_fallthru
        _
      %p363 = scmp.lt.s32.totalorder %s23, 8
      // Predicated region
      $region45: #{_lambda_.3} parent=5 // pred_check
        %p364 = pneg %p363
      $region46: #{_lambda_.3} parent=5 // pred_check_branch
        %366 = sbr.rel (%p364) target = $region48
      $region47: #{_lambda_.3} parent=5 // pred_region
        // Predicated region
        $region49: #{_lambda_.3} parent=47 // pred_check
          %p367 = pneg %p64
        $region50: #{_lambda_.3} parent=47 // pred_check_branch
          %369 = sbr.rel (%p367) target = $region52
        $region51: #{_lambda_.3} parent=47 // pred_region
          %s370 = sand.u32 %s54, 1
          %s371 = scalar_lea.sflag [#allocation7], %s370
          %s372 = sand.u32 %s54, 1
          %s373 = smul.addr %s372, 8
          %s374 = scalar_lea.vmem [#allocation6], %s373
          %s376 = ssub.s32 128, 128
          %377 = vsyncadd %s371, %s376
          %s378 = smul.addr %s30, 2
          %s379 = sadd.s32 %s31, %s378
          %s380 = smul.addr %s379, 128
          %s381 = scalar_lea.hbm %s0, %s380
          %s383 = sshll.u32 %s374, 4
          %s384 = int_to_ptr.vmem [resolvable:$true] %s383
          %386 = dma.hbm_to_vmem [thread:$0]  %s381, 128, %s384, %s371
        $region52: #{_lambda_.3} parent=47 // pred_fallthru
          _
        // Predicated region
        $region53: #{_lambda_.3} parent=47 // pred_check
          %p387 = pneg %p92
        $region54: #{_lambda_.3} parent=47 // pred_check_branch
          %389 = sbr.rel (%p387) target = $region56
        $region55: #{_lambda_.3} parent=47 // pred_region
          %s390 = sand.u32 %s23, 1
          %s391 = scalar_lea.sflag [#allocation9], %s390
          %s392 = sand.u32 %s82, 1
          %s393 = smul.addr %s392, 8
          %s394 = scalar_lea.vmem [#allocation8], %s393
          %s396 = ssub.s32 128, 128
          %397 = vsyncadd %s391, %s396
          %s398 = smul.addr %s30, 2
          %s399 = sadd.s32 %s32, %s398
          %s400 = smul.addr %s399, 128
          %s401 = scalar_lea.hbm %s1, %s400
          %s403 = sshll.u32 %s394, 4
          %s404 = int_to_ptr.vmem [resolvable:$true] %s403
          %406 = dma.hbm_to_vmem [thread:$0]  %s401, 128, %s404, %s391
        $region56: #{_lambda_.3} parent=47 // pred_fallthru
          _
      $region48: #{_lambda_.3} parent=5 // pred_fallthru
        _
      %p407 = scmp.le.s32.totalorder 1, %s23
      %p408 = scmp.lt.s32.totalorder %s23, 9
      %p409 = pnand %p407, %p408
      %p410 = pneg %p409
      // Predicated region
      $region57: #{_lambda_.3} parent=5 // pred_check
        _
      $region58: #{_lambda_.3} parent=5 // pred_check_branch
        %412 = sbr.rel (%p409) target = $region60
      $region59: #{_lambda_.3} parent=5 // pred_region
        %s413 = ssub.s32 %s23, 1
        %s414 = sand.u32 %s57, 1
        %s415 = scalar_lea.sflag [#allocation7], %s414
        %s416 = sand.u32 %s57, 1
        %s417 = smul.addr %s416, 8
        %s418 = scalar_lea.vmem [#allocation6], %s417
        // Predicated region
        $region61: #{_lambda_.3} parent=59 // pred_check
          %p419 = pneg %p70
        $region62: #{_lambda_.3} parent=59 // pred_check_branch
          %421 = sbr.rel (%p419) target = $region64
        $region63: #{_lambda_.3} parent=59 // pred_region
          %422 = dma.done %s415, 128
        $region64: #{_lambda_.3} parent=59 // pred_fallthru
          _
        %s423 = sand.u32 %s28, 1
        %s424 = scalar_lea.sflag [#allocation9], %s423
        %s425 = sand.u32 %s85, 1
        %s426 = smul.addr %s425, 8
        %s427 = scalar_lea.vmem [#allocation8], %s426
        // Predicated region
        $region65: #{_lambda_.3} parent=59 // pred_check
          %p428 = pneg %p98
        $region66: #{_lambda_.3} parent=59 // pred_check_branch
          %430 = sbr.rel (%p428) target = $region68
        $region67: #{_lambda_.3} parent=59 // pred_region
          %431 = dma.done %s424, 128
        $region68: #{_lambda_.3} parent=59 // pred_fallthru
          _
        // Predicated region
        $region69: #{_lambda_.3} parent=59 // pred_check
          %p432 = pneg %p119
        $region70: #{_lambda_.3} parent=59 // pred_check_branch
          %434 = sbr.rel (%p432) target = $region72
        $region71: #{_lambda_.3} parent=59 // pred_region
          %435 = dma.done [#allocation9], 2048
        $region72: #{_lambda_.3} parent=59 // pred_fallthru
          _
        // Predicated region
        $region73: #{_lambda_.3} parent=59 // pred_check
          %p436 = pneg %p161
        $region74: #{_lambda_.3} parent=59 // pred_check_branch
          %438 = sbr.rel (%p436) target = $region76
        $region75: #{_lambda_.3} parent=59 // pred_region
          %439 = dma.done [#allocation12], 4096
        $region76: #{_lambda_.3} parent=59 // pred_fallthru
          _
        // Predicated region
        $region77: #{_lambda_.3} parent=59 // pred_check
          %p440 = pneg %p203
        $region78: #{_lambda_.3} parent=59 // pred_check_branch
          %442 = sbr.rel (%p440) target = $region80
        $region79: #{_lambda_.3} parent=59 // pred_region
          %443 = dma.done [#allocation12], 2048
        $region80: #{_lambda_.3} parent=59 // pred_fallthru
          _
        %s444 = sand.u32 %s57, 1
        %s445 = scalar_lea.sflag [#allocation7], %s444
        %s446 = sand.u32 %s57, 1
        %s447 = smul.addr %s446, 8
        %s448 = scalar_lea.vmem [#allocation6], %s447
        %p449 = pneg %p70
        %p450 = pneg %p67
        %s451 = sand.u32 %s28, 1
        %s452 = scalar_lea.sflag [#allocation9], %s451
        %s453 = sand.u32 %s85, 1
        %s454 = smul.addr %s453, 8
        %s455 = scalar_lea.vmem [#allocation8], %s454
        %p456 = pneg %p98
        %p457 = pneg %p95
        %p458 = pneg %p119
        %p459 = pneg %p116
        %p460 = pneg %p140
        %p461 = pneg %p137
        %p462 = pneg %p161
        %p463 = pneg %p158
        %p464 = pneg %p182
        %p465 = pneg %p179
        %p466 = pneg %p203
        %p467 = pneg %p200
        %p468 = pneg %p224
        %p469 = pneg %p221
        %p470 = pneg %p245
        %p471 = pneg %p242
        %p472 = pneg %p266
        %p473 = pneg %p263
        %p474 = pneg %p294
        %p475 = pneg %p291
        %p476 = scmp.lt.s32.totalorder %s33, 1
        %s477 = scalar_select %p476, %s33, 1
        %p478 = scmp.lt.s32.totalorder %s34, 1
        %s479 = scalar_select %p478, %s34, 1
        %s480 = smul.addr %s477, 2
        %s481 = sadd.s32 %s479, %s480
        %s482 = smul.addr %s481, 8
        %s483 = scalar_lea.vmem %s10, %s482
        %p484 = scmp.lt.s32.totalorder %s33, 1
        %s485 = scalar_select %p484, %s33, 1
        %p486 = scmp.lt.s32.totalorder %s34, 1
        %s487 = scalar_select %p486, %s34, 1
        %s488 = smul.addr %s485, 2
        %s489 = sadd.s32 %s487, %s488
        %s490 = smul.addr %s489, 8
        %s491 = scalar_lea.vmem %s10, %s490
        %v492 = vld [vmem:[%s418] sm:$0xff]
        %p493 = scmp.eq.s32.totalorder %s35, 0
        // Predicated region
        $region81: #{_lambda_.3} parent=59 // pred_check
          %p494 = pneg %p493
        $region82: #{_lambda_.3} parent=59 // pred_check_branch
          %496 = sbr.rel (%p494) target = $region84
        $region83: #{_lambda_.3} parent=59 // pred_region
          %vm497 = vcmask 7168
          %498 = vst.msk [vmem:[#allocation3] sm:$0xff] %vm497, -inf
          %499 = vst.msk [vmem:[#allocation3 + $0x8] sm:$0xff] %vm497, -inf
          %500 = vst.msk [vmem:[#allocation3 + $0x10] sm:$0xff] %vm497, -inf
          %501 = vst.msk [vmem:[#allocation3 + $0x18] sm:$0xff] %vm497, -inf
          %502 = vst.msk [vmem:[#allocation4] sm:$0xff] %vm497, 0.0
          %503 = vst.msk [vmem:[#allocation4 + $0x8] sm:$0xff] %vm497, 0.0
          %504 = vst.msk [vmem:[#allocation4 + $0x10] sm:$0xff] %vm497, 0.0
          %505 = vst.msk [vmem:[#allocation4 + $0x18] sm:$0xff] %vm497, 0.0
          %vm506 = vcmask 261120
          %507 = vst.msk [vmem:[#allocation5] sm:$0xff] %vm506, 0.0
          %508 = vst.msk [vmem:[#allocation5 + $0x8] sm:$0xff] %vm506, 0.0
          %509 = vst.msk [vmem:[#allocation5 + $0x10] sm:$0xff] %vm506, 0.0
          %510 = vst.msk [vmem:[#allocation5 + $0x18] sm:$0xff] %vm506, 0.0
          %v511 = vld [vmem:[#allocation10] sm:$0xff]
          %v512 = vld [vmem:[#allocation10 + $0x8] sm:$0xff]
          %v513 = vld [vmem:[#allocation10 + $0x10] sm:$0xff]
          %v514 = vld [vmem:[#allocation10 + $0x18] sm:$0xff]
          %v515 = vld [vmem:[#allocation10 + $0x20] sm:$0xff]
          %v516 = vld [vmem:[#allocation10 + $0x28] sm:$0xff]
          %v517 = vld [vmem:[#allocation10 + $0x30] sm:$0xff]
          %v518 = vld [vmem:[#allocation10 + $0x38] sm:$0xff]
          %v519 = vld [vmem:[#allocation10 + $0x40] sm:$0xff]
          %v520 = vld [vmem:[#allocation10 + $0x48] sm:$0xff]
          %v521 = vld [vmem:[#allocation10 + $0x50] sm:$0xff]
          %v522 = vld [vmem:[#allocation10 + $0x58] sm:$0xff]
          %v523 = vld [vmem:[#allocation10 + $0x60] sm:$0xff]
          %v524 = vld [vmem:[#allocation10 + $0x68] sm:$0xff]
          %v525 = vld [vmem:[#allocation10 + $0x70] sm:$0xff]
          %v526 = vld [vmem:[#allocation10 + $0x78] sm:$0xff]
          %v527 = vld [vmem:[%s3] sm:$0x1]
          %v529 = vlaneseq
          %v530 = vshrl.u32 %v529, 7
          %v531 = vsub.s32 0, %v530
          %v532 = vrot.slane %v527, %v531
          %534 = vmatprep.subr.mxu0 0.0
          %535 = vmatpush1.msra.mxu0 %v511
          %536 = vmatprep.subr.mxu0 0.0
          %537 = vmatpush1.msra.mxu0 %v512
          %538 = vmatprep.subr.mxu0 0.0
          %539 = vmatpush1.msra.mxu0 %v513
          %540 = vmatprep.subr.mxu0 0.0
          %541 = vmatpush1.msra.mxu0 %v514
          %542 = vmatprep.subr.mxu0 0.0
          %543 = vmatpush1.msra.mxu0 %v515
          %544 = vmatprep.subr.mxu0 0.0
          %545 = vmatpush1.msra.mxu0 %v516
          %546 = vmatprep.subr.mxu0 0.0
          %547 = vmatpush1.msra.mxu0 %v517
          %548 = vmatprep.subr.mxu0 0.0
          %549 = vmatpush1.msra.mxu0 %v518
          %550 = vmatprep.subr.mxu0 0.0
          %551 = vmatpush1.msra.mxu0 %v519
          %552 = vmatprep.subr.mxu0 0.0
          %553 = vmatpush1.msra.mxu0 %v520
          %554 = vmatprep.subr.mxu0 0.0
          %555 = vmatpush1.msra.mxu0 %v521
          %556 = vmatprep.subr.mxu0 0.0
          %557 = vmatpush1.msra.mxu0 %v522
          %558 = vmatprep.subr.mxu0 0.0
          %559 = vmatpush1.msra.mxu0 %v523
          %560 = vmatprep.subr.mxu0 0.0
          %561 = vmatpush1.msra.mxu0 %v524
          %562 = vmatprep.subr.mxu0 0.0
          %563 = vmatpush1.msra.mxu0 %v525
          %564 = vmatprep.subr.mxu0 0.0
          %565 = vmatpush1.msra.mxu0 %v526
          %566 = vmatprep.subr.mxu0 0.0
          %567 = vmatpush1.msra.mxu0 0.0
          %568 = vmatprep.subr.mxu0 0.0
          %569 = vmatpush1.msra.mxu0 0.0
          %570 = vmatprep.subr.mxu0 0.0
          %571 = vmatpush1.msra.mxu0 0.0
          %572 = vmatprep.subr.mxu0 0.0
          %573 = vmatpush1.msra.mxu0 0.0
          %574 = vmatprep.subr.mxu0 0.0
          %575 = vmatpush1.msra.mxu0 0.0
          %576 = vmatprep.subr.mxu0 0.0
          %577 = vmatpush1.msra.mxu0 0.0
          %578 = vmatprep.subr.mxu0 0.0
          %579 = vmatpush1.msra.mxu0 0.0
          %580 = vmatprep.subr.mxu0 0.0
          %581 = vmatpush1.msra.mxu0 0.0
          %582 = vmatprep.subr.mxu0 0.0
          %583 = vmatpush1.msra.mxu0 0.0
          %584 = vmatprep.subr.mxu0 0.0
          %585 = vmatpush1.msra.mxu0 0.0
          %586 = vmatprep.subr.mxu0 0.0
          %587 = vmatpush1.msra.mxu0 0.0
          %588 = vmatprep.subr.mxu0 0.0
          %589 = vmatpush1.msra.mxu0 0.0
          %590 = vmatprep.subr.mxu0 0.0
          %591 = vmatpush1.msra.mxu0 0.0
          %592 = vmatprep.subr.mxu0 0.0
          %593 = vmatpush1.msra.mxu0 0.0
          %594 = vmatprep.subr.mxu0 0.0
          %595 = vmatpush1.msra.mxu0 0.0
          %596 = vmatprep.subr.mxu0 0.0
          %597 = vmatpush1.msra.mxu0 0.0
          %598 = vmatprep.mubr.f32.mxu0 0.0
          %599 = vmatmul.mubr.f32.gmra.mrb[0].mxu0 %v492
          %v600 = vpop.f32.mrb[0].mxu0
          %v601 = vadd.f32 %v532, %v600
          %v602 = vpop.f32.mrb[0].mxu0
          %603 = vdwg.mxu0
          %v604 = vmul.f32 %v601, 0.17677669
          %606 = vrot.lane.b32.xlu0 %v604, 96
          %v607 = vpop.permute.xlu0 %606
          %609 = vrot.lane.b32.xlu0 %v604, 64
          %v610 = vpop.permute.xlu0 %609
          %612 = vrot.lane.b32.xlu0 %v604, 32
          %v613 = vpop.permute.xlu0 %612
          %v615 = vcombine.low %v604, %v610
          %v616 = vcombine.high %v604, %v610
          %v618 = vunpack.c.l.s4 1983009808
          %v619 = vunpack.c.0.s8 %v618
          %v620 = vlaneseq
          %v621 = vshrl.u32 %v620, 7
          %v622 = vsub.s32 %v619, %v621
          %v623 = vrot.slane %v615, %v622
          %v625 = vunpack.c.l.s4 1983009808
          %v626 = vunpack.c.0.s8 %v625
          %v627 = vlaneseq
          %v628 = vshrl.u32 %v627, 7
          %v629 = vsub.s32 %v626, %v628
          %v630 = vrot.slane %v616, %v629
          %v631 = vcombine.low %v607, %v613
          %v632 = vcombine.high %v607, %v613
          %v634 = vunpack.c.l.s4 1983009808
          %v635 = vunpack.c.0.s8 %v634
          %v636 = vlaneseq
          %v637 = vshrl.u32 %v636, 7
          %v638 = vsub.s32 %v635, %v637
          %v639 = vrot.slane %v631, %v638
          %v641 = vunpack.c.l.s4 1983009808
          %v642 = vunpack.c.0.s8 %v641
          %v643 = vlaneseq
          %v644 = vshrl.u32 %v643, 7
          %v645 = vsub.s32 %v642, %v644
          %v646 = vrot.slane %v632, %v645
          %v647 = vcombine.low %v623, %v639
          %v648 = vcombine.high %v623, %v639
          %v650 = vunpack.c.l.s4 1934713408
          %v651 = vunpack.c.0.s8 %v650
          %v652 = vlaneseq
          %v653 = vshrl.u32 %v652, 7
          %v654 = vsub.s32 %v651, %v653
          %v655 = vrot.slane %v647, %v654
          %v657 = vunpack.c.l.s4 1934713408
          %v658 = vunpack.c.0.s8 %v657
          %v659 = vlaneseq
          %v660 = vshrl.u32 %v659, 7
          %v661 = vsub.s32 %v658, %v660
          %v662 = vrot.slane %v648, %v661
          %v663 = vcombine.low %v630, %v646
          %v664 = vcombine.high %v630, %v646
          %v666 = vunpack.c.l.s4 1934713408
          %v667 = vunpack.c.0.s8 %v666
          %v668 = vlaneseq
          %v669 = vshrl.u32 %v668, 7
          %v670 = vsub.s32 %v667, %v669
          %v671 = vrot.slane %v663, %v670
          %v673 = vunpack.c.l.s4 1934713408
          %v674 = vunpack.c.0.s8 %v673
          %v675 = vlaneseq
          %v676 = vshrl.u32 %v675, 7
          %v677 = vsub.s32 %v674, %v676
          %v678 = vrot.slane %v664, %v677
          %v679 = vcombine.high %v655, 0.0
          %v680 = vcombine.high %v662, 0.0
          %v681 = vcombine.high %v671, 0.0
          %v682 = vcombine.high %v678, 0.0
          %v683 = vcombine.low %v655, %v662
          %v685 = vunpack.c.l.s4 1983009808
          %v686 = vunpack.c.0.s8 %v685
          %v687 = vlaneseq
          %v688 = vshrl.u32 %v687, 7
          %v689 = vsub.s32 %v686, %v688
          %v690 = vrot.slane %v683, %v689
          %v691 = vcombine.low %v679, %v680
          %v693 = vunpack.c.l.s4 1983009808
          %v694 = vunpack.c.0.s8 %v693
          %v695 = vlaneseq
          %v696 = vshrl.u32 %v695, 7
          %v697 = vsub.s32 %v694, %v696
          %v698 = vrot.slane %v691, %v697
          %v699 = vcombine.low %v671, %v678
          %v701 = vunpack.c.l.s4 1983009808
          %v702 = vunpack.c.0.s8 %v701
          %v703 = vlaneseq
          %v704 = vshrl.u32 %v703, 7
          %v705 = vsub.s32 %v702, %v704
          %v706 = vrot.slane %v699, %v705
          %v707 = vcombine.low %v681, %v682
          %v709 = vunpack.c.l.s4 1983009808
          %v710 = vunpack.c.0.s8 %v709
          %v711 = vlaneseq
          %v712 = vshrl.u32 %v711, 7
          %v713 = vsub.s32 %v710, %v712
          %v714 = vrot.slane %v707, %v713
          %v715 = vcombine.low %v690, %v698
          %v716 = vcombine.high %v690, %v698
          %v718 = vunpack.c.l.s4 1934713408
          %v719 = vunpack.c.0.s8 %v718
          %v720 = vlaneseq
          %v721 = vshrl.u32 %v720, 7
          %v722 = vsub.s32 %v719, %v721
          %v723 = vrot.slane %v715, %v722
          %v725 = vunpack.c.l.s4 1934713408
          %v726 = vunpack.c.0.s8 %v725
          %v727 = vlaneseq
          %v728 = vshrl.u32 %v727, 7
          %v729 = vsub.s32 %v726, %v728
          %v730 = vrot.slane %v716, %v729
          %v731 = vcombine.low %v706, %v714
          %v732 = vcombine.high %v706, %v714
          %v734 = vunpack.c.l.s4 1934713408
          %v735 = vunpack.c.0.s8 %v734
          %v736 = vlaneseq
          %v737 = vshrl.u32 %v736, 7
          %v738 = vsub.s32 %v735, %v737
          %v739 = vrot.slane %v731, %v738
          %v741 = vunpack.c.l.s4 1934713408
          %v742 = vunpack.c.0.s8 %v741
          %v743 = vlaneseq
          %v744 = vshrl.u32 %v743, 7
          %v745 = vsub.s32 %v742, %v744
          %v746 = vrot.slane %v732, %v745
          %v747 = vcombine.low %v723, %v739
          %v748 = vcombine.high %v723, %v739
          %v749 = vcombine.low %v730, %v746
          %v750 = vcombine.high %v730, %v746
          %751 = vst.msk [vmem:[#allocation2] sm:$0xff] %vm506, %v747
          %752 = vst.msk [vmem:[#allocation2 + $0x8] sm:$0xff] %vm506, %v748
          %753 = vst.msk [vmem:[#allocation2 + $0x10] sm:$0xff] %vm506, %v749
          %754 = vst.msk [vmem:[#allocation2 + $0x18] sm:$0xff] %vm506, %v750
        $region84: #{_lambda_.3} parent=59 // pred_fallthru
          _
        %v755 = vld [vmem:[%s427] sm:$0xff]
        %v756 = vld [vmem:[#allocation11] sm:$0xff]
        %v757 = vld [vmem:[#allocation11 + $0x8] sm:$0xff]
        %v758 = vld [vmem:[#allocation11 + $0x10] sm:$0xff]
        %v759 = vld [vmem:[#allocation11 + $0x18] sm:$0xff]
        %v760 = vld [vmem:[#allocation11 + $0x20] sm:$0xff]
        %v761 = vld [vmem:[#allocation11 + $0x28] sm:$0xff]
        %v762 = vld [vmem:[#allocation11 + $0x30] sm:$0xff]
        %v763 = vld [vmem:[#allocation11 + $0x38] sm:$0xff]
        %v764 = vld [vmem:[#allocation11 + $0x40] sm:$0xff]
        %v765 = vld [vmem:[#allocation11 + $0x48] sm:$0xff]
        %v766 = vld [vmem:[#allocation11 + $0x50] sm:$0xff]
        %v767 = vld [vmem:[#allocation11 + $0x58] sm:$0xff]
        %v768 = vld [vmem:[#allocation11 + $0x60] sm:$0xff]
        %v769 = vld [vmem:[#allocation11 + $0x68] sm:$0xff]
        %v770 = vld [vmem:[#allocation11 + $0x70] sm:$0xff]
        %v771 = vld [vmem:[#allocation11 + $0x78] sm:$0xff]
        %v772 = vld [vmem:[#allocation11 + $0x80] sm:$0xff]
        %v773 = vld [vmem:[#allocation11 + $0x88] sm:$0xff]
        %v774 = vld [vmem:[#allocation11 + $0x90] sm:$0xff]
        %v775 = vld [vmem:[#allocation11 + $0x98] sm:$0xff]
        %v776 = vld [vmem:[#allocation11 + $0xa0] sm:$0xff]
        %v777 = vld [vmem:[#allocation11 + $0xa8] sm:$0xff]
        %v778 = vld [vmem:[#allocation11 + $0xb0] sm:$0xff]
        %v779 = vld [vmem:[#allocation11 + $0xb8] sm:$0xff]
        %v780 = vld [vmem:[#allocation11 + $0xc0] sm:$0xff]
        %v781 = vld [vmem:[#allocation11 + $0xc8] sm:$0xff]
        %v782 = vld [vmem:[#allocation11 + $0xd0] sm:$0xff]
        %v783 = vld [vmem:[#allocation11 + $0xd8] sm:$0xff]
        %v784 = vld [vmem:[#allocation11 + $0xe0] sm:$0xff]
        %v785 = vld [vmem:[#allocation11 + $0xe8] sm:$0xff]
        %v786 = vld [vmem:[#allocation11 + $0xf0] sm:$0xff]
        %v787 = vld [vmem:[#allocation11 + $0xf8] sm:$0xff]
        %v788 = vld [vmem:[%s5] sm:$0x3]
        %v790 = vlaneseq
        %v791 = vshrl.u32 %v790, 7
        %v792 = vsub.s32 0, %v791
        %v793 = vrot.slane %v788, %v792
        %v794 = vlaneseq
        %v795 = vshrl.u32 %v794, 7
        %v796 = vsub.s32 1, %v795
        %v797 = vrot.slane %v788, %v796
        %800 = vmatprep.subr.mxu0 %v757
        %801 = vmatpush1.msra.mxu0 %v756
        %802 = vmatprep.subr.mxu0 %v759
        %803 = vmatpush1.msra.mxu0 %v758
        %804 = vmatprep.subr.mxu0 %v761
        %805 = vmatpush1.msra.mxu0 %v760
        %806 = vmatprep.subr.mxu0 %v763
        %807 = vmatpush1.msra.mxu0 %v762
        %808 = vmatprep.subr.mxu0 %v765
        %809 = vmatpush1.msra.mxu0 %v764
        %810 = vmatprep.subr.mxu0 %v767
        %811 = vmatpush1.msra.mxu0 %v766
        %812 = vmatprep.subr.mxu0 %v769
        %813 = vmatpush1.msra.mxu0 %v768
        %814 = vmatprep.subr.mxu0 %v771
        %815 = vmatpush1.msra.mxu0 %v770
        %816 = vmatprep.subr.mxu0 %v773
        %817 = vmatpush1.msra.mxu0 %v772
        %818 = vmatprep.subr.mxu0 %v775
        %819 = vmatpush1.msra.mxu0 %v774
        %820 = vmatprep.subr.mxu0 %v777
        %821 = vmatpush1.msra.mxu0 %v776
        %822 = vmatprep.subr.mxu0 %v779
        %823 = vmatpush1.msra.mxu0 %v778
        %824 = vmatprep.subr.mxu0 %v781
        %825 = vmatpush1.msra.mxu0 %v780
        %826 = vmatprep.subr.mxu0 %v783
        %827 = vmatpush1.msra.mxu0 %v782
        %828 = vmatprep.subr.mxu0 %v785
        %829 = vmatpush1.msra.mxu0 %v784
        %830 = vmatprep.subr.mxu0 %v787
        %831 = vmatpush1.msra.mxu0 %v786
        %832 = vmatprep.subr.mxu0 0.0
        %833 = vmatpush1.msra.mxu0 0.0
        %834 = vmatprep.subr.mxu0 0.0
        %835 = vmatpush1.msra.mxu0 0.0
        %836 = vmatprep.subr.mxu0 0.0
        %837 = vmatpush1.msra.mxu0 0.0
        %838 = vmatprep.subr.mxu0 0.0
        %839 = vmatpush1.msra.mxu0 0.0
        %840 = vmatprep.subr.mxu0 0.0
        %841 = vmatpush1.msra.mxu0 0.0
        %842 = vmatprep.subr.mxu0 0.0
        %843 = vmatpush1.msra.mxu0 0.0
        %844 = vmatprep.subr.mxu0 0.0
        %845 = vmatpush1.msra.mxu0 0.0
        %846 = vmatprep.subr.mxu0 0.0
        %847 = vmatpush1.msra.mxu0 0.0
        %848 = vmatprep.subr.mxu0 0.0
        %849 = vmatpush1.msra.mxu0 0.0
        %850 = vmatprep.subr.mxu0 0.0
        %851 = vmatpush1.msra.mxu0 0.0
        %852 = vmatprep.subr.mxu0 0.0
        %853 = vmatpush1.msra.mxu0 0.0
        %854 = vmatprep.subr.mxu0 0.0
        %855 = vmatpush1.msra.mxu0 0.0
        %856 = vmatprep.subr.mxu0 0.0
        %857 = vmatpush1.msra.mxu0 0.0
        %858 = vmatprep.subr.mxu0 0.0
        %859 = vmatpush1.msra.mxu0 0.0
        %860 = vmatprep.subr.mxu0 0.0
        %861 = vmatpush1.msra.mxu0 0.0
        %862 = vmatprep.subr.mxu0 0.0
        %863 = vmatpush1.msra.mxu0 0.0
        %864 = vmatprep.mubr.f32.mxu0 0.0
        %865 = vmatmul.mubr.f32.gmra.mrb[0].mxu0 %v755
        %v866 = vpop.f32.mrb[0].mxu0
        %v867 = vadd.f32 %v793, %v866
        %v868 = vpop.f32.mrb[0].mxu0
        %v869 = vadd.f32 %v797, %v868
        %870 = vdwg.mxu0
        %872 = vrot.lane.b32.xlu0 %v867, 96
        %v873 = vpop.permute.xlu0 %872
        %875 = vrot.lane.b32.xlu0 %v867, 64
        %v876 = vpop.permute.xlu0 %875
        %878 = vrot.lane.b32.xlu0 %v867, 32
        %v879 = vpop.permute.xlu0 %878
        %v881 = vcombine.low %v867, %v876
        %v882 = vcombine.high %v867, %v876
        %v884 = vunpack.c.l.s4 1983009808
        %v885 = vunpack.c.0.s8 %v884
        %v886 = vlaneseq
        %v887 = vshrl.u32 %v886, 7
        %v888 = vsub.s32 %v885, %v887
        %v889 = vrot.slane %v881, %v888
        %v891 = vunpack.c.l.s4 1983009808
        %v892 = vunpack.c.0.s8 %v891
        %v893 = vlaneseq
        %v894 = vshrl.u32 %v893, 7
        %v895 = vsub.s32 %v892, %v894
        %v896 = vrot.slane %v882, %v895
        %v897 = vcombine.low %v873, %v879
        %v898 = vcombine.high %v873, %v879
        %v900 = vunpack.c.l.s4 1983009808
        %v901 = vunpack.c.0.s8 %v900
        %v902 = vlaneseq
        %v903 = vshrl.u32 %v902, 7
        %v904 = vsub.s32 %v901, %v903
        %v905 = vrot.slane %v897, %v904
        %v907 = vunpack.c.l.s4 1983009808
        %v908 = vunpack.c.0.s8 %v907
        %v909 = vlaneseq
        %v910 = vshrl.u32 %v909, 7
        %v911 = vsub.s32 %v908, %v910
        %v912 = vrot.slane %v898, %v911
        %v913 = vcombine.low %v889, %v905
        %v914 = vcombine.high %v889, %v905
        %v916 = vunpack.c.l.s4 1934713408
        %v917 = vunpack.c.0.s8 %v916
        %v918 = vlaneseq
        %v919 = vshrl.u32 %v918, 7
        %v920 = vsub.s32 %v917, %v919
        %v921 = vrot.slane %v913, %v920
        %v923 = vunpack.c.l.s4 1934713408
        %v924 = vunpack.c.0.s8 %v923
        %v925 = vlaneseq
        %v926 = vshrl.u32 %v925, 7
        %v927 = vsub.s32 %v924, %v926
        %v928 = vrot.slane %v914, %v927
        %v929 = vcombine.low %v896, %v912
        %v930 = vcombine.high %v896, %v912
        %v932 = vunpack.c.l.s4 1934713408
        %v933 = vunpack.c.0.s8 %v932
        %v934 = vlaneseq
        %v935 = vshrl.u32 %v934, 7
        %v936 = vsub.s32 %v933, %v935
        %v937 = vrot.slane %v929, %v936
        %v939 = vunpack.c.l.s4 1934713408
        %v940 = vunpack.c.0.s8 %v939
        %v941 = vlaneseq
        %v942 = vshrl.u32 %v941, 7
        %v943 = vsub.s32 %v940, %v942
        %v944 = vrot.slane %v930, %v943
        %v945 = vcombine.high %v921, 0.0
        %v946 = vcombine.high %v928, 0.0
        %v947 = vcombine.high %v937, 0.0
        %v948 = vcombine.high %v944, 0.0
        %v949 = vcombine.low %v921, %v928
        %v951 = vunpack.c.l.s4 1983009808
        %v952 = vunpack.c.0.s8 %v951
        %v953 = vlaneseq
        %v954 = vshrl.u32 %v953, 7
        %v955 = vsub.s32 %v952, %v954
        %v956 = vrot.slane %v949, %v955
        %v957 = vcombine.low %v945, %v946
        %v959 = vunpack.c.l.s4 1983009808
        %v960 = vunpack.c.0.s8 %v959
        %v961 = vlaneseq
        %v962 = vshrl.u32 %v961, 7
        %v963 = vsub.s32 %v960, %v962
        %v964 = vrot.slane %v957, %v963
        %v965 = vcombine.low %v937, %v944
        %v967 = vunpack.c.l.s4 1983009808
        %v968 = vunpack.c.0.s8 %v967
        %v969 = vlaneseq
        %v970 = vshrl.u32 %v969, 7
        %v971 = vsub.s32 %v968, %v970
        %v972 = vrot.slane %v965, %v971
        %v973 = vcombine.low %v947, %v948
        %v975 = vunpack.c.l.s4 1983009808
        %v976 = vunpack.c.0.s8 %v975
        %v977 = vlaneseq
        %v978 = vshrl.u32 %v977, 7
        %v979 = vsub.s32 %v976, %v978
        %v980 = vrot.slane %v973, %v979
        %v981 = vcombine.low %v956, %v964
        %v982 = vcombine.high %v956, %v964
        %v984 = vunpack.c.l.s4 1934713408
        %v985 = vunpack.c.0.s8 %v984
        %v986 = vlaneseq
        %v987 = vshrl.u32 %v986, 7
        %v988 = vsub.s32 %v985, %v987
        %v989 = vrot.slane %v981, %v988
        %v991 = vunpack.c.l.s4 1934713408
        %v992 = vunpack.c.0.s8 %v991
        %v993 = vlaneseq
        %v994 = vshrl.u32 %v993, 7
        %v995 = vsub.s32 %v992, %v994
        %v996 = vrot.slane %v982, %v995
        %v997 = vcombine.low %v972, %v980
        %v998 = vcombine.high %v972, %v980
        %v1000 = vunpack.c.l.s4 1934713408
        %v1001 = vunpack.c.0.s8 %v1000
        %v1002 = vlaneseq
        %v1003 = vshrl.u32 %v1002, 7
        %v1004 = vsub.s32 %v1001, %v1003
        %v1005 = vrot.slane %v997, %v1004
        %v1007 = vunpack.c.l.s4 1934713408
        %v1008 = vunpack.c.0.s8 %v1007
        %v1009 = vlaneseq
        %v1010 = vshrl.u32 %v1009, 7
        %v1011 = vsub.s32 %v1008, %v1010
        %v1012 = vrot.slane %v998, %v1011
        %v1013 = vcombine.low %v989, %v1005
        %v1014 = vcombine.high %v989, %v1005
        %v1015 = vcombine.low %v996, %v1012
        %v1016 = vcombine.high %v996, %v1012
        %1018 = vrot.lane.b32.xlu0 %v869, 96
        %v1019 = vpop.permute.xlu0 %1018
        %1021 = vrot.lane.b32.xlu0 %v869, 64
        %v1022 = vpop.permute.xlu0 %1021
        %1024 = vrot.lane.b32.xlu0 %v869, 32
        %v1025 = vpop.permute.xlu0 %1024
        %v1027 = vcombine.low %v869, %v1022
        %v1028 = vcombine.high %v869, %v1022
        %v1030 = vunpack.c.l.s4 1983009808
        %v1031 = vunpack.c.0.s8 %v1030
        %v1032 = vlaneseq
        %v1033 = vshrl.u32 %v1032, 7
        %v1034 = vsub.s32 %v1031, %v1033
        %v1035 = vrot.slane %v1027, %v1034
        %v1037 = vunpack.c.l.s4 1983009808
        %v1038 = vunpack.c.0.s8 %v1037
        %v1039 = vlaneseq
        %v1040 = vshrl.u32 %v1039, 7
        %v1041 = vsub.s32 %v1038, %v1040
        %v1042 = vrot.slane %v1028, %v1041
        %v1043 = vcombine.low %v1019, %v1025
        %v1044 = vcombine.high %v1019, %v1025
        %v1046 = vunpack.c.l.s4 1983009808
        %v1047 = vunpack.c.0.s8 %v1046
        %v1048 = vlaneseq
        %v1049 = vshrl.u32 %v1048, 7
        %v1050 = vsub.s32 %v1047, %v1049
        %v1051 = vrot.slane %v1043, %v1050
        %v1053 = vunpack.c.l.s4 1983009808
        %v1054 = vunpack.c.0.s8 %v1053
        %v1055 = vlaneseq
        %v1056 = vshrl.u32 %v1055, 7
        %v1057 = vsub.s32 %v1054, %v1056
        %v1058 = vrot.slane %v1044, %v1057
        %v1059 = vcombine.low %v1035, %v1051
        %v1060 = vcombine.high %v1035, %v1051
        %v1062 = vunpack.c.l.s4 1934713408
        %v1063 = vunpack.c.0.s8 %v1062
        %v1064 = vlaneseq
        %v1065 = vshrl.u32 %v1064, 7
        %v1066 = vsub.s32 %v1063, %v1065
        %v1067 = vrot.slane %v1059, %v1066
        %v1069 = vunpack.c.l.s4 1934713408
        %v1070 = vunpack.c.0.s8 %v1069
        %v1071 = vlaneseq
        %v1072 = vshrl.u32 %v1071, 7
        %v1073 = vsub.s32 %v1070, %v1072
        %v1074 = vrot.slane %v1060, %v1073
        %v1075 = vcombine.low %v1042, %v1058
        %v1076 = vcombine.high %v1042, %v1058
        %v1078 = vunpack.c.l.s4 1934713408
        %v1079 = vunpack.c.0.s8 %v1078
        %v1080 = vlaneseq
        %v1081 = vshrl.u32 %v1080, 7
        %v1082 = vsub.s32 %v1079, %v1081
        %v1083 = vrot.slane %v1075, %v1082
        %v1085 = vunpack.c.l.s4 1934713408
        %v1086 = vunpack.c.0.s8 %v1085
        %v1087 = vlaneseq
        %v1088 = vshrl.u32 %v1087, 7
        %v1089 = vsub.s32 %v1086, %v1088
        %v1090 = vrot.slane %v1076, %v1089
        %v1091 = vcombine.high %v1067, 0.0
        %v1092 = vcombine.high %v1074, 0.0
        %v1093 = vcombine.high %v1083, 0.0
        %v1094 = vcombine.high %v1090, 0.0
        %v1095 = vcombine.low %v1067, %v1074
        %v1097 = vunpack.c.l.s4 1983009808
        %v1098 = vunpack.c.0.s8 %v1097
        %v1099 = vlaneseq
        %v1100 = vshrl.u32 %v1099, 7
        %v1101 = vsub.s32 %v1098, %v1100
        %v1102 = vrot.slane %v1095, %v1101
        %v1103 = vcombine.low %v1091, %v1092
        %v1105 = vunpack.c.l.s4 1983009808
        %v1106 = vunpack.c.0.s8 %v1105
        %v1107 = vlaneseq
        %v1108 = vshrl.u32 %v1107, 7
        %v1109 = vsub.s32 %v1106, %v1108
        %v1110 = vrot.slane %v1103, %v1109
        %v1111 = vcombine.low %v1083, %v1090
        %v1113 = vunpack.c.l.s4 1983009808
        %v1114 = vunpack.c.0.s8 %v1113
        %v1115 = vlaneseq
        %v1116 = vshrl.u32 %v1115, 7
        %v1117 = vsub.s32 %v1114, %v1116
        %v1118 = vrot.slane %v1111, %v1117
        %v1119 = vcombine.low %v1093, %v1094
        %v1121 = vunpack.c.l.s4 1983009808
        %v1122 = vunpack.c.0.s8 %v1121
        %v1123 = vlaneseq
        %v1124 = vshrl.u32 %v1123, 7
        %v1125 = vsub.s32 %v1122, %v1124
        %v1126 = vrot.slane %v1119, %v1125
        %v1127 = vcombine.low %v1102, %v1110
        %v1128 = vcombine.high %v1102, %v1110
        %v1130 = vunpack.c.l.s4 1934713408
        %v1131 = vunpack.c.0.s8 %v1130
        %v1132 = vlaneseq
        %v1133 = vshrl.u32 %v1132, 7
        %v1134 = vsub.s32 %v1131, %v1133
        %v1135 = vrot.slane %v1127, %v1134
        %v1137 = vunpack.c.l.s4 1934713408
        %v1138 = vunpack.c.0.s8 %v1137
        %v1139 = vlaneseq
        %v1140 = vshrl.u32 %v1139, 7
        %v1141 = vsub.s32 %v1138, %v1140
        %v1142 = vrot.slane %v1128, %v1141
        %v1143 = vcombine.low %v1118, %v1126
        %v1144 = vcombine.high %v1118, %v1126
        %v1146 = vunpack.c.l.s4 1934713408
        %v1147 = vunpack.c.0.s8 %v1146
        %v1148 = vlaneseq
        %v1149 = vshrl.u32 %v1148, 7
        %v1150 = vsub.s32 %v1147, %v1149
        %v1151 = vrot.slane %v1143, %v1150
        %v1153 = vunpack.c.l.s4 1934713408
        %v1154 = vunpack.c.0.s8 %v1153
        %v1155 = vlaneseq
        %v1156 = vshrl.u32 %v1155, 7
        %v1157 = vsub.s32 %v1154, %v1156
        %v1158 = vrot.slane %v1144, %v1157
        %v1159 = vcombine.low %v1135, %v1151
        %v1160 = vcombine.high %v1135, %v1151
        %v1161 = vcombine.low %v1142, %v1158
        %v1162 = vcombine.high %v1142, %v1158
        %v1163 = vld [vmem:[#allocation2] sm:$0xff]
        %v1164 = vld [vmem:[#allocation2 + $0x8] sm:$0xff]
        %v1165 = vld [vmem:[#allocation2 + $0x10] sm:$0xff]
        %v1166 = vld [vmem:[#allocation2 + $0x18] sm:$0xff]
        %vm1167 = vcmask 261120
        %v1169 = vsel %vm1167, %v1163, 0
        %v1172 = vsel %vm1167, %v1013, 0
        %1174 = vmatprep.subr.mxu0 0.0
        %1175 = vmatpush1.xpose.msra.mxu0 %v1172
        %1176 = vmatprep.subr.mxu0 0.0
        %1177 = vmatpush1.xpose.msra.mxu0 0.0
        %1178 = vmatprep.subr.mxu0 0.0
        %1179 = vmatpush1.xpose.msra.mxu0 0.0
        %1180 = vmatprep.subr.mxu0 0.0
        %1181 = vmatpush1.xpose.msra.mxu0 0.0
        %1182 = vmatprep.subr.mxu0 0.0
        %1183 = vmatpush1.xpose.msra.mxu0 0.0
        %1184 = vmatprep.subr.mxu0 0.0
        %1185 = vmatpush1.xpose.msra.mxu0 0.0
        %1186 = vmatprep.subr.mxu0 0.0
        %1187 = vmatpush1.xpose.msra.mxu0 0.0
        %1188 = vmatprep.subr.mxu0 0.0
        %1189 = vmatpush1.xpose.msra.mxu0 0.0
        %1190 = vmatprep.subr.mxu0 0.0
        %1191 = vmatpush1.xpose.msra.mxu0 0.0
        %1192 = vmatprep.subr.mxu0 0.0
        %1193 = vmatpush1.xpose.msra.mxu0 0.0
        %1194 = vmatprep.subr.mxu0 0.0
        %1195 = vmatpush1.xpose.msra.mxu0 0.0
        %1196 = vmatprep.subr.mxu0 0.0
        %1197 = vmatpush1.xpose.msra.mxu0 0.0
        %1198 = vmatprep.subr.mxu0 0.0
        %1199 = vmatpush1.xpose.msra.mxu0 0.0
        %1200 = vmatprep.subr.mxu0 0.0
        %1201 = vmatpush1.xpose.msra.mxu0 0.0
        %1202 = vmatprep.subr.mxu0 0.0
        %1203 = vmatpush1.xpose.msra.mxu0 0.0
        %1204 = vmatprep.subr.mxu0 0.0
        %1205 = vmatpush1.xpose.msra.mxu0 0.0
        %1206 = vmatprep.subr.mxu0 0.0
        %1207 = vmatpush1.xpose.msra.mxu0 0.0
        %1208 = vmatprep.subr.mxu0 0.0
        %1209 = vmatpush1.xpose.msra.mxu0 0.0
        %1210 = vmatprep.subr.mxu0 0.0
        %1211 = vmatpush1.xpose.msra.mxu0 0.0
        %1212 = vmatprep.subr.mxu0 0.0
        %1213 = vmatpush1.xpose.msra.mxu0 0.0
        %1214 = vmatprep.subr.mxu0 0.0
        %1215 = vmatpush1.xpose.msra.mxu0 0.0
        %1216 = vmatprep.subr.mxu0 0.0
        %1217 = vmatpush1.xpose.msra.mxu0 0.0
        %1218 = vmatprep.subr.mxu0 0.0
        %1219 = vmatpush1.xpose.msra.mxu0 0.0
        %1220 = vmatprep.subr.mxu0 0.0
        %1221 = vmatpush1.xpose.msra.mxu0 0.0
        %1222 = vmatprep.subr.mxu0 0.0
        %1223 = vmatpush1.xpose.msra.mxu0 0.0
        %1224 = vmatprep.subr.mxu0 0.0
        %1225 = vmatpush1.xpose.msra.mxu0 0.0
        %1226 = vmatprep.subr.mxu0 0.0
        %1227 = vmatpush1.xpose.msra.mxu0 0.0
        %1228 = vmatprep.subr.mxu0 0.0
        %1229 = vmatpush1.xpose.msra.mxu0 0.0
        %1230 = vmatprep.subr.mxu0 0.0
        %1231 = vmatpush1.xpose.msra.mxu0 0.0
        %1232 = vmatprep.subr.mxu0 0.0
        %1233 = vmatpush1.xpose.msra.mxu0 0.0
        %1234 = vmatprep.subr.mxu0 0.0
        %1235 = vmatpush1.xpose.msra.mxu0 0.0
        %1236 = vmatprep.subr.mxu0 0.0
        %1237 = vmatpush1.xpose.msra.mxu0 0.0
        %1238 = vmatprep.mubr.f32.mxu0 0.0
        %1239 = vmatmul.mubr.f32.gmra.mrb[0].mxu0 %v1169
        %v1240 = vpop.f32.mrb[0].mxu0
        %v1241 = vadd.f32 0.0, %v1240
        %v1242 = vpop.f32.mrb[0].mxu0
        %1243 = vdwg.mxu0
        %v1245 = vsel %vm1167, %v1164, 0
        %v1248 = vsel %vm1167, %v1014, 0
        %1250 = vmatprep.subr.mxu0 0.0
        %1251 = vmatpush1.xpose.msra.mxu0 %v1248
        %1252 = vmatprep.subr.mxu0 0.0
        %1253 = vmatpush1.xpose.msra.mxu0 0.0
        %1254 = vmatprep.subr.mxu0 0.0
        %1255 = vmatpush1.xpose.msra.mxu0 0.0
        %1256 = vmatprep.subr.mxu0 0.0
        %1257 = vmatpush1.xpose.msra.mxu0 0.0
        %1258 = vmatprep.subr.mxu0 0.0
        %1259 = vmatpush1.xpose.msra.mxu0 0.0
        %1260 = vmatprep.subr.mxu0 0.0
        %1261 = vmatpush1.xpose.msra.mxu0 0.0
        %1262 = vmatprep.subr.mxu0 0.0
        %1263 = vmatpush1.xpose.msra.mxu0 0.0
        %1264 = vmatprep.subr.mxu0 0.0
        %1265 = vmatpush1.xpose.msra.mxu0 0.0
        %1266 = vmatprep.subr.mxu0 0.0
        %1267 = vmatpush1.xpose.msra.mxu0 0.0
        %1268 = vmatprep.subr.mxu0 0.0
        %1269 = vmatpush1.xpose.msra.mxu0 0.0
        %1270 = vmatprep.subr.mxu0 0.0
        %1271 = vmatpush1.xpose.msra.mxu0 0.0
        %1272 = vmatprep.subr.mxu0 0.0
        %1273 = vmatpush1.xpose.msra.mxu0 0.0
        %1274 = vmatprep.subr.mxu0 0.0
        %1275 = vmatpush1.xpose.msra.mxu0 0.0
        %1276 = vmatprep.subr.mxu0 0.0
        %1277 = vmatpush1.xpose.msra.mxu0 0.0
        %1278 = vmatprep.subr.mxu0 0.0
        %1279 = vmatpush1.xpose.msra.mxu0 0.0
        %1280 = vmatprep.subr.mxu0 0.0
        %1281 = vmatpush1.xpose.msra.mxu0 0.0
        %1282 = vmatprep.subr.mxu0 0.0
        %1283 = vmatpush1.xpose.msra.mxu0 0.0
        %1284 = vmatprep.subr.mxu0 0.0
        %1285 = vmatpush1.xpose.msra.mxu0 0.0
        %1286 = vmatprep.subr.mxu0 0.0
        %1287 = vmatpush1.xpose.msra.mxu0 0.0
        %1288 = vmatprep.subr.mxu0 0.0
        %1289 = vmatpush1.xpose.msra.mxu0 0.0
        %1290 = vmatprep.subr.mxu0 0.0
        %1291 = vmatpush1.xpose.msra.mxu0 0.0
        %1292 = vmatprep.subr.mxu0 0.0
        %1293 = vmatpush1.xpose.msra.mxu0 0.0
        %1294 = vmatprep.subr.mxu0 0.0
        %1295 = vmatpush1.xpose.msra.mxu0 0.0
        %1296 = vmatprep.subr.mxu0 0.0
        %1297 = vmatpush1.xpose.msra.mxu0 0.0
        %1298 = vmatprep.subr.mxu0 0.0
        %1299 = vmatpush1.xpose.msra.mxu0 0.0
        %1300 = vmatprep.subr.mxu0 0.0
        %1301 = vmatpush1.xpose.msra.mxu0 0.0
        %1302 = vmatprep.subr.mxu0 0.0
        %1303 = vmatpush1.xpose.msra.mxu0 0.0
        %1304 = vmatprep.subr.mxu0 0.0
        %1305 = vmatpush1.xpose.msra.mxu0 0.0
        %1306 = vmatprep.subr.mxu0 0.0
        %1307 = vmatpush1.xpose.msra.mxu0 0.0
        %1308 = vmatprep.subr.mxu0 0.0
        %1309 = vmatpush1.xpose.msra.mxu0 0.0
        %1310 = vmatprep.subr.mxu0 0.0
        %1311 = vmatpush1.xpose.msra.mxu0 0.0
        %1312 = vmatprep.subr.mxu0 0.0
        %1313 = vmatpush1.xpose.msra.mxu0 0.0
        %1314 = vmatprep.mubr.f32.mxu0 0.0
        %1315 = vmatmul.mubr.f32.gmra.mrb[0].mxu0 %v1245
        %v1316 = vpop.f32.mrb[0].mxu0
        %v1317 = vadd.f32 0.0, %v1316
        %v1318 = vpop.f32.mrb[0].mxu0
        %1319 = vdwg.mxu0
        %v1321 = vsel %vm1167, %v1165, 0
        %v1324 = vsel %vm1167, %v1015, 0
        %1326 = vmatprep.subr.mxu0 0.0
        %1327 = vmatpush1.xpose.msra.mxu0 %v1324
        %1328 = vmatprep.subr.mxu0 0.0
        %1329 = vmatpush1.xpose.msra.mxu0 0.0
        %1330 = vmatprep.subr.mxu0 0.0
        %1331 = vmatpush1.xpose.msra.mxu0 0.0
        %1332 = vmatprep.subr.mxu0 0.0
        %1333 = vmatpush1.xpose.msra.mxu0 0.0
        %1334 = vmatprep.subr.mxu0 0.0
        %1335 = vmatpush1.xpose.msra.mxu0 0.0
        %1336 = vmatprep.subr.mxu0 0.0
        %1337 = vmatpush1.xpose.msra.mxu0 0.0
        %1338 = vmatprep.subr.mxu0 0.0
        %1339 = vmatpush1.xpose.msra.mxu0 0.0
        %1340 = vmatprep.subr.mxu0 0.0
        %1341 = vmatpush1.xpose.msra.mxu0 0.0
        %1342 = vmatprep.subr.mxu0 0.0
        %1343 = vmatpush1.xpose.msra.mxu0 0.0
        %1344 = vmatprep.subr.mxu0 0.0
        %1345 = vmatpush1.xpose.msra.mxu0 0.0
        %1346 = vmatprep.subr.mxu0 0.0
        %1347 = vmatpush1.xpose.msra.mxu0 0.0
        %1348 = vmatprep.subr.mxu0 0.0
        %1349 = vmatpush1.xpose.msra.mxu0 0.0
        %1350 = vmatprep.subr.mxu0 0.0
        %1351 = vmatpush1.xpose.msra.mxu0 0.0
        %1352 = vmatprep.subr.mxu0 0.0
        %1353 = vmatpush1.xpose.msra.mxu0 0.0
        %1354 = vmatprep.subr.mxu0 0.0
        %1355 = vmatpush1.xpose.msra.mxu0 0.0
        %1356 = vmatprep.subr.mxu0 0.0
        %1357 = vmatpush1.xpose.msra.mxu0 0.0
        %1358 = vmatprep.subr.mxu0 0.0
        %1359 = vmatpush1.xpose.msra.mxu0 0.0
        %1360 = vmatprep.subr.mxu0 0.0
        %1361 = vmatpush1.xpose.msra.mxu0 0.0
        %1362 = vmatprep.subr.mxu0 0.0
        %1363 = vmatpush1.xpose.msra.mxu0 0.0
        %1364 = vmatprep.subr.mxu0 0.0
        %1365 = vmatpush1.xpose.msra.mxu0 0.0
        %1366 = vmatprep.subr.mxu0 0.0
        %1367 = vmatpush1.xpose.msra.mxu0 0.0
        %1368 = vmatprep.subr.mxu0 0.0
        %1369 = vmatpush1.xpose.msra.mxu0 0.0
        %1370 = vmatprep.subr.mxu0 0.0
        %1371 = vmatpush1.xpose.msra.mxu0 0.0
        %1372 = vmatprep.subr.mxu0 0.0
        %1373 = vmatpush1.xpose.msra.mxu0 0.0
        %1374 = vmatprep.subr.mxu0 0.0
        %1375 = vmatpush1.xpose.msra.mxu0 0.0
        %1376 = vmatprep.subr.mxu0 0.0
        %1377 = vmatpush1.xpose.msra.mxu0 0.0
        %1378 = vmatprep.subr.mxu0 0.0
        %1379 = vmatpush1.xpose.msra.mxu0 0.0
        %1380 = vmatprep.subr.mxu0 0.0
        %1381 = vmatpush1.xpose.msra.mxu0 0.0
        %1382 = vmatprep.subr.mxu0 0.0
        %1383 = vmatpush1.xpose.msra.mxu0 0.0
        %1384 = vmatprep.subr.mxu0 0.0
        %1385 = vmatpush1.xpose.msra.mxu0 0.0
        %1386 = vmatprep.subr.mxu0 0.0
        %1387 = vmatpush1.xpose.msra.mxu0 0.0
        %1388 = vmatprep.subr.mxu0 0.0
        %1389 = vmatpush1.xpose.msra.mxu0 0.0
        %1390 = vmatprep.mubr.f32.mxu0 0.0
        %1391 = vmatmul.mubr.f32.gmra.mrb[0].mxu0 %v1321
        %v1392 = vpop.f32.mrb[0].mxu0
        %v1393 = vadd.f32 0.0, %v1392
        %v1394 = vpop.f32.mrb[0].mxu0
        %1395 = vdwg.mxu0
        %v1397 = vsel %vm1167, %v1166, 0
        %v1400 = vsel %vm1167, %v1016, 0
        %1402 = vmatprep.subr.mxu0 0.0
        %1403 = vmatpush1.xpose.msra.mxu0 %v1400
        %1404 = vmatprep.subr.mxu0 0.0
        %1405 = vmatpush1.xpose.msra.mxu0 0.0
        %1406 = vmatprep.subr.mxu0 0.0
        %1407 = vmatpush1.xpose.msra.mxu0 0.0
        %1408 = vmatprep.subr.mxu0 0.0
        %1409 = vmatpush1.xpose.msra.mxu0 0.0
        %1410 = vmatprep.subr.mxu0 0.0
        %1411 = vmatpush1.xpose.msra.mxu0 0.0
        %1412 = vmatprep.subr.mxu0 0.0
        %1413 = vmatpush1.xpose.msra.mxu0 0.0
        %1414 = vmatprep.subr.mxu0 0.0
        %1415 = vmatpush1.xpose.msra.mxu0 0.0
        %1416 = vmatprep.subr.mxu0 0.0
        %1417 = vmatpush1.xpose.msra.mxu0 0.0
        %1418 = vmatprep.subr.mxu0 0.0
        %1419 = vmatpush1.xpose.msra.mxu0 0.0
        %1420 = vmatprep.subr.mxu0 0.0
        %1421 = vmatpush1.xpose.msra.mxu0 0.0
        %1422 = vmatprep.subr.mxu0 0.0
        %1423 = vmatpush1.xpose.msra.mxu0 0.0
        %1424 = vmatprep.subr.mxu0 0.0
        %1425 = vmatpush1.xpose.msra.mxu0 0.0
        %1426 = vmatprep.subr.mxu0 0.0
        %1427 = vmatpush1.xpose.msra.mxu0 0.0
        %1428 = vmatprep.subr.mxu0 0.0
        %1429 = vmatpush1.xpose.msra.mxu0 0.0
        %1430 = vmatprep.subr.mxu0 0.0
        %1431 = vmatpush1.xpose.msra.mxu0 0.0
        %1432 = vmatprep.subr.mxu0 0.0
        %1433 = vmatpush1.xpose.msra.mxu0 0.0
        %1434 = vmatprep.subr.mxu0 0.0
        %1435 = vmatpush1.xpose.msra.mxu0 0.0
        %1436 = vmatprep.subr.mxu0 0.0
        %1437 = vmatpush1.xpose.msra.mxu0 0.0
        %1438 = vmatprep.subr.mxu0 0.0
        %1439 = vmatpush1.xpose.msra.mxu0 0.0
        %1440 = vmatprep.subr.mxu0 0.0
        %1441 = vmatpush1.xpose.msra.mxu0 0.0
        %1442 = vmatprep.subr.mxu0 0.0
        %1443 = vmatpush1.xpose.msra.mxu0 0.0
        %1444 = vmatprep.subr.mxu0 0.0
        %1445 = vmatpush1.xpose.msra.mxu0 0.0
        %1446 = vmatprep.subr.mxu0 0.0
        %1447 = vmatpush1.xpose.msra.mxu0 0.0
        %1448 = vmatprep.subr.mxu0 0.0
        %1449 = vmatpush1.xpose.msra.mxu0 0.0
        %1450 = vmatprep.subr.mxu0 0.0
        %1451 = vmatpush1.xpose.msra.mxu0 0.0
        %1452 = vmatprep.subr.mxu0 0.0
        %1453 = vmatpush1.xpose.msra.mxu0 0.0
        %1454 = vmatprep.subr.mxu0 0.0
        %1455 = vmatpush1.xpose.msra.mxu0 0.0
        %1456 = vmatprep.subr.mxu0 0.0
        %1457 = vmatpush1.xpose.msra.mxu0 0.0
        %1458 = vmatprep.subr.mxu0 0.0
        %1459 = vmatpush1.xpose.msra.mxu0 0.0
        %1460 = vmatprep.subr.mxu0 0.0
        %1461 = vmatpush1.xpose.msra.mxu0 0.0
        %1462 = vmatprep.subr.mxu0 0.0
        %1463 = vmatpush1.xpose.msra.mxu0 0.0
        %1464 = vmatprep.subr.mxu0 0.0
        %1465 = vmatpush1.xpose.msra.mxu0 0.0
        %1466 = vmatprep.mubr.f32.mxu0 0.0
        %1467 = vmatmul.mubr.f32.gmra.mrb[0].mxu0 %v1397
        %v1468 = vpop.f32.mrb[0].mxu0
        %v1469 = vadd.f32 0.0, %v1468
        %v1470 = vpop.f32.mrb[0].mxu0
        %1471 = vdwg.mxu0
        %v1472 = vld [vmem:[#allocation3] sm:$0xff]
        %v1473 = vld [vmem:[#allocation3 + $0x8] sm:$0xff]
        %v1474 = vld [vmem:[#allocation3 + $0x10] sm:$0xff]
        %v1475 = vld [vmem:[#allocation3 + $0x18] sm:$0xff]
        %vm1476 = vcmask 64512
        %v1477 = vsel %vm1476, %v1241, -inf
        %1478 = vmax.xlane.f32.xlu0 %v1477
        %v1479 = vpop.xlane.xlu0 %1478
        %v1480 = vsel %vm1476, %v1317, -inf
        %1481 = vmax.xlane.f32.xlu0 %v1480
        %v1482 = vpop.xlane.xlu0 %1481
        %v1483 = vsel %vm1476, %v1393, -inf
        %1484 = vmax.xlane.f32.xlu0 %v1483
        %v1485 = vpop.xlane.xlu0 %1484
        %v1486 = vsel %vm1476, %v1469, -inf
        %1487 = vmax.xlane.f32.xlu0 %v1486
        %v1488 = vpop.xlane.xlu0 %1487
        %v1489 = vmax.f32 %v1472, %v1479
        %v1490 = vmax.f32 %v1473, %v1482
        %v1491 = vmax.f32 %v1474, %v1485
        %v1492 = vmax.f32 %v1475, %v1488
        %v1493 = vsub.f32 %v1472, %v1489
        %v1494 = vsub.f32 %v1473, %v1490
        %v1495 = vsub.f32 %v1474, %v1491
        %v1496 = vsub.f32 %v1475, %v1492
        %v1497 = vmul.f32 %v1493, 1.442695
        %v1498 = vpow.pop %v1497
        %v1499 = vmul.f32 %v1494, 1.442695
        %v1500 = vpow.pop %v1499
        %v1501 = vmul.f32 %v1495, 1.442695
        %v1502 = vpow.pop %v1501
        %v1503 = vmul.f32 %v1496, 1.442695
        %v1504 = vpow.pop %v1503
        %1506 = vset.pattern.permute.xlu0 0
        %1507 = vperm.xlu0 %1506, %v1489
        %v1508 = vpop.permute.xlu0 %1507
        %1511 = vset.pattern.permute.xlu0 0
        %1512 = vperm.xlu0 %1511, %v1490
        %v1513 = vpop.permute.xlu0 %1512
        %1516 = vset.pattern.permute.xlu0 0
        %1517 = vperm.xlu0 %1516, %v1491
        %v1518 = vpop.permute.xlu0 %1517
        %1521 = vset.pattern.permute.xlu0 0
        %1522 = vperm.xlu0 %1521, %v1492
        %v1523 = vpop.permute.xlu0 %1522
        %v1525 = vsub.f32 %v1241, %v1508
        %v1526 = vsub.f32 %v1317, %v1513
        %v1527 = vsub.f32 %v1393, %v1518
        %v1528 = vsub.f32 %v1469, %v1523
        %v1529 = vmul.f32 %v1525, 1.442695
        %v1530 = vpow.pop %v1529
        %v1531 = vmul.f32 %v1526, 1.442695
        %v1532 = vpow.pop %v1531
        %v1533 = vmul.f32 %v1527, 1.442695
        %v1534 = vpow.pop %v1533
        %v1535 = vmul.f32 %v1528, 1.442695
        %v1536 = vpow.pop %v1535
        %v1537 = vld [vmem:[#allocation4] sm:$0xff]
        %v1538 = vld [vmem:[#allocation4 + $0x8] sm:$0xff]
        %v1539 = vld [vmem:[#allocation4 + $0x10] sm:$0xff]
        %v1540 = vld [vmem:[#allocation4 + $0x18] sm:$0xff]
        %v1541 = vmul.f32 %v1498, %v1537
        %v1542 = vmul.f32 %v1500, %v1538
        %v1543 = vmul.f32 %v1502, %v1539
        %v1544 = vmul.f32 %v1504, %v1540
        %v1545 = vsel %vm1476, %v1530, 0.0
        %1546 = vadd.xlane.f32.xlu0 %v1545
        %v1547 = vpop.xlane.xlu0 %1546
        %v1548 = vsel %vm1476, %v1532, 0.0
        %1549 = vadd.xlane.f32.xlu0 %v1548
        %v1550 = vpop.xlane.xlu0 %1549
        %v1551 = vsel %vm1476, %v1534, 0.0
        %1552 = vadd.xlane.f32.xlu0 %v1551
        %v1553 = vpop.xlane.xlu0 %1552
        %v1554 = vsel %vm1476, %v1536, 0.0
        %1555 = vadd.xlane.f32.xlu0 %v1554
        %v1556 = vpop.xlane.xlu0 %1555
        %v1557 = vadd.f32 %v1541, %v1547
        %v1558 = vadd.f32 %v1542, %v1550
        %v1559 = vadd.f32 %v1543, %v1553
        %v1560 = vadd.f32 %v1544, %v1556
        %vm1561 = vcmask 7168
        %1562 = vst.msk [vmem:[#allocation4] sm:$0xff] %vm1561, %v1557
        %1563 = vst.msk [vmem:[#allocation4 + $0x8] sm:$0xff] %vm1561, %v1558
        %1564 = vst.msk [vmem:[#allocation4 + $0x10] sm:$0xff] %vm1561, %v1559
        %1565 = vst.msk [vmem:[#allocation4 + $0x18] sm:$0xff] %vm1561, %v1560
        %v1566 = vld [vmem:[#allocation5] sm:$0xff]
        %v1567 = vld [vmem:[#allocation5 + $0x8] sm:$0xff]
        %v1568 = vld [vmem:[#allocation5 + $0x10] sm:$0xff]
        %v1569 = vld [vmem:[#allocation5 + $0x18] sm:$0xff]
        %1571 = vset.pattern.permute.xlu0 0
        %1572 = vperm.xlu0 %1571, %v1498
        %v1573 = vpop.permute.xlu0 %1572
        %1576 = vset.pattern.permute.xlu0 0
        %1577 = vperm.xlu0 %1576, %v1500
        %v1578 = vpop.permute.xlu0 %1577
        %1581 = vset.pattern.permute.xlu0 0
        %1582 = vperm.xlu0 %1581, %v1502
        %v1583 = vpop.permute.xlu0 %1582
        %1586 = vset.pattern.permute.xlu0 0
        %1587 = vperm.xlu0 %1586, %v1504
        %v1588 = vpop.permute.xlu0 %1587
        %v1590 = vmul.f32 %v1573, %v1566
        %v1591 = vmul.f32 %v1578, %v1567
        %v1592 = vmul.f32 %v1583, %v1568
        %v1593 = vmul.f32 %v1588, %v1569
        %v1595 = vsel %vm1476, %v1530, 0
        %1597 = vmatprep.subr.mxu0 0.0
        %1598 = vmatpush1.msra.mxu0 %v1159
        %1599 = vmatprep.subr.mxu0 0.0
        %1600 = vmatpush1.msra.mxu0 0.0
        %1601 = vmatprep.subr.mxu0 0.0
        %1602 = vmatpush1.msra.mxu0 0.0
        %1603 = vmatprep.subr.mxu0 0.0
        %1604 = vmatpush1.msra.mxu0 0.0
        %1605 = vmatprep.subr.mxu0 0.0
        %1606 = vmatpush1.msra.mxu0 0.0
        %1607 = vmatprep.subr.mxu0 0.0
        %1608 = vmatpush1.msra.mxu0 0.0
        %1609 = vmatprep.subr.mxu0 0.0
        %1610 = vmatpush1.msra.mxu0 0.0
        %1611 = vmatprep.subr.mxu0 0.0
        %1612 = vmatpush1.msra.mxu0 0.0
        %1613 = vmatprep.subr.mxu0 0.0
        %1614 = vmatpush1.msra.mxu0 0.0
        %1615 = vmatprep.subr.mxu0 0.0
        %1616 = vmatpush1.msra.mxu0 0.0
        %1617 = vmatprep.subr.mxu0 0.0
        %1618 = vmatpush1.msra.mxu0 0.0
        %1619 = vmatprep.subr.mxu0 0.0
        %1620 = vmatpush1.msra.mxu0 0.0
        %1621 = vmatprep.subr.mxu0 0.0
        %1622 = vmatpush1.msra.mxu0 0.0
        %1623 = vmatprep.subr.mxu0 0.0
        %1624 = vmatpush1.msra.mxu0 0.0
        %1625 = vmatprep.subr.mxu0 0.0
        %1626 = vmatpush1.msra.mxu0 0.0
        %1627 = vmatprep.subr.mxu0 0.0
        %1628 = vmatpush1.msra.mxu0 0.0
        %1629 = vmatprep.subr.mxu0 0.0
        %1630 = vmatpush1.msra.mxu0 0.0
        %1631 = vmatprep.subr.mxu0 0.0
        %1632 = vmatpush1.msra.mxu0 0.0
        %1633 = vmatprep.subr.mxu0 0.0
        %1634 = vmatpush1.msra.mxu0 0.0
        %1635 = vmatprep.subr.mxu0 0.0
        %1636 = vmatpush1.msra.mxu0 0.0
        %1637 = vmatprep.subr.mxu0 0.0
        %1638 = vmatpush1.msra.mxu0 0.0
        %1639 = vmatprep.subr.mxu0 0.0
        %1640 = vmatpush1.msra.mxu0 0.0
        %1641 = vmatprep.subr.mxu0 0.0
        %1642 = vmatpush1.msra.mxu0 0.0
        %1643 = vmatprep.subr.mxu0 0.0
        %1644 = vmatpush1.msra.mxu0 0.0
        %1645 = vmatprep.subr.mxu0 0.0
        %1646 = vmatpush1.msra.mxu0 0.0
        %1647 = vmatprep.subr.mxu0 0.0
        %1648 = vmatpush1.msra.mxu0 0.0
        %1649 = vmatprep.subr.mxu0 0.0
        %1650 = vmatpush1.msra.mxu0 0.0
        %1651 = vmatprep.subr.mxu0 0.0
        %1652 = vmatpush1.msra.mxu0 0.0
        %1653 = vmatprep.subr.mxu0 0.0
        %1654 = vmatpush1.msra.mxu0 0.0
        %1655 = vmatprep.subr.mxu0 0.0
        %1656 = vmatpush1.msra.mxu0 0.0
        %1657 = vmatprep.subr.mxu0 0.0
        %1658 = vmatpush1.msra.mxu0 0.0
        %1659 = vmatprep.subr.mxu0 0.0
        %1660 = vmatpush1.msra.mxu0 0.0
        %1661 = vmatprep.mubr.f32.mxu0 0.0
        %1662 = vmatmul.mubr.f32.gmra.mrb[0].mxu0 %v1595
        %v1663 = vpop.f32.mrb[0].mxu0
        %v1664 = vadd.f32 0.0, %v1663
        %v1665 = vpop.f32.mrb[0].mxu0
        %1666 = vdwg.mxu0
        %v1668 = vsel %vm1476, %v1532, 0
        %1670 = vmatprep.subr.mxu0 0.0
        %1671 = vmatpush1.msra.mxu0 %v1160
        %1672 = vmatprep.subr.mxu0 0.0
        %1673 = vmatpush1.msra.mxu0 0.0
        %1674 = vmatprep.subr.mxu0 0.0
        %1675 = vmatpush1.msra.mxu0 0.0
        %1676 = vmatprep.subr.mxu0 0.0
        %1677 = vmatpush1.msra.mxu0 0.0
        %1678 = vmatprep.subr.mxu0 0.0
        %1679 = vmatpush1.msra.mxu0 0.0
        %1680 = vmatprep.subr.mxu0 0.0
        %1681 = vmatpush1.msra.mxu0 0.0
        %1682 = vmatprep.subr.mxu0 0.0
        %1683 = vmatpush1.msra.mxu0 0.0
        %1684 = vmatprep.subr.mxu0 0.0
        %1685 = vmatpush1.msra.mxu0 0.0
        %1686 = vmatprep.subr.mxu0 0.0
        %1687 = vmatpush1.msra.mxu0 0.0
        %1688 = vmatprep.subr.mxu0 0.0
        %1689 = vmatpush1.msra.mxu0 0.0
        %1690 = vmatprep.subr.mxu0 0.0
        %1691 = vmatpush1.msra.mxu0 0.0
        %1692 = vmatprep.subr.mxu0 0.0
        %1693 = vmatpush1.msra.mxu0 0.0
        %1694 = vmatprep.subr.mxu0 0.0
        %1695 = vmatpush1.msra.mxu0 0.0
        %1696 = vmatprep.subr.mxu0 0.0
        %1697 = vmatpush1.msra.mxu0 0.0
        %1698 = vmatprep.subr.mxu0 0.0
        %1699 = vmatpush1.msra.mxu0 0.0
        %1700 = vmatprep.subr.mxu0 0.0
        %1701 = vmatpush1.msra.mxu0 0.0
        %1702 = vmatprep.subr.mxu0 0.0
        %1703 = vmatpush1.msra.mxu0 0.0
        %1704 = vmatprep.subr.mxu0 0.0
        %1705 = vmatpush1.msra.mxu0 0.0
        %1706 = vmatprep.subr.mxu0 0.0
        %1707 = vmatpush1.msra.mxu0 0.0
        %1708 = vmatprep.subr.mxu0 0.0
        %1709 = vmatpush1.msra.mxu0 0.0
        %1710 = vmatprep.subr.mxu0 0.0
        %1711 = vmatpush1.msra.mxu0 0.0
        %1712 = vmatprep.subr.mxu0 0.0
        %1713 = vmatpush1.msra.mxu0 0.0
        %1714 = vmatprep.subr.mxu0 0.0
        %1715 = vmatpush1.msra.mxu0 0.0
        %1716 = vmatprep.subr.mxu0 0.0
        %1717 = vmatpush1.msra.mxu0 0.0
        %1718 = vmatprep.subr.mxu0 0.0
        %1719 = vmatpush1.msra.mxu0 0.0
        %1720 = vmatprep.subr.mxu0 0.0
        %1721 = vmatpush1.msra.mxu0 0.0
        %1722 = vmatprep.subr.mxu0 0.0
        %1723 = vmatpush1.msra.mxu0 0.0
        %1724 = vmatprep.subr.mxu0 0.0
        %1725 = vmatpush1.msra.mxu0 0.0
        %1726 = vmatprep.subr.mxu0 0.0
        %1727 = vmatpush1.msra.mxu0 0.0
        %1728 = vmatprep.subr.mxu0 0.0
        %1729 = vmatpush1.msra.mxu0 0.0
        %1730 = vmatprep.subr.mxu0 0.0
        %1731 = vmatpush1.msra.mxu0 0.0
        %1732 = vmatprep.subr.mxu0 0.0
        %1733 = vmatpush1.msra.mxu0 0.0
        %1734 = vmatprep.mubr.f32.mxu0 0.0
        %1735 = vmatmul.mubr.f32.gmra.mrb[0].mxu0 %v1668
        %v1736 = vpop.f32.mrb[0].mxu0
        %v1737 = vadd.f32 0.0, %v1736
        %v1738 = vpop.f32.mrb[0].mxu0
        %1739 = vdwg.mxu0
        %v1741 = vsel %vm1476, %v1534, 0
        %1743 = vmatprep.subr.mxu0 0.0
        %1744 = vmatpush1.msra.mxu0 %v1161
        %1745 = vmatprep.subr.mxu0 0.0
        %1746 = vmatpush1.msra.mxu0 0.0
        %1747 = vmatprep.subr.mxu0 0.0
        %1748 = vmatpush1.msra.mxu0 0.0
        %1749 = vmatprep.subr.mxu0 0.0
        %1750 = vmatpush1.msra.mxu0 0.0
        %1751 = vmatprep.subr.mxu0 0.0
        %1752 = vmatpush1.msra.mxu0 0.0
        %1753 = vmatprep.subr.mxu0 0.0
        %1754 = vmatpush1.msra.mxu0 0.0
        %1755 = vmatprep.subr.mxu0 0.0
        %1756 = vmatpush1.msra.mxu0 0.0
        %1757 = vmatprep.subr.mxu0 0.0
        %1758 = vmatpush1.msra.mxu0 0.0
        %1759 = vmatprep.subr.mxu0 0.0
        %1760 = vmatpush1.msra.mxu0 0.0
        %1761 = vmatprep.subr.mxu0 0.0
        %1762 = vmatpush1.msra.mxu0 0.0
        %1763 = vmatprep.subr.mxu0 0.0
        %1764 = vmatpush1.msra.mxu0 0.0
        %1765 = vmatprep.subr.mxu0 0.0
        %1766 = vmatpush1.msra.mxu0 0.0
        %1767 = vmatprep.subr.mxu0 0.0
        %1768 = vmatpush1.msra.mxu0 0.0
        %1769 = vmatprep.subr.mxu0 0.0
        %1770 = vmatpush1.msra.mxu0 0.0
        %1771 = vmatprep.subr.mxu0 0.0
        %1772 = vmatpush1.msra.mxu0 0.0
        %1773 = vmatprep.subr.mxu0 0.0
        %1774 = vmatpush1.msra.mxu0 0.0
        %1775 = vmatprep.subr.mxu0 0.0
        %1776 = vmatpush1.msra.mxu0 0.0
        %1777 = vmatprep.subr.mxu0 0.0
        %1778 = vmatpush1.msra.mxu0 0.0
        %1779 = vmatprep.subr.mxu0 0.0
        %1780 = vmatpush1.msra.mxu0 0.0
        %1781 = vmatprep.subr.mxu0 0.0
        %1782 = vmatpush1.msra.mxu0 0.0
        %1783 = vmatprep.subr.mxu0 0.0
        %1784 = vmatpush1.msra.mxu0 0.0
        %1785 = vmatprep.subr.mxu0 0.0
        %1786 = vmatpush1.msra.mxu0 0.0
        %1787 = vmatprep.subr.mxu0 0.0
        %1788 = vmatpush1.msra.mxu0 0.0
        %1789 = vmatprep.subr.mxu0 0.0
        %1790 = vmatpush1.msra.mxu0 0.0
        %1791 = vmatprep.subr.mxu0 0.0
        %1792 = vmatpush1.msra.mxu0 0.0
        %1793 = vmatprep.subr.mxu0 0.0
        %1794 = vmatpush1.msra.mxu0 0.0
        %1795 = vmatprep.subr.mxu0 0.0
        %1796 = vmatpush1.msra.mxu0 0.0
        %1797 = vmatprep.subr.mxu0 0.0
        %1798 = vmatpush1.msra.mxu0 0.0
        %1799 = vmatprep.subr.mxu0 0.0
        %1800 = vmatpush1.msra.mxu0 0.0
        %1801 = vmatprep.subr.mxu0 0.0
        %1802 = vmatpush1.msra.mxu0 0.0
        %1803 = vmatprep.subr.mxu0 0.0
        %1804 = vmatpush1.msra.mxu0 0.0
        %1805 = vmatprep.subr.mxu0 0.0
        %1806 = vmatpush1.msra.mxu0 0.0
        %1807 = vmatprep.mubr.f32.mxu0 0.0
        %1808 = vmatmul.mubr.f32.gmra.mrb[0].mxu0 %v1741
        %v1809 = vpop.f32.mrb[0].mxu0
        %v1810 = vadd.f32 0.0, %v1809
        %v1811 = vpop.f32.mrb[0].mxu0
        %1812 = vdwg.mxu0
        %v1814 = vsel %vm1476, %v1536, 0
        %1816 = vmatprep.subr.mxu0 0.0
        %1817 = vmatpush1.msra.mxu0 %v1162
        %1818 = vmatprep.subr.mxu0 0.0
        %1819 = vmatpush1.msra.mxu0 0.0
        %1820 = vmatprep.subr.mxu0 0.0
        %1821 = vmatpush1.msra.mxu0 0.0
        %1822 = vmatprep.subr.mxu0 0.0
        %1823 = vmatpush1.msra.mxu0 0.0
        %1824 = vmatprep.subr.mxu0 0.0
        %1825 = vmatpush1.msra.mxu0 0.0
        %1826 = vmatprep.subr.mxu0 0.0
        %1827 = vmatpush1.msra.mxu0 0.0
        %1828 = vmatprep.subr.mxu0 0.0
        %1829 = vmatpush1.msra.mxu0 0.0
        %1830 = vmatprep.subr.mxu0 0.0
        %1831 = vmatpush1.msra.mxu0 0.0
        %1832 = vmatprep.subr.mxu0 0.0
        %1833 = vmatpush1.msra.mxu0 0.0
        %1834 = vmatprep.subr.mxu0 0.0
        %1835 = vmatpush1.msra.mxu0 0.0
        %1836 = vmatprep.subr.mxu0 0.0
        %1837 = vmatpush1.msra.mxu0 0.0
        %1838 = vmatprep.subr.mxu0 0.0
        %1839 = vmatpush1.msra.mxu0 0.0
        %1840 = vmatprep.subr.mxu0 0.0
        %1841 = vmatpush1.msra.mxu0 0.0
        %1842 = vmatprep.subr.mxu0 0.0
        %1843 = vmatpush1.msra.mxu0 0.0
        %1844 = vmatprep.subr.mxu0 0.0
        %1845 = vmatpush1.msra.mxu0 0.0
        %1846 = vmatprep.subr.mxu0 0.0
        %1847 = vmatpush1.msra.mxu0 0.0
        %1848 = vmatprep.subr.mxu0 0.0
        %1849 = vmatpush1.msra.mxu0 0.0
        %1850 = vmatprep.subr.mxu0 0.0
        %1851 = vmatpush1.msra.mxu0 0.0
        %1852 = vmatprep.subr.mxu0 0.0
        %1853 = vmatpush1.msra.mxu0 0.0
        %1854 = vmatprep.subr.mxu0 0.0
        %1855 = vmatpush1.msra.mxu0 0.0
        %1856 = vmatprep.subr.mxu0 0.0
        %1857 = vmatpush1.msra.mxu0 0.0
        %1858 = vmatprep.subr.mxu0 0.0
        %1859 = vmatpush1.msra.mxu0 0.0
        %1860 = vmatprep.subr.mxu0 0.0
        %1861 = vmatpush1.msra.mxu0 0.0
        %1862 = vmatprep.subr.mxu0 0.0
        %1863 = vmatpush1.msra.mxu0 0.0
        %1864 = vmatprep.subr.mxu0 0.0
        %1865 = vmatpush1.msra.mxu0 0.0
        %1866 = vmatprep.subr.mxu0 0.0
        %1867 = vmatpush1.msra.mxu0 0.0
        %1868 = vmatprep.subr.mxu0 0.0
        %1869 = vmatpush1.msra.mxu0 0.0
        %1870 = vmatprep.subr.mxu0 0.0
        %1871 = vmatpush1.msra.mxu0 0.0
        %1872 = vmatprep.subr.mxu0 0.0
        %1873 = vmatpush1.msra.mxu0 0.0
        %1874 = vmatprep.subr.mxu0 0.0
        %1875 = vmatpush1.msra.mxu0 0.0
        %1876 = vmatprep.subr.mxu0 0.0
        %1877 = vmatpush1.msra.mxu0 0.0
        %1878 = vmatprep.subr.mxu0 0.0
        %1879 = vmatpush1.msra.mxu0 0.0
        %1880 = vmatprep.mubr.f32.mxu0 0.0
        %1881 = vmatmul.mubr.f32.gmra.mrb[0].mxu0 %v1814
        %v1882 = vpop.f32.mrb[0].mxu0
        %v1883 = vadd.f32 0.0, %v1882
        %v1884 = vpop.f32.mrb[0].mxu0
        %1885 = vdwg.mxu0
        %v1886 = vadd.f32 %v1590, %v1664
        %v1887 = vadd.f32 %v1591, %v1737
        %v1888 = vadd.f32 %v1592, %v1810
        %v1889 = vadd.f32 %v1593, %v1883
        %1890 = vst.msk [vmem:[#allocation5] sm:$0xff] %vm1167, %v1886
        %1891 = vst.msk [vmem:[#allocation5 + $0x8] sm:$0xff] %vm1167, %v1887
        %1892 = vst.msk [vmem:[#allocation5 + $0x10] sm:$0xff] %vm1167, %v1888
        %1893 = vst.msk [vmem:[#allocation5 + $0x18] sm:$0xff] %vm1167, %v1889
        %1894 = vst.msk [vmem:[#allocation3] sm:$0xff] %vm1561, %v1489
        %1895 = vst.msk [vmem:[#allocation3 + $0x8] sm:$0xff] %vm1561, %v1490
        %1896 = vst.msk [vmem:[#allocation3 + $0x10] sm:$0xff] %vm1561, %v1491
        %1897 = vst.msk [vmem:[#allocation3 + $0x18] sm:$0xff] %vm1561, %v1492
        %p1898 = scmp.eq.s32.totalorder %s35, 1
        // Predicated region
        $region85: #{_lambda_.3} parent=59 // pred_check
          %p1899 = pneg %p1898
        $region86: #{_lambda_.3} parent=59 // pred_check_branch
          %1901 = sbr.rel (%p1899) target = $region88
        $region87: #{_lambda_.3} parent=59 // pred_region
          %v1902 = vld [vmem:[#allocation5] sm:$0xff]
          %v1903 = vld [vmem:[#allocation5 + $0x8] sm:$0xff]
          %v1904 = vld [vmem:[#allocation5 + $0x10] sm:$0xff]
          %v1905 = vld [vmem:[#allocation5 + $0x18] sm:$0xff]
          %v1906 = vld [vmem:[#allocation4] sm:$0xff]
          %v1907 = vld [vmem:[#allocation4 + $0x8] sm:$0xff]
          %v1908 = vld [vmem:[#allocation4 + $0x10] sm:$0xff]
          %v1909 = vld [vmem:[#allocation4 + $0x18] sm:$0xff]
          %v1910 = vrcp.pop %v1906
          %v1911 = vrcp.pop %v1907
          %v1912 = vrcp.pop %v1908
          %v1913 = vrcp.pop %v1909
          %v1914 = vmul.f32 %v1906, %v1910
          %v1915 = vmul.f32 %v1907, %v1911
          %v1916 = vmul.f32 %v1908, %v1912
          %v1917 = vmul.f32 %v1909, %v1913
          %v1918 = vsub.f32 2.0, %v1914
          %v1919 = vsub.f32 2.0, %v1915
          %v1920 = vsub.f32 2.0, %v1916
          %v1921 = vsub.f32 2.0, %v1917
          %v1922 = vmul.f32 %v1910, %v1918
          %v1923 = vmul.f32 %v1911, %v1919
          %v1924 = vmul.f32 %v1912, %v1920
          %v1925 = vmul.f32 %v1913, %v1921
          %1927 = vset.pattern.permute.xlu0 0
          %1928 = vperm.xlu0 %1927, %v1922
          %v1929 = vpop.permute.xlu0 %1928
          %1932 = vset.pattern.permute.xlu0 0
          %1933 = vperm.xlu0 %1932, %v1923
          %v1934 = vpop.permute.xlu0 %1933
          %1937 = vset.pattern.permute.xlu0 0
          %1938 = vperm.xlu0 %1937, %v1924
          %v1939 = vpop.permute.xlu0 %1938
          %1942 = vset.pattern.permute.xlu0 0
          %1943 = vperm.xlu0 %1942, %v1925
          %v1944 = vpop.permute.xlu0 %1943
          %v1946 = vmul.f32 %v1902, %v1929
          %v1947 = vmul.f32 %v1903, %v1934
          %v1948 = vmul.f32 %v1904, %v1939
          %v1949 = vmul.f32 %v1905, %v1944
          %v1950 = vcombine.low %v1946, %v1948
          %v1951 = vcombine.high %v1946, %v1948
          %v1953 = vunpack.c.l.s4 1983009808
          %v1954 = vunpack.c.0.s8 %v1953
          %v1955 = vlaneseq
          %v1956 = vshrl.u32 %v1955, 7
          %v1957 = vsub.s32 %v1954, %v1956
          %v1958 = vrot.slane %v1950, %v1957
          %v1960 = vunpack.c.l.s4 1983009808
          %v1961 = vunpack.c.0.s8 %v1960
          %v1962 = vlaneseq
          %v1963 = vshrl.u32 %v1962, 7
          %v1964 = vsub.s32 %v1961, %v1963
          %v1965 = vrot.slane %v1951, %v1964
          %v1966 = vcombine.low %v1947, %v1949
          %v1967 = vcombine.high %v1947, %v1949
          %v1969 = vunpack.c.l.s4 1983009808
          %v1970 = vunpack.c.0.s8 %v1969
          %v1971 = vlaneseq
          %v1972 = vshrl.u32 %v1971, 7
          %v1973 = vsub.s32 %v1970, %v1972
          %v1974 = vrot.slane %v1966, %v1973
          %v1976 = vunpack.c.l.s4 1983009808
          %v1977 = vunpack.c.0.s8 %v1976
          %v1978 = vlaneseq
          %v1979 = vshrl.u32 %v1978, 7
          %v1980 = vsub.s32 %v1977, %v1979
          %v1981 = vrot.slane %v1967, %v1980
          %v1982 = vcombine.low %v1958, %v1974
          %v1983 = vcombine.high %v1958, %v1974
          %v1985 = vunpack.c.l.s4 1934713408
          %v1986 = vunpack.c.0.s8 %v1985
          %v1987 = vlaneseq
          %v1988 = vshrl.u32 %v1987, 7
          %v1989 = vsub.s32 %v1986, %v1988
          %v1990 = vrot.slane %v1982, %v1989
          %v1992 = vunpack.c.l.s4 1934713408
          %v1993 = vunpack.c.0.s8 %v1992
          %v1994 = vlaneseq
          %v1995 = vshrl.u32 %v1994, 7
          %v1996 = vsub.s32 %v1993, %v1995
          %v1997 = vrot.slane %v1983, %v1996
          %v1998 = vcombine.low %v1965, %v1981
          %v1999 = vcombine.high %v1965, %v1981
          %v2001 = vunpack.c.l.s4 1934713408
          %v2002 = vunpack.c.0.s8 %v2001
          %v2003 = vlaneseq
          %v2004 = vshrl.u32 %v2003, 7
          %v2005 = vsub.s32 %v2002, %v2004
          %v2006 = vrot.slane %v1998, %v2005
          %v2008 = vunpack.c.l.s4 1934713408
          %v2009 = vunpack.c.0.s8 %v2008
          %v2010 = vlaneseq
          %v2011 = vshrl.u32 %v2010, 7
          %v2012 = vsub.s32 %v2009, %v2011
          %v2013 = vrot.slane %v1999, %v2012
          %v2014 = vcombine.high %v1990, 0.0
          %v2015 = vcombine.high %v1997, 0.0
          %v2016 = vcombine.high %v2006, 0.0
          %v2017 = vcombine.high %v2013, 0.0
          %v2018 = vcombine.low %v1990, %v1997
          %v2020 = vunpack.c.l.s4 1983009808
          %v2021 = vunpack.c.0.s8 %v2020
          %v2022 = vlaneseq
          %v2023 = vshrl.u32 %v2022, 7
          %v2024 = vsub.s32 %v2021, %v2023
          %v2025 = vrot.slane %v2018, %v2024
          %v2026 = vcombine.low %v2014, %v2015
          %v2028 = vunpack.c.l.s4 1983009808
          %v2029 = vunpack.c.0.s8 %v2028
          %v2030 = vlaneseq
          %v2031 = vshrl.u32 %v2030, 7
          %v2032 = vsub.s32 %v2029, %v2031
          %v2033 = vrot.slane %v2026, %v2032
          %v2034 = vcombine.low %v2006, %v2013
          %v2036 = vunpack.c.l.s4 1983009808
          %v2037 = vunpack.c.0.s8 %v2036
          %v2038 = vlaneseq
          %v2039 = vshrl.u32 %v2038, 7
          %v2040 = vsub.s32 %v2037, %v2039
          %v2041 = vrot.slane %v2034, %v2040
          %v2042 = vcombine.low %v2016, %v2017
          %v2044 = vunpack.c.l.s4 1983009808
          %v2045 = vunpack.c.0.s8 %v2044
          %v2046 = vlaneseq
          %v2047 = vshrl.u32 %v2046, 7
          %v2048 = vsub.s32 %v2045, %v2047
          %v2049 = vrot.slane %v2042, %v2048
          %v2050 = vcombine.low %v2025, %v2033
          %v2051 = vcombine.high %v2025, %v2033
          %v2053 = vunpack.c.l.s4 1934713408
          %v2054 = vunpack.c.0.s8 %v2053
          %v2055 = vlaneseq
          %v2056 = vshrl.u32 %v2055, 7
          %v2057 = vsub.s32 %v2054, %v2056
          %v2058 = vrot.slane %v2050, %v2057
          %v2060 = vunpack.c.l.s4 1934713408
          %v2061 = vunpack.c.0.s8 %v2060
          %v2062 = vlaneseq
          %v2063 = vshrl.u32 %v2062, 7
          %v2064 = vsub.s32 %v2061, %v2063
          %v2065 = vrot.slane %v2051, %v2064
          %v2066 = vcombine.low %v2041, %v2049
          %v2067 = vcombine.high %v2041, %v2049
          %v2069 = vunpack.c.l.s4 1934713408
          %v2070 = vunpack.c.0.s8 %v2069
          %v2071 = vlaneseq
          %v2072 = vshrl.u32 %v2071, 7
          %v2073 = vsub.s32 %v2070, %v2072
          %v2074 = vrot.slane %v2066, %v2073
          %v2076 = vunpack.c.l.s4 1934713408
          %v2077 = vunpack.c.0.s8 %v2076
          %v2078 = vlaneseq
          %v2079 = vshrl.u32 %v2078, 7
          %v2080 = vsub.s32 %v2077, %v2079
          %v2081 = vrot.slane %v2067, %v2080
          %v2082 = vcombine.low %v2058, %v2074
          %v2083 = vcombine.high %v2058, %v2074
          %v2084 = vcombine.low %v2065, %v2081
          %v2085 = vcombine.high %v2065, %v2081
          %2087 = vrot.lane.b32.xlu0 %v2083, 32
          %v2088 = vpop.permute.xlu0 %2087
          %2091 = vrot.lane.b32.xlu0 %v2084, 64
          %v2092 = vpop.permute.xlu0 %2091
          %2095 = vrot.lane.b32.xlu0 %v2085, 96
          %v2096 = vpop.permute.xlu0 %2095
          %v2098 = vsel %vm1167, %v2082, %v2088
          %vm2099 = vcmask 523264
          %v2100 = vsel %vm2099, %v2098, %v2092
          %vm2101 = vcmask 785408
          %v2102 = vsel %vm2101, %v2100, %v2096
          %v2103 = vld [vmem:[#allocation13] sm:$0xff]
          %v2104 = vld [vmem:[#allocation13 + $0x8] sm:$0xff]
          %v2105 = vld [vmem:[#allocation13 + $0x10] sm:$0xff]
          %v2106 = vld [vmem:[#allocation13 + $0x18] sm:$0xff]
          %v2107 = vld [vmem:[#allocation13 + $0x20] sm:$0xff]
          %v2108 = vld [vmem:[#allocation13 + $0x28] sm:$0xff]
          %v2109 = vld [vmem:[#allocation13 + $0x30] sm:$0xff]
          %v2110 = vld [vmem:[#allocation13 + $0x38] sm:$0xff]
          %v2111 = vld [vmem:[#allocation13 + $0x40] sm:$0xff]
          %v2112 = vld [vmem:[#allocation13 + $0x48] sm:$0xff]
          %v2113 = vld [vmem:[#allocation13 + $0x50] sm:$0xff]
          %v2114 = vld [vmem:[#allocation13 + $0x58] sm:$0xff]
          %v2115 = vld [vmem:[#allocation13 + $0x60] sm:$0xff]
          %v2116 = vld [vmem:[#allocation13 + $0x68] sm:$0xff]
          %v2117 = vld [vmem:[#allocation13 + $0x70] sm:$0xff]
          %v2118 = vld [vmem:[#allocation13 + $0x78] sm:$0xff]
          %v2119 = vld [vmem:[%s7] sm:$0x1]
          %v2121 = vlaneseq
          %v2122 = vshrl.u32 %v2121, 7
          %v2123 = vsub.s32 0, %v2122
          %v2124 = vrot.slane %v2119, %v2123
          %2126 = vmatprep.subr.mxu0 0.0
          %2127 = vmatpush1.msra.mxu0 %v2103
          %2128 = vmatprep.subr.mxu0 0.0
          %2129 = vmatpush1.msra.mxu0 %v2104
          %2130 = vmatprep.subr.mxu0 0.0
          %2131 = vmatpush1.msra.mxu0 %v2105
          %2132 = vmatprep.subr.mxu0 0.0
          %2133 = vmatpush1.msra.mxu0 %v2106
          %2134 = vmatprep.subr.mxu0 0.0
          %2135 = vmatpush1.msra.mxu0 %v2107
          %2136 = vmatprep.subr.mxu0 0.0
          %2137 = vmatpush1.msra.mxu0 %v2108
          %2138 = vmatprep.subr.mxu0 0.0
          %2139 = vmatpush1.msra.mxu0 %v2109
          %2140 = vmatprep.subr.mxu0 0.0
          %2141 = vmatpush1.msra.mxu0 %v2110
          %2142 = vmatprep.subr.mxu0 0.0
          %2143 = vmatpush1.msra.mxu0 %v2111
          %2144 = vmatprep.subr.mxu0 0.0
          %2145 = vmatpush1.msra.mxu0 %v2112
          %2146 = vmatprep.subr.mxu0 0.0
          %2147 = vmatpush1.msra.mxu0 %v2113
          %2148 = vmatprep.subr.mxu0 0.0
          %2149 = vmatpush1.msra.mxu0 %v2114
          %2150 = vmatprep.subr.mxu0 0.0
          %2151 = vmatpush1.msra.mxu0 %v2115
          %2152 = vmatprep.subr.mxu0 0.0
          %2153 = vmatpush1.msra.mxu0 %v2116
          %2154 = vmatprep.subr.mxu0 0.0
          %2155 = vmatpush1.msra.mxu0 %v2117
          %2156 = vmatprep.subr.mxu0 0.0
          %2157 = vmatpush1.msra.mxu0 %v2118
          %2158 = vmatprep.subr.mxu0 0.0
          %2159 = vmatpush1.msra.mxu0 0.0
          %2160 = vmatprep.subr.mxu0 0.0
          %2161 = vmatpush1.msra.mxu0 0.0
          %2162 = vmatprep.subr.mxu0 0.0
          %2163 = vmatpush1.msra.mxu0 0.0
          %2164 = vmatprep.subr.mxu0 0.0
          %2165 = vmatpush1.msra.mxu0 0.0
          %2166 = vmatprep.subr.mxu0 0.0
          %2167 = vmatpush1.msra.mxu0 0.0
          %2168 = vmatprep.subr.mxu0 0.0
          %2169 = vmatpush1.msra.mxu0 0.0
          %2170 = vmatprep.subr.mxu0 0.0
          %2171 = vmatpush1.msra.mxu0 0.0
          %2172 = vmatprep.subr.mxu0 0.0
          %2173 = vmatpush1.msra.mxu0 0.0
          %2174 = vmatprep.subr.mxu0 0.0
          %2175 = vmatpush1.msra.mxu0 0.0
          %2176 = vmatprep.subr.mxu0 0.0
          %2177 = vmatpush1.msra.mxu0 0.0
          %2178 = vmatprep.subr.mxu0 0.0
          %2179 = vmatpush1.msra.mxu0 0.0
          %2180 = vmatprep.subr.mxu0 0.0
          %2181 = vmatpush1.msra.mxu0 0.0
          %2182 = vmatprep.subr.mxu0 0.0
          %2183 = vmatpush1.msra.mxu0 0.0
          %2184 = vmatprep.subr.mxu0 0.0
          %2185 = vmatpush1.msra.mxu0 0.0
          %2186 = vmatprep.subr.mxu0 0.0
          %2187 = vmatpush1.msra.mxu0 0.0
          %2188 = vmatprep.subr.mxu0 0.0
          %2189 = vmatpush1.msra.mxu0 0.0
          %2190 = vmatprep.mubr.f32.mxu0 0.0
          %2191 = vmatmul.mubr.f32.gmra.mrb[0].mxu0 %v2102
          %v2192 = vpop.f32.mrb[0].mxu0
          %v2193 = vadd.f32 %v2124, %v2192
          %v2194 = vpop.f32.mrb[0].mxu0
          %2195 = vdwg.mxu0
          %v2196 = vadd.f32 %v492, %v2193
          %v2197 = vld [vmem:[%s8] sm:$0x1]
          %v2198 = vld [vmem:[%s9] sm:$0x1]
          %2199 = vadd.xlane.f32.xlu0 %v2196
          %v2200 = vpop.xlane.xlu0 %2199
          %v2201 = vrcp.pop 128.0
          %v2202 = vmul.f32 %v2200, %v2201
          %v2203 = vsub.f32 %v2196, %v2202
          %v2204 = vmul.f32 %v2203, %v2203
          %2205 = vadd.xlane.f32.xlu0 %v2204
          %v2206 = vpop.xlane.xlu0 %2205
          %v2207 = vmul.f32 %v2206, 0.007874016
          %v2208 = vrsqrt.pop %v2207
          %v2209 = vmul.f32 %v2207, %v2208
          %vm2210 = vcmp.eq.f32.partialorder %v2207, inf
          %v2211 = vsel %vm2210, %v2207, %v2209
          %vm2212 = vcmp.eq.f32.partialorder %v2207, 0.0
          %v2213 = vand.u32 %v2207, 2147483648
          %v2214 = vsel %vm2212, %v2213, %v2211
          %v2216 = vlaneseq
          %v2217 = vshrl.u32 %v2216, 7
          %v2218 = vsub.s32 0, %v2217
          %v2219 = vrot.slane %v2197, %v2218
          %v2221 = vmul.f32 %v2219, %v2203
          %v2222 = vadd.f32 %v2214, 1e-05
          %v2223 = vrcp.pop %v2222
          %v2224 = vmul.f32 %v2222, %v2223
          %v2225 = vsub.f32 2.0, %v2224
          %v2226 = vmul.f32 %v2223, %v2225
          %v2227 = vmul.f32 %v2221, %v2226
          %v2229 = vlaneseq
          %v2230 = vshrl.u32 %v2229, 7
          %v2231 = vsub.s32 0, %v2230
          %v2232 = vrot.slane %v2198, %v2231
          %v2234 = vadd.f32 %v2227, %v2232
          %2235 = vst [vmem:[%s491] sm:$0xff] %v2234
        $region88: #{_lambda_.3} parent=59 // pred_fallthru
          _
        %p2236 = scmp.lt.s32.totalorder %s33, 1
        %s2237 = scalar_select %p2236, %s33, 1
        %p2238 = scmp.lt.s32.totalorder %s34, 1
        %s2239 = scalar_select %p2238, %s34, 1
        %s2240 = smul.addr %s2237, 2
        %s2241 = sadd.s32 %s2239, %s2240
        %s2242 = smul.addr %s2241, 8
        %s2243 = scalar_lea.vmem %s10, %s2242
        // Predicated region
        $region89: #{_lambda_.3} parent=59 // pred_check
          %p2244 = pneg %p291
        $region90: #{_lambda_.3} parent=59 // pred_check_branch
          %2246 = sbr.rel (%p2244) target = $region92
        $region91: #{_lambda_.3} parent=59 // pred_region
          _
        $region92: #{_lambda_.3} parent=59 // pred_fallthru
          _
      $region60: #{_lambda_.3} parent=5 // pred_fallthru
        _
      %p2247 = scmp.le.s32.totalorder 2, %s23
      // Predicated region
      $region93: #{_lambda_.3} parent=5 // pred_check
        %p2248 = pneg %p2247
      $region94: #{_lambda_.3} parent=5 // pred_check_branch
        %2250 = sbr.rel (%p2248) target = $region96
      $region95: #{_lambda_.3} parent=5 // pred_region
        %s2251 = ssub.s32 %s23, 2
        // Predicated region
        $region97: #{_lambda_.3} parent=95 // pred_check
          %p2252 = pneg %p297
        $region98: #{_lambda_.3} parent=95 // pred_check_branch
          %2254 = sbr.rel (%p2252) target = $region100
        $region99: #{_lambda_.3} parent=95 // pred_region
          %p2255 = scmp.lt.s32.totalorder %s36, 1
          %s2256 = scalar_select %p2255, %s36, 1
          %p2257 = scmp.lt.s32.totalorder %s37, 1
          %s2258 = scalar_select %p2257, %s37, 1
          %s2259 = smul.addr %s2256, 2
          %s2260 = sadd.s32 %s2258, %s2259
          %s2261 = smul.addr %s2260, 8
          %s2262 = scalar_lea.vmem %s10, %s2261
        $region100: #{_lambda_.3} parent=95 // pred_fallthru
          _
      $region96: #{_lambda_.3} parent=5 // pred_fallthru
        _
    $region6: #{_lambda_.3} parent=1 // loop_footer
      %s27 = sadd.s32 1, %s23
    $region7: #{_lambda_.3} parent=1 // loop_footer_branch
      %22 = sbr.rel target = $region3
    $region8: #{_lambda_.3} parent=1 // loop_exit
      _
    %2263 = vsyncpa [#allocation7], 1
    %s2264 = scalar_lea.sflag [#allocation7], 1
    %2265 = vsyncpa %s2264, 1
    %2266 = vsyncpa [#allocation9], 1
    %s2267 = scalar_lea.sflag [#allocation9], 1
    %2268 = vsyncpa %s2267, 1
    %2269 = vsyncpa [#allocation12], 1

</llo_original>
